<compile_context>
chip_gen: v7x
topology: tpu7x:2x2x1
jax: 0.10.0
libtpu: 0.0.40
codegen_flags: <defaults>
</compile_context>

<pallas_src>
import jax
import jax.numpy as jnp
from jax import lax
from jax.experimental import pallas as pl
from jax.experimental.pallas import tpu as pltpu


# Set to jnp.bfloat16 for native MXU rate on v6e/v7x (accumulation stays f32).
# Default f32 keeps the forward numerics of the PyTorch reference.
MXU_INPUT_DTYPE = jnp.float32

# Above this node count the sequential node loop switches from a fully
# unrolled Python loop to lax.fori_loop (bounded live ranges / compile time).
UNROLL_NODE_LIMIT = 32


# --------------------------------------------------------------------------
# Shared tree-GRU body (values in, one VMEM scratch ref for h_e_copy)
# --------------------------------------------------------------------------
def _tree_gru(h_e, adj, hc_ref,
              ioux_w, ioux_b, iouh_w, iouh_b,
              coux_w, coux_b, couh_w, couh_b):
    """Batched sequential top-down tree GRU; fills hc_ref with h_e_copy.

    h_e: (Bb, N, F), adj: (Bb, N, N) for a block of Bb trees.  Replicates the
    PyTorch RvNN loop exactly: node i reads the ORIGINAL h_e for x and row i
    of Tree_Parent_AGG(current h_e_copy) for x_parent.  Only row i of the
    aggregation is needed per step, so it is a VPU multiply + sublane reduce
    (no MXU round-trip on the serial chain).
    """
    Bb, N, F = h_e.shape
    mdt = MXU_INPUT_DTYPE

    # Tree_Parent_AGG normalisation, stored column-sliceable:
    #   adjn_T[b, k, i] = adj[b, k, i] / sum_m adj[b, i, m]
    # so column i (a static lane slice) gives node i's aggregation weights
    # without any per-step transpose.
    d = jnp.sum(adj, axis=-1)                                  # (Bb, N)
    # Keep the where-select (do NOT fold into a multiply: inf * 0 -> NaN).
    inv_d = jnp.where(d != 0.0, 1.0 / d, 0.0)
    adjn_T = adj * inv_d[:, None, :]                           # (Bb, N, N)

    # Hoisted x-only products over the whole batch block at once:
    # one (Bb*N, F) @ (F, 2F) and one (Bb*N, F) @ (F, F) MXU matmul.
    h2 = h_e.reshape(Bb * N, F).astype(mdt)
    ix_iou = (jnp.dot(h2, ioux_w.astype(mdt),
                      preferred_element_type=jnp.float32)
              + ioux_b).reshape(Bb, N, 2 * F)                  # (Bb, N, 2F)
    cx = (jnp.dot(h2, coux_w.astype(mdt),
                  preferred_element_type=jnp.float32)
          + coux_b).reshape(Bb, N, F)                          # (Bb, N, F)

    iouh_wc = iouh_w.astype(mdt)
    couh_wc = couh_w.astype(mdt)

    hc_ref[...] = h_e

    def node_update(x_parent, ix_i, cx_i):
        # Fused r/z: ONE (Bb, F) @ (F, 2F) matmul, one sigmoid, then split.
        rz = jax.nn.sigmoid(
            ix_i
            + jnp.dot(x_parent.astype(mdt), iouh_wc,
                      preferred_element_type=jnp.float32) + iouh_b)
        r, z = rz[:, :F], rz[:, F:]
        hcand = jnp.tanh(
            cx_i
            + jnp.dot((x_parent * r).astype(mdt), couh_wc,
                      preferred_element_type=jnp.float32) + couh_b)
        return z * x_parent + (1.0 - z) * hcand                # (Bb, F)

    if N <= UNROLL_NODE_LIMIT:
        # Fully unrolled (N static): static slices, full LLO visibility.
        for i in range(N):
            w_i = adjn_T[:, :, i:i + 1]                        # (Bb, N, 1)
            # VPU broadcast-mul + XLU sublane reduce -> row i of parent agg.
            x_parent = jnp.sum(w_i * hc_ref[...], axis=1)      # (Bb, F)
            h_new = node_update(x_parent, ix_iou[:, i, :], cx[:, i, :])
            hc_ref[:, i:i + 1, :] = h_new[:, None, :]
    else:
        # Large N: bounded live ranges via fori_loop with dynamic SUBLANE
        # slices (dynamic lane slicing avoided on purpose); x_parent falls
        # back to a batched (1,N)x(N,F) contraction.
        adjn = jnp.swapaxes(adj, 1, 2) * inv_d[:, :, None]     # (Bb, N, N) rows

        def body(i, carry):
            w_i = lax.dynamic_slice_in_dim(adjn, i, 1, axis=1)           # (Bb,1,N)
            x_parent = lax.dot_general(
                w_i.astype(mdt), hc_ref[...].astype(mdt),
                (((2,), (1,)), ((0,), (0,))),
                preferred_element_type=jnp.float32)[:, 0, :]             # (Bb, F)
            ix_i = lax.dynamic_slice_in_dim(ix_iou, i, 1, axis=1)[:, 0, :]
            cx_i = lax.dynamic_slice_in_dim(cx, i, 1, axis=1)[:, 0, :]
            h_new = node_update(x_parent, ix_i, cx_i)
            hc_ref[:, pl.ds(i, 1), :] = h_new[:, None, :]
            return carry

        lax.fori_loop(0, N, body, 0, unroll=2)


# --------------------------------------------------------------------------
# Kernels
# --------------------------------------------------------------------------
def rvnn_leafmax_kernel(h_ref, adj_ref, nz_ref,
                        ioux_w_ref, ioux_b_ref, iouh_w_ref, iouh_b_ref,
                        coux_w_ref, coux_b_ref, couh_w_ref, couh_b_ref,
                        o_ref, hc_ref):
    # Per batch block:  h_e: (Bb,N,F), adj: (Bb,N,N), nz: (Bb,N,1) -> (Bb,1,F)
    h_e = h_ref[...]
    adj = adj_ref[...]
    _tree_gru(h_e, adj, hc_ref,
              ioux_w_ref[...], ioux_b_ref[...], iouh_w_ref[...], iouh_b_ref[...],
              coux_w_ref[...], coux_b_ref[...], couh_w_ref[...], couh_b_ref[...])
    # Fused leaf-masked max pooling (mul-then-max, exactly as the reference).
    rowsum = jnp.sum(adj, axis=-1, keepdims=True)              # (Bb, N, 1)
    leaf = jnp.where(rowsum == 0.0, 1.0, 0.0) * (1.0 - nz_ref[...])
    xf = hc_ref[...] * leaf                                    # (Bb, N, F)
    o_ref[...] = jnp.max(xf, axis=1, keepdims=True)            # dense (Bb,1,F) store


def recon_rvnn_kernel(xall_ref, nz_ref, npost_ref, adj_ref,
                      ioux_w_ref, ioux_b_ref, iouh_w_ref, iouh_b_ref,
                      coux_w_ref, coux_b_ref, couh_w_ref, couh_b_ref,
                      reemb_ref, o_ref, hc_ref):
    # Per batch block: xall: (Bb,1,F), nz: (Bb,N,1), Npost: (N,1), adj: (Bb,N,N)
    adj = adj_ref[...]
    Bb, N, _ = adj.shape
    F = xall_ref.shape[-1]
    f_in = o_ref.shape[-1]
    # x_post[b, n, :] = Npost[n] * mask[b, n] * xall[b, :]  (mask = sum(h)==0)
    scale = npost_ref[...][None, :, :] * nz_ref[...]           # (Bb, N, 1)
    x_post = xall_ref[...] * scale                             # (Bb, N, F)
    _tree_gru(x_post, adj, hc_ref,
              ioux_w_ref[...], ioux_b_ref[...], iouh_w_ref[...], iouh_b_ref[...],
              coux_w_ref[...], coux_b_ref[...], couh_w_ref[...], couh_b_ref[...])
    # Fused reemb projection across the whole block: (Bb*N, F) @ (F, f_in).
    mdt = MXU_INPUT_DTYPE
    rec = jnp.dot(hc_ref[...].reshape(Bb * N, F).astype(mdt),
                  reemb_ref[...].astype(mdt),
                  preferred_element_type=jnp.float32)
    # TODO(synk): f_in < 128 still means masked stores here; pad f_in to a
    # lane multiple in production configs for fully dense writeback.
    o_ref[...] = rec.reshape(Bb, N, f_in)


def matmul_kernel(x_ref, w_ref, o_ref, acc_ref):
    @pl.when(pl.program_id(2) == 0)
    def _():
        acc_ref[...] = jnp.zeros_like(acc_ref)
    acc_ref[...] += jnp.dot(x_ref[...].astype(MXU_INPUT_DTYPE),
                            w_ref[...].astype(MXU_INPUT_DTYPE),
                            preferred_element_type=jnp.float32)
    o_ref[...] = acc_ref[...].astype(o_ref.dtype)


# --------------------------------------------------------------------------
# Wrappers
# --------------------------------------------------------------------------
def _pick_bblk(B, cap=8):
    """Batch-block size: batch as many trees as possible into the matmul M
    dimension while keeping >=2 grid blocks when B allows it (v7x megacore)."""
    if B <= 2:
        return B
    target = min(cap, B // 2)
    for c in range(target, 0, -1):
        if B % c == 0:
            return c
    return 1


def _const_spec(shape):
    # Constant-index (grid-invariant) operand: fetched once, reused.
    return pl.BlockSpec(shape, lambda b, _n=len(shape): (0,) * _n)


def _rvnn_weight_args(p):
    # Fused iou layout (F, 2F); no r/z split (the split now happens post-
    # sigmoid inside the kernel as a cheap in-vreg lane select).
    return (p["ioux_w"], p["ioux_b"], p["iouh_w"], p["iouh_b"],
            p["coux_w"], p["coux_b"], p["couh_w"], p["couh_b"])


def rvnn_leafmax_pallas(h_e, adj, node_zero, p):
    """Batched tree-GRU + fused leaf-masked max pooling.  Returns (B, F)."""
    B, N, F = h_e.shape
    Bb = _pick_bblk(B)
    wts = _rvnn_weight_args(p)
    wspecs = [_const_spec(w.shape) for w in wts]
    out = pl.pallas_call(
        rvnn_leafmax_kernel,
        out_shape=jax.ShapeDtypeStruct((B, 1, F), jnp.float32),
        grid=(B // Bb,),
        in_specs=[pl.BlockSpec((Bb, N, F), lambda b: (b, 0, 0)),
                  pl.BlockSpec((Bb, N, N), lambda b: (b, 0, 0)),
                  pl.BlockSpec((Bb, N, 1), lambda b: (b, 0, 0))] + wspecs,
        out_specs=pl.BlockSpec((Bb, 1, F), lambda b: (b, 0, 0)),
        scratch_shapes=[pltpu.VMEM((Bb, N, F), jnp.float32)],    # h_e_copy
        compiler_params=pltpu.CompilerParams(dimension_semantics=("parallel",)),
    )(h_e, adj, node_zero, *wts)
    return out[:, 0, :]


def recon_pallas(xall, node_zero, adj, npost, p, reemb_w):
    """Fused reconstruction: x_post build + recon tree-GRU + reemb. (B,N,f_in)."""
    B, F = xall.shape
    N = adj.shape[1]
    f_in = reemb_w.shape[1]
    Bb = _pick_bblk(B)
    wts = _rvnn_weight_args(p)
    wspecs = [_const_spec(w.shape) for w in wts]
    return pl.pallas_call(
        recon_rvnn_kernel,
        out_shape=jax.ShapeDtypeStruct((B, N, f_in), jnp.float32),
        grid=(B // Bb,),
        in_specs=[pl.BlockSpec((Bb, 1, F), lambda b: (b, 0, 0)),
                  pl.BlockSpec((Bb, N, 1), lambda b: (b, 0, 0)),
                  _const_spec((N, 1)),
                  pl.BlockSpec((Bb, N, N), lambda b: (b, 0, 0))]
                 + wspecs + [_const_spec((F, f_in))],
        out_specs=pl.BlockSpec((Bb, N, f_in), lambda b: (b, 0, 0)),
        scratch_shapes=[pltpu.VMEM((Bb, N, F), jnp.float32)],    # recon h_e_copy
        compiler_params=pltpu.CompilerParams(dimension_semantics=("parallel",)),
    )(xall[:, None, :], node_zero, npost, adj, *wts, reemb_w)


def _pick_tile(dim, candidates):
    for c in candidates:
        if dim % c == 0:
            return c
    return dim


def _embed_tiles(M, K, N, budget_bytes=16 << 20):
    """VMEM-aware tile selection (fits v7x's 32 MiB scoped VMEM)."""
    tm = _pick_tile(M, (512, 256, 128, 64, 32, 16, 8))
    tn = _pick_tile(N, (512, 256, 128))
    tk = _pick_tile(K, (1024, 512, 256, 128))

    def vmem_bytes(tm_, tn_, tk_):
        # double-buffered in/out blocks + f32 accumulator scratch
        return 4 * (2 * (tm_ * tk_ + tk_ * tn_ + tm_ * tn_) + tm_ * tn_)

    while vmem_bytes(tm, tn, tk) > budget_bytes and tm > 8:
        shrunk = False
        for c in (256, 128, 64, 32, 16, 8):
            if c < tm and M % c == 0:
                tm, shrunk = c, True
                break
        if not shrunk:
            break
    return tm, tn, tk


def embed_pallas(x, w):
    """(M, K) @ (K, N), no bias.  M/N/K-tiled with an f32 accumulator."""
    M, K = x.shape
    N = w.shape[1]
    tm, tn, tk = _embed_tiles(M, K, N)
    return pl.pallas_call(
        matmul_kernel,
        out_shape=jax.ShapeDtypeStruct((M, N), jnp.float32),
        grid=(M // tm, N // tn, K // tk),
        in_specs=[pl.BlockSpec((tm, tk), lambda i, j, k: (i, k)),
                  pl.BlockSpec((tk, tn), lambda i, j, k: (k, j))],
        out_specs=pl.BlockSpec((tm, tn), lambda i, j, k: (i, j)),
        scratch_shapes=[pltpu.VMEM((tm, tn), jnp.float32)],
        compiler_params=pltpu.CompilerParams(
            dimension_semantics=("parallel", "parallel", "arbitrary")),
    )(x, w)


# --------------------------------------------------------------------------
# Parameters (deterministic synthetic init)
# --------------------------------------------------------------------------
def _lin_init(key, fin, fout, scale=0.1):
    kw, kb = jax.random.split(key)
    w = jax.random.normal(kw, (fin, fout), jnp.float32) * scale
    b = jax.random.normal(kb, (fout,), jnp.float32) * scale
    return w, b


def _rvnn_init(key, f_out):
    k1, k2, k3, k4 = jax.random.split(key, 4)
    iw, ib = _lin_init(k1, f_out, 2 * f_out)
    hw, hb = _lin_init(k2, f_out, 2 * f_out)
    cw, cb = _lin_init(k3, f_out, f_out)
    uw, ub = _lin_init(k4, f_out, f_out)
    return {"ioux_w": iw, "ioux_b": ib.reshape(1, -1),
            "iouh_w": hw, "iouh_b": hb.reshape(1, -1),
            "coux_w": cw, "coux_b": cb.reshape(1, -1),
            "couh_w": uw, "couh_b": ub.reshape(1, -1)}


def init_params(key, f_in, f_out, num_posts):
    ks = jax.random.split(key, 8)
    emb_w, _ = _lin_init(ks[0], f_in, f_out)                 # emb (no bias)
    rvnn = _rvnn_init(ks[1], f_out)
    recon = _rvnn_init(ks[2], f_out)
    reemb_w, _ = _lin_init(ks[3], f_out, f_in)               # reemb (no bias)
    npost = jax.random.normal(ks[4], (num_posts, 1), jnp.float32) * 0.5
    gate_w, gate_b = _lin_init(ks[5], f_out, f_out)
    cls_all_w, cls_all_b = _lin_init(ks[6], f_out, 2)
    cls_com_w, cls_com_b = _lin_init(ks[7], f_out, 2)
    return {"emb_w": emb_w, "rvnn": rvnn, "recon": recon, "reemb_w": reemb_w,
            "Npost": npost, "gate_w": gate_w, "gate_b": gate_b,
            "cls_all_w": cls_all_w, "cls_all_b": cls_all_b,
            "cls_com_w": cls_com_w, "cls_com_b": cls_com_b}


# --------------------------------------------------------------------------
# Full forward pass
# --------------------------------------------------------------------------
def forward(h, adj, params):
    B, N, f_in = h.shape
    F = params["emb_w"].shape[1]

    # 1.0 where an input row is all-zero (padding posts), else 0.0.  Used for
    # the masked_fill in leaf pooling and as the reconstruction mask.
    node_zero = (jnp.sum(h, axis=-1, keepdims=True) == 0).astype(jnp.float32)

    # embed (Pallas tiled matmul)
    h_e = embed_pallas(h.reshape(B * N, f_in), params["emb_w"]).reshape(B, N, F)

    # batched recursive tree GRU with fused leaf-masked max pooling
    xf_max = rvnn_leafmax_pallas(h_e, adj, node_zero, params["rvnn"])   # (B, F)

    # tiny tail layers: plain XLA (Pallas launch overhead would dominate)
    dgate = jax.nn.sigmoid(xf_max @ params["gate_w"] + params["gate_b"])
    xc = xf_max * dgate
    xs = xf_max * (1.0 - dgate)
    xall = xc + xs
    preds = xall @ params["cls_all_w"] + params["cls_all_b"]
    preds_xc = xc @ params["cls_com_w"] + params["cls_com_b"]
    # .detach() only affects gradients; forward value identical to xall
    preds_xs = (xc + xs) @ params["cls_all_w"] + params["cls_all_b"]

    # fused reconstruction branch (x_post build + recon RvNN + reemb)
    x_rec = recon_pallas(xall, node_zero, adj, params["Npost"],
                         params["recon"], params["reemb_w"])            # (B,N,f_in)

    return preds, preds_xc, preds_xs, xc, xs, x_rec, dgate


# --------------------------------------------------------------------------
if __name__ == "__main__":
    B, N, F_IN, F_OUT = 2, 8, 16, 32

    key = jax.random.PRNGKey(0)
    kh, kadj, kp = jax.random.split(key, 3)

    h = jax.random.normal(kh, (B, N, F_IN), jnp.float32)
    h = h.at[:, N - 2:, :].set(0.0)                 # padding posts (all-zero rows)

    adj = (jax.random.uniform(kadj, (B, N, N)) > 0.6).astype(jnp.float32)
    adj = adj.at[:, N - 3:, :].set(0.0)             # last rows have no children -> leaves

    params = init_params(kp, F_IN, F_OUT, N)

    fwd = jax.jit(lambda hh, aa: forward(hh, aa, params))
    outs = fwd(h, adj)
    jax.block_until_ready(outs)

    preds, preds_xc, preds_xs, xc, xs, x_rec, dgate = outs
    assert preds.shape == (B, 2) and preds_xc.shape == (B, 2)
    assert preds_xs.shape == (B, 2)
    assert xc.shape == (B, F_OUT) and xs.shape == (B, F_OUT)
    assert x_rec.shape == (B, N, F_IN) and dgate.shape == (B, F_OUT)
    print("KERNEL_OK")
</pallas_src>

<mosaic_0001>
module attributes {stable_mosaic.version = 11 : i64} {
  func.func @matmul_kernel(%arg0: i32, %arg1: i32, %arg2: i32, %arg3: memref<16x16xf32, #tpu.memory_space<vmem>>, %arg4: memref<16x32xf32, #tpu.memory_space<vmem>>, %arg5: memref<16x32xf32, #tpu.memory_space<vmem>>, %arg6: memref<16x32xf32, #tpu.memory_space<vmem>>) attributes {dimension_semantics = [#tpu.dimension_semantics<parallel>, #tpu.dimension_semantics<parallel>, #tpu.dimension_semantics<arbitrary>], iteration_bounds = array<i64: 1, 1, 1>, scalar_prefetch = 0 : i64, scratch_operands = 1 : i64, tpu.core_type = #tpu.core_type<tc>, window_params = [{transform_indices = @transform_0, window_bounds = array<i64: 16, 16>}, {transform_indices = @transform_1, window_bounds = array<i64: 16, 32>}, {transform_indices = @transform_2, window_bounds = array<i64: 16, 32>}]} {
    %c0_i32 = arith.constant 0 : i32
    %0 = arith.cmpi eq, %arg2, %c0_i32 : i32
    %1 = arith.extui %0 : i1 to i32
    %c0_i32_0 = arith.constant 0 : i32
    %2 = arith.cmpi ne, %1, %c0_i32_0 : i32
    scf.if %2 {
      %cst_12 = arith.constant 0.000000e+00 : f32
      %11 = vector.broadcast %cst_12 : f32 to vector<16x32xf32>
      %c0_13 = arith.constant 0 : index
      %c0_14 = arith.constant 0 : index
      %12 = vector.load %arg6[%c0_13, %c0_14] : memref<16x32xf32, #tpu.memory_space<vmem>>, vector<16x32xf32>
      tpu.vector_store %arg6[%c0_13, %c0_14], %11 {strides = array<i32>} : memref<16x32xf32, #tpu.memory_space<vmem>>, vector<16x32xf32>,
    } else {
    }
    %c0 = arith.constant 0 : index
    %c0_1 = arith.constant 0 : index
    %3 = vector.load %arg6[%c0, %c0_1] : memref<16x32xf32, #tpu.memory_space<vmem>>, vector<16x32xf32>
    %c0_2 = arith.constant 0 : index
    %c0_3 = arith.constant 0 : index
    %4 = vector.load %arg3[%c0_2, %c0_3] : memref<16x16xf32, #tpu.memory_space<vmem>>, vector<16x16xf32>
    %c0_4 = arith.constant 0 : index
    %c0_5 = arith.constant 0 : index
    %5 = vector.load %arg4[%c0_4, %c0_5] : memref<16x32xf32, #tpu.memory_space<vmem>>, vector<16x32xf32>
    %cst = arith.constant dense<0.000000e+00> : vector<16x32xf32>
    %6 = tpu.matmul %4, %5, %cst {dimension_numbers = #tpu.dot_dimension_numbers<[1], [0], [0], [1], [0, 0, 1, 1], [], []>} : vector<16x16xf32>, vector<16x32xf32>, vector<16x32xf32> -> vector<16x32xf32>
    %7 = arith.addf %3, %6 : vector<16x32xf32>
    %c0_6 = arith.constant 0 : index
    %c0_7 = arith.constant 0 : index
    %8 = vector.load %arg6[%c0_6, %c0_7] : memref<16x32xf32, #tpu.memory_space<vmem>>, vector<16x32xf32>
    tpu.vector_store %arg6[%c0_6, %c0_7], %7 {strides = array<i32>} : memref<16x32xf32, #tpu.memory_space<vmem>>, vector<16x32xf32>,
    %c0_8 = arith.constant 0 : index
    %c0_9 = arith.constant 0 : index
    %9 = vector.load %arg6[%c0_8, %c0_9] : memref<16x32xf32, #tpu.memory_space<vmem>>, vector<16x32xf32>
    %c0_10 = arith.constant 0 : index
    %c0_11 = arith.constant 0 : index
    %10 = vector.load %arg5[%c0_10, %c0_11] : memref<16x32xf32, #tpu.memory_space<vmem>>, vector<16x32xf32>
    tpu.vector_store %arg5[%c0_10, %c0_11], %9 {strides = array<i32>} : memref<16x32xf32, #tpu.memory_space<vmem>>, vector<16x32xf32>,
    return
  }
  func.func @transform_0(%arg0: i32, %arg1: i32, %arg2: i32) -> (i32, i32) {
    %c0_i32 = arith.constant 0 : i32
    return %arg0, %arg2 : i32, i32
  }
  func.func @transform_1(%arg0: i32, %arg1: i32, %arg2: i32) -> (i32, i32) {
    %c0_i32 = arith.constant 0 : i32
    return %arg2, %arg1 : i32, i32
  }
  func.func @transform_2(%arg0: i32, %arg1: i32, %arg2: i32) -> (i32, i32) {
    %c0_i32 = arith.constant 0 : i32
    return %arg0, %arg1 : i32, i32
  }
}

module attributes {stable_mosaic.version = 11 : i64} {
  func.func @rvnn_leafmax_kernel(%arg0: i32, %arg1: memref<2x8x32xf32, #tpu.memory_space<vmem>>, %arg2: memref<2x8x8xf32, #tpu.memory_space<vmem>>, %arg3: memref<2x8x1xf32, #tpu.memory_space<vmem>>, %arg4: memref<32x64xf32, #tpu.memory_space<vmem>>, %arg5: memref<1x64xf32, #tpu.memory_space<vmem>>, %arg6: memref<32x64xf32, #tpu.memory_space<vmem>>, %arg7: memref<1x64xf32, #tpu.memory_space<vmem>>, %arg8: memref<32x32xf32, #tpu.memory_space<vmem>>, %arg9: memref<1x32xf32, #tpu.memory_space<vmem>>, %arg10: memref<32x32xf32, #tpu.memory_space<vmem>>, %arg11: memref<1x32xf32, #tpu.memory_space<vmem>>, %arg12: memref<2x1x32xf32, #tpu.memory_space<vmem>>, %arg13: memref<2x8x32xf32, #tpu.memory_space<vmem>>) attributes {dimension_semantics = [#tpu.dimension_semantics<parallel>], iteration_bounds = array<i64: 1>, scalar_prefetch = 0 : i64, scratch_operands = 1 : i64, tpu.core_type = #tpu.core_type<tc>, window_params = [{transform_indices = @transform_0, window_bounds = array<i64: 2, 8, 32>}, {transform_indices = @transform_1, window_bounds = array<i64: 2, 8, 8>}, {transform_indices = @transform_2, window_bounds = array<i64: 2, 8, 1>}, {pipeline_mode = #tpu.pipeline_mode<synchronous>, transform_indices = @transform_3, window_bounds = array<i64: 32, 64>}, {pipeline_mode = #tpu.pipeline_mode<synchronous>, transform_indices = @transform_4, window_bounds = array<i64: 1, 64>}, {pipeline_mode = #tpu.pipeline_mode<synchronous>, transform_indices = @transform_5, window_bounds = array<i64: 32, 64>}, {pipeline_mode = #tpu.pipeline_mode<synchronous>, transform_indices = @transform_6, window_bounds = array<i64: 1, 64>}, {pipeline_mode = #tpu.pipeline_mode<synchronous>, transform_indices = @transform_7, window_bounds = array<i64: 32, 32>}, {pipeline_mode = #tpu.pipeline_mode<synchronous>, transform_indices = @transform_8, window_bounds = array<i64: 1, 32>}, {pipeline_mode = #tpu.pipeline_mode<synchronous>, transform_indices = @transform_9, window_bounds = array<i64: 32, 32>}, {pipeline_mode = #tpu.pipeline_mode<synchronous>, transform_indices = @transform_10, window_bounds = array<i64: 1, 32>}, {transform_indices = @transform_11, window_bounds = array<i64: 2, 1, 32>}]} {
    %c0 = arith.constant 0 : index
    %c0_0 = arith.constant 0 : index
    %c0_1 = arith.constant 0 : index
    %0 = vector.load %arg1[%c0, %c0_0, %c0_1] : memref<2x8x32xf32, #tpu.memory_space<vmem>>, vector<2x8x32xf32>
    %c0_2 = arith.constant 0 : index
    %c0_3 = arith.constant 0 : index
    %c0_4 = arith.constant 0 : index
    %1 = vector.load %arg2[%c0_2, %c0_3, %c0_4] : memref<2x8x8xf32, #tpu.memory_space<vmem>>, vector<2x8x8xf32>
    %c0_5 = arith.constant 0 : index
    %c0_6 = arith.constant 0 : index
    %2 = vector.load %arg4[%c0_5, %c0_6] : memref<32x64xf32, #tpu.memory_space<vmem>>, vector<32x64xf32>
    %c0_7 = arith.constant 0 : index
    %c0_8 = arith.constant 0 : index
    %3 = vector.load %arg5[%c0_7, %c0_8] : memref<1x64xf32, #tpu.memory_space<vmem>>, vector<1x64xf32>
    %c0_9 = arith.constant 0 : index
    %c0_10 = arith.constant 0 : index
    %4 = vector.load %arg6[%c0_9, %c0_10] : memref<32x64xf32, #tpu.memory_space<vmem>>, vector<32x64xf32>
    %c0_11 = arith.constant 0 : index
    %c0_12 = arith.constant 0 : index
    %5 = vector.load %arg7[%c0_11, %c0_12] : memref<1x64xf32, #tpu.memory_space<vmem>>, vector<1x64xf32>
    %c0_13 = arith.constant 0 : index
    %c0_14 = arith.constant 0 : index
    %6 = vector.load %arg8[%c0_13, %c0_14] : memref<32x32xf32, #tpu.memory_space<vmem>>, vector<32x32xf32>
    %c0_15 = arith.constant 0 : index
    %c0_16 = arith.constant 0 : index
    %7 = vector.load %arg9[%c0_15, %c0_16] : memref<1x32xf32, #tpu.memory_space<vmem>>, vector<1x32xf32>
    %c0_17 = arith.constant 0 : index
    %c0_18 = arith.constant 0 : index
    %8 = vector.load %arg10[%c0_17, %c0_18] : memref<32x32xf32, #tpu.memory_space<vmem>>, vector<32x32xf32>
    %c0_19 = arith.constant 0 : index
    %c0_20 = arith.constant 0 : index
    %9 = vector.load %arg11[%c0_19, %c0_20] : memref<1x32xf32, #tpu.memory_space<vmem>>, vector<1x32xf32>
    %cst = arith.constant dense<0.000000e+00> : vector<2x8xf32>
    %10 = vector.multi_reduction <add>, %1, %cst [2] : vector<2x8x8xf32> to vector<2x8xf32>
    %cst_21 = arith.constant 0.000000e+00 : f32
    %11 = vector.broadcast %cst_21 : f32 to vector<2x8xf32>
    %12 = arith.cmpf one, %10, %11 : vector<2x8xf32>
    %cst_22 = arith.constant 1.000000e+00 : f32
    %13 = vector.broadcast %cst_22 : f32 to vector<2x8xf32>
    %14 = arith.divf %13, %10 : vector<2x8xf32>
    %cst_23 = arith.constant 0.000000e+00 : f32
    %15 = vector.broadcast %cst_23 : f32 to vector<2x8xf32>
    %16 = arith.select %12, %14, %15 : vector<2x8xi1>, vector<2x8xf32>
    %17 = vector.shape_cast %16 : vector<2x8xf32> to vector<2x1x8xf32>
    %18 = vector.broadcast %17 : vector<2x1x8xf32> to vector<2x8x8xf32>
    %19 = arith.mulf %1, %18 : vector<2x8x8xf32>
    %20 = vector.shape_cast %0 : vector<2x8x32xf32> to vector<16x32xf32>
    %cst_24 = arith.constant dense<0.000000e+00> : vector<16x64xf32>
    %21 = tpu.matmul %20, %2, %cst_24 {dimension_numbers = #tpu.dot_dimension_numbers<[1], [0], [0], [1], [0, 0, 1, 1], [], []>} : vector<16x32xf32>, vector<32x64xf32>, vector<16x64xf32> -> vector<16x64xf32>
    %22 = vector.broadcast %3 : vector<1x64xf32> to vector<16x64xf32>
    %23 = arith.addf %21, %22 : vector<16x64xf32>
    %24 = vector.shape_cast %23 : vector<16x64xf32> to vector<2x8x64xf32>
    %cst_25 = arith.constant dense<0.000000e+00> : vector<16x32xf32>
    %25 = tpu.matmul %20, %6, %cst_25 {dimension_numbers = #tpu.dot_dimension_numbers<[1], [0], [0], [1], [0, 0, 1, 1], [], []>} : vector<16x32xf32>, vector<32x32xf32>, vector<16x32xf32> -> vector<16x32xf32>
    %26 = vector.broadcast %7 : vector<1x32xf32> to vector<16x32xf32>
    %27 = arith.addf %25, %26 : vector<16x32xf32>
    %28 = vector.shape_cast %27 : vector<16x32xf32> to vector<2x8x32xf32>
    %c0_26 = arith.constant 0 : index
    %c0_27 = arith.constant 0 : index
    %c0_28 = arith.constant 0 : index
    %29 = vector.load %arg13[%c0_26, %c0_27, %c0_28] : memref<2x8x32xf32, #tpu.memory_space<vmem>>, vector<2x8x32xf32>
    tpu.vector_store %arg13[%c0_26, %c0_27, %c0_28], %0 {strides = array<i32>} : memref<2x8x32xf32, #tpu.memory_space<vmem>>, vector<2x8x32xf32>,
    %30 = vector.extract_strided_slice %19 {offsets = [0, 0, 0], sizes = [2, 8, 1], strides = [1, 1, 1]} : vector<2x8x8xf32> to vector<2x8x1xf32>
    %c0_29 = arith.constant 0 : index
    %c0_30 = arith.constant 0 : index
    %c0_31 = arith.constant 0 : index
    %31 = vector.load %arg13[%c0_29, %c0_30, %c0_31] : memref<2x8x32xf32, #tpu.memory_space<vmem>>, vector<2x8x32xf32>
    %32 = vector.broadcast %30 : vector<2x8x1xf32> to vector<2x8x32xf32>
    %33 = arith.mulf %32, %31 : vector<2x8x32xf32>
    %cst_32 = arith.constant dense<0.000000e+00> : vector<2x32xf32>
    %34 = vector.multi_reduction <add>, %33, %cst_32 [1] : vector<2x8x32xf32> to vector<2x32xf32>
    %35 = vector.extract_strided_slice %24 {offsets = [0, 0, 0], sizes = [2, 1, 64], strides = [1, 1, 1]} : vector<2x8x64xf32> to vector<2x1x64xf32>
    %36 = vector.shape_cast %35 : vector<2x1x64xf32> to vector<2x64xf32>
    %37 = vector.extract_strided_slice %28 {offsets = [0, 0, 0], sizes = [2, 1, 32], strides = [1, 1, 1]} : vector<2x8x32xf32> to vector<2x1x32xf32>
    %38 = vector.shape_cast %37 : vector<2x1x32xf32> to vector<2x32xf32>
    %cst_33 = arith.constant dense<0.000000e+00> : vector<2x64xf32>
    %39 = tpu.matmul %34, %4, %cst_33 {dimension_numbers = #tpu.dot_dimension_numbers<[1], [0], [0], [1], [0, 0, 1, 1], [], []>} : vector<2x32xf32>, vector<32x64xf32>, vector<2x64xf32> -> vector<2x64xf32>
    %40 = arith.addf %36, %39 : vector<2x64xf32>
    %41 = vector.broadcast %5 : vector<1x64xf32> to vector<2x64xf32>
    %42 = arith.addf %40, %41 : vector<2x64xf32>
    %43 = arith.negf %42 : vector<2x64xf32>
    %44 = math.exp %43 : vector<2x64xf32>
    %cst_34 = arith.constant 1.000000e+00 : f32
    %45 = vector.broadcast %cst_34 : f32 to vector<2x64xf32>
    %46 = arith.addf %45, %44 : vector<2x64xf32>
    %47 = arith.divf %45, %46 : vector<2x64xf32>
    %48 = vector.extract_strided_slice %47 {offsets = [0, 0], sizes = [2, 32], strides = [1, 1]} : vector<2x64xf32> to vector<2x32xf32>
    %49 = vector.extract_strided_slice %47 {offsets = [0, 32], sizes = [2, 32], strides = [1, 1]} : vector<2x64xf32> to vector<2x32xf32>
    %50 = arith.mulf %34, %48 : vector<2x32xf32>
    %cst_35 = arith.constant dense<0.000000e+00> : vector<2x32xf32>
    %51 = tpu.matmul %50, %8, %cst_35 {dimension_numbers = #tpu.dot_dimension_numbers<[1], [0], [0], [1], [0, 0, 1, 1], [], []>} : vector<2x32xf32>, vector<32x32xf32>, vector<2x32xf32> -> vector<2x32xf32>
    %52 = arith.addf %38, %51 : vector<2x32xf32>
    %53 = vector.broadcast %9 : vector<1x32xf32> to vector<2x32xf32>
    %54 = arith.addf %52, %53 : vector<2x32xf32>
    %55 = math.tanh %54 : vector<2x32xf32>
    %56 = arith.mulf %49, %34 : vector<2x32xf32>
    %cst_36 = arith.constant 1.000000e+00 : f32
    %57 = vector.broadcast %cst_36 : f32 to vector<2x32xf32>
    %58 = arith.subf %57, %49 : vector<2x32xf32>
    %59 = arith.mulf %58, %55 : vector<2x32xf32>
    %60 = arith.addf %56, %59 : vector<2x32xf32>
    %61 = vector.shape_cast %60 : vector<2x32xf32> to vector<2x1x32xf32>
    %c0_37 = arith.constant 0 : index
    %c0_38 = arith.constant 0 : index
    %c0_39 = arith.constant 0 : index
    %62 = vector.load %arg13[%c0_37, %c0_38, %c0_39] : memref<2x8x32xf32, #tpu.memory_space<vmem>>, vector<2x1x32xf32>
    tpu.vector_store %arg13[%c0_37, %c0_38, %c0_39], %61 {strides = array<i32>} : memref<2x8x32xf32, #tpu.memory_space<vmem>>, vector<2x1x32xf32>,
    %63 = vector.extract_strided_slice %19 {offsets = [0, 0, 1], sizes = [2, 8, 1], strides = [1, 1, 1]} : vector<2x8x8xf32> to vector<2x8x1xf32>
    %c0_40 = arith.constant 0 : index
    %c0_41 = arith.constant 0 : index
    %c0_42 = arith.constant 0 : index
    %64 = vector.load %arg13[%c0_40, %c0_41, %c0_42] : memref<2x8x32xf32, #tpu.memory_space<vmem>>, vector<2x8x32xf32>
    %65 = vector.broadcast %63 : vector<2x8x1xf32> to vector<2x8x32xf32>
    %66 = arith.mulf %65, %64 : vector<2x8x32xf32>
    %cst_43 = arith.constant dense<0.000000e+00> : vector<2x32xf32>
    %67 = vector.multi_reduction <add>, %66, %cst_43 [1] : vector<2x8x32xf32> to vector<2x32xf32>
    %68 = vector.extract_strided_slice %24 {offsets = [0, 1, 0], sizes = [2, 1, 64], strides = [1, 1, 1]} : vector<2x8x64xf32> to vector<2x1x64xf32>
    %69 = vector.shape_cast %68 : vector<2x1x64xf32> to vector<2x64xf32>
    %70 = vector.extract_strided_slice %28 {offsets = [0, 1, 0], sizes = [2, 1, 32], strides = [1, 1, 1]} : vector<2x8x32xf32> to vector<2x1x32xf32>
    %71 = vector.shape_cast %70 : vector<2x1x32xf32> to vector<2x32xf32>
    %cst_44 = arith.constant dense<0.000000e+00> : vector<2x64xf32>
    %72 = tpu.matmul %67, %4, %cst_44 {dimension_numbers = #tpu.dot_dimension_numbers<[1], [0], [0], [1], [0, 0, 1, 1], [], []>} : vector<2x32xf32>, vector<32x64xf32>, vector<2x64xf32> -> vector<2x64xf32>
    %73 = arith.addf %69, %72 : vector<2x64xf32>
    %74 = vector.broadcast %5 : vector<1x64xf32> to vector<2x64xf32>
    %75 = arith.addf %73, %74 : vector<2x64xf32>
    %76 = arith.negf %75 : vector<2x64xf32>
    %77 = math.exp %76 : vector<2x64xf32>
    %cst_45 = arith.constant 1.000000e+00 : f32
    %78 = vector.broadcast %cst_45 : f32 to vector<2x64xf32>
    %79 = arith.addf %78, %77 : vector<2x64xf32>
    %80 = arith.divf %78, %79 : vector<2x64xf32>
    %81 = vector.extract_strided_slice %80 {offsets = [0, 0], sizes = [2, 32], strides = [1, 1]} : vector<2x64xf32> to vector<2x32xf32>
    %82 = vector.extract_strided_slice %80 {offsets = [0, 32], sizes = [2, 32], strides = [1, 1]} : vector<2x64xf32> to vector<2x32xf32>
    %83 = arith.mulf %67, %81 : vector<2x32xf32>
    %cst_46 = arith.constant dense<0.000000e+00> : vector<2x32xf32>
    %84 = tpu.matmul %83, %8, %cst_46 {dimension_numbers = #tpu.dot_dimension_numbers<[1], [0], [0], [1], [0, 0, 1, 1], [], []>} : vector<2x32xf32>, vector<32x32xf32>, vector<2x32xf32> -> vector<2x32xf32>
    %85 = arith.addf %71, %84 : vector<2x32xf32>
    %86 = vector.broadcast %9 : vector<1x32xf32> to vector<2x32xf32>
    %87 = arith.addf %85, %86 : vector<2x32xf32>
    %88 = math.tanh %87 : vector<2x32xf32>
    %89 = arith.mulf %82, %67 : vector<2x32xf32>
    %cst_47 = arith.constant 1.000000e+00 : f32
    %90 = vector.broadcast %cst_47 : f32 to vector<2x32xf32>
    %91 = arith.subf %90, %82 : vector<2x32xf32>
    %92 = arith.mulf %91, %88 : vector<2x32xf32>
    %93 = arith.addf %89, %92 : vector<2x32xf32>
    %94 = vector.shape_cast %93 : vector<2x32xf32> to vector<2x1x32xf32>
    %c0_48 = arith.constant 0 : index
    %c1 = arith.constant 1 : index
    %c0_49 = arith.constant 0 : index
    %95 = vector.load %arg13[%c0_48, %c1, %c0_49] : memref<2x8x32xf32, #tpu.memory_space<vmem>>, vector<2x1x32xf32>
    tpu.vector_store %arg13[%c0_48, %c1, %c0_49], %94 {strides = array<i32>} : memref<2x8x32xf32, #tpu.memory_space<vmem>>, vector<2x1x32xf32>,
    %96 = vector.extract_strided_slice %19 {offsets = [0, 0, 2], sizes = [2, 8, 1], strides = [1, 1, 1]} : vector<2x8x8xf32> to vector<2x8x1xf32>
    %c0_50 = arith.constant 0 : index
    %c0_51 = arith.constant 0 : index
    %c0_52 = arith.constant 0 : index
    %97 = vector.load %arg13[%c0_50, %c0_51, %c0_52] : memref<2x8x32xf32, #tpu.memory_space<vmem>>, vector<2x8x32xf32>
    %98 = vector.broadcast %96 : vector<2x8x1xf32> to vector<2x8x32xf32>
    %99 = arith.mulf %98, %97 : vector<2x8x32xf32>
    %cst_53 = arith.constant dense<0.000000e+00> : vector<2x32xf32>
    %100 = vector.multi_reduction <add>, %99, %cst_53 [1] : vector<2x8x32xf32> to vector<2x32xf32>
    %101 = vector.extract_strided_slice %24 {offsets = [0, 2, 0], sizes = [2, 1, 64], strides = [1, 1, 1]} : vector<2x8x64xf32> to vector<2x1x64xf32>
    %102 = vector.shape_cast %101 : vector<2x1x64xf32> to vector<2x64xf32>
    %103 = vector.extract_strided_slice %28 {offsets = [0, 2, 0], sizes = [2, 1, 32], strides = [1, 1, 1]} : vector<2x8x32xf32> to vector<2x1x32xf32>
    %104 = vector.shape_cast %103 : vector<2x1x32xf32> to vector<2x32xf32>
    %cst_54 = arith.constant dense<0.000000e+00> : vector<2x64xf32>
    %105 = tpu.matmul %100, %4, %cst_54 {dimension_numbers = #tpu.dot_dimension_numbers<[1], [0], [0], [1], [0, 0, 1, 1], [], []>} : vector<2x32xf32>, vector<32x64xf32>, vector<2x64xf32> -> vector<2x64xf32>
    %106 = arith.addf %102, %105 : vector<2x64xf32>
    %107 = vector.broadcast %5 : vector<1x64xf32> to vector<2x64xf32>
    %108 = arith.addf %106, %107 : vector<2x64xf32>
    %109 = arith.negf %108 : vector<2x64xf32>
    %110 = math.exp %109 : vector<2x64xf32>
    %cst_55 = arith.constant 1.000000e+00 : f32
    %111 = vector.broadcast %cst_55 : f32 to vector<2x64xf32>
    %112 = arith.addf %111, %110 : vector<2x64xf32>
    %113 = arith.divf %111, %112 : vector<2x64xf32>
    %114 = vector.extract_strided_slice %113 {offsets = [0, 0], sizes = [2, 32], strides = [1, 1]} : vector<2x64xf32> to vector<2x32xf32>
    %115 = vector.extract_strided_slice %113 {offsets = [0, 32], sizes = [2, 32], strides = [1, 1]} : vector<2x64xf32> to vector<2x32xf32>
    %116 = arith.mulf %100, %114 : vector<2x32xf32>
    %cst_56 = arith.constant dense<0.000000e+00> : vector<2x32xf32>
    %117 = tpu.matmul %116, %8, %cst_56 {dimension_numbers = #tpu.dot_dimension_numbers<[1], [0], [0], [1], [0, 0, 1, 1], [], []>} : vector<2x32xf32>, vector<32x32xf32>, vector<2x32xf32> -> vector<2x32xf32>
    %118 = arith.addf %104, %117 : vector<2x32xf32>
    %119 = vector.broadcast %9 : vector<1x32xf32> to vector<2x32xf32>
    %120 = arith.addf %118, %119 : vector<2x32xf32>
    %121 = math.tanh %120 : vector<2x32xf32>
    %122 = arith.mulf %115, %100 : vector<2x32xf32>
    %cst_57 = arith.constant 1.000000e+00 : f32
    %123 = vector.broadcast %cst_57 : f32 to vector<2x32xf32>
    %124 = arith.subf %123, %115 : vector<2x32xf32>
    %125 = arith.mulf %124, %121 : vector<2x32xf32>
    %126 = arith.addf %122, %125 : vector<2x32xf32>
    %127 = vector.shape_cast %126 : vector<2x32xf32> to vector<2x1x32xf32>
    %c0_58 = arith.constant 0 : index
    %c2 = arith.constant 2 : index
    %c0_59 = arith.constant 0 : index
    %128 = vector.load %arg13[%c0_58, %c2, %c0_59] : memref<2x8x32xf32, #tpu.memory_space<vmem>>, vector<2x1x32xf32>
    tpu.vector_store %arg13[%c0_58, %c2, %c0_59], %127 {strides = array<i32>} : memref<2x8x32xf32, #tpu.memory_space<vmem>>, vector<2x1x32xf32>,
    %129 = vector.extract_strided_slice %19 {offsets = [0, 0, 3], sizes = [2, 8, 1], strides = [1, 1, 1]} : vector<2x8x8xf32> to vector<2x8x1xf32>
    %c0_60 = arith.constant 0 : index
    %c0_61 = arith.constant 0 : index
    %c0_62 = arith.constant 0 : index
    %130 = vector.load %arg13[%c0_60, %c0_61, %c0_62] : memref<2x8x32xf32, #tpu.memory_space<vmem>>, vector<2x8x32xf32>
    %131 = vector.broadcast %129 : vector<2x8x1xf32> to vector<2x8x32xf32>
    %132 = arith.mulf %131, %130 : vector<2x8x32xf32>
    %cst_63 = arith.constant dense<0.000000e+00> : vector<2x32xf32>
    %133 = vector.multi_reduction <add>, %132, %cst_63 [1] : vector<2x8x32xf32> to vector<2x32xf32>
    %134 = vector.extract_strided_slice %24 {offsets = [0, 3, 0], sizes = [2, 1, 64], strides = [1, 1, 1]} : vector<2x8x64xf32> to vector<2x1x64xf32>
    %135 = vector.shape_cast %134 : vector<2x1x64xf32> to vector<2x64xf32>
    %136 = vector.extract_strided_slice %28 {offsets = [0, 3, 0], sizes = [2, 1, 32], strides = [1, 1, 1]} : vector<2x8x32xf32> to vector<2x1x32xf32>
    %137 = vector.shape_cast %136 : vector<2x1x32xf32> to vector<2x32xf32>
    %cst_64 = arith.constant dense<0.000000e+00> : vector<2x64xf32>
    %138 = tpu.matmul %133, %4, %cst_64 {dimension_numbers = #tpu.dot_dimension_numbers<[1], [0], [0], [1], [0, 0, 1, 1], [], []>} : vector<2x32xf32>, vector<32x64xf32>, vector<2x64xf32> -> vector<2x64xf32>
    %139 = arith.addf %135, %138 : vector<2x64xf32>
    %140 = vector.broadcast %5 : vector<1x64xf32> to vector<2x64xf32>
    %141 = arith.addf %139, %140 : vector<2x64xf32>
    %142 = arith.negf %141 : vector<2x64xf32>
    %143 = math.exp %142 : vector<2x64xf32>
    %cst_65 = arith.constant 1.000000e+00 : f32
    %144 = vector.broadcast %cst_65 : f32 to vector<2x64xf32>
    %145 = arith.addf %144, %143 : vector<2x64xf32>
    %146 = arith.divf %144, %145 : vector<2x64xf32>
    %147 = vector.extract_strided_slice %146 {offsets = [0, 0], sizes = [2, 32], strides = [1, 1]} : vector<2x64xf32> to vector<2x32xf32>
    %148 = vector.extract_strided_slice %146 {offsets = [0, 32], sizes = [2, 32], strides = [1, 1]} : vector<2x64xf32> to vector<2x32xf32>
    %149 = arith.mulf %133, %147 : vector<2x32xf32>
    %cst_66 = arith.constant dense<0.000000e+00> : vector<2x32xf32>
    %150 = tpu.matmul %149, %8, %cst_66 {dimension_numbers = #tpu.dot_dimension_numbers<[1], [0], [0], [1], [0, 0, 1, 1], [], []>} : vector<2x32xf32>, vector<32x32xf32>, vector<2x32xf32> -> vector<2x32xf32>
    %151 = arith.addf %137, %150 : vector<2x32xf32>
    %152 = vector.broadcast %9 : vector<1x32xf32> to vector<2x32xf32>
    %153 = arith.addf %151, %152 : vector<2x32xf32>
    %154 = math.tanh %153 : vector<2x32xf32>
    %155 = arith.mulf %148, %133 : vector<2x32xf32>
    %cst_67 = arith.constant 1.000000e+00 : f32
    %156 = vector.broadcast %cst_67 : f32 to vector<2x32xf32>
    %157 = arith.subf %156, %148 : vector<2x32xf32>
    %158 = arith.mulf %157, %154 : vector<2x32xf32>
    %159 = arith.addf %155, %158 : vector<2x32xf32>
    %160 = vector.shape_cast %159 : vector<2x32xf32> to vector<2x1x32xf32>
    %c0_68 = arith.constant 0 : index
    %c3 = arith.constant 3 : index
    %c0_69 = arith.constant 0 : index
    %161 = vector.load %arg13[%c0_68, %c3, %c0_69] : memref<2x8x32xf32, #tpu.memory_space<vmem>>, vector<2x1x32xf32>
    tpu.vector_store %arg13[%c0_68, %c3, %c0_69], %160 {strides = array<i32>} : memref<2x8x32xf32, #tpu.memory_space<vmem>>, vector<2x1x32xf32>,
    %162 = vector.extract_strided_slice %19 {offsets = [0, 0, 4], sizes = [2, 8, 1], strides = [1, 1, 1]} : vector<2x8x8xf32> to vector<2x8x1xf32>
    %c0_70 = arith.constant 0 : index
    %c0_71 = arith.constant 0 : index
    %c0_72 = arith.constant 0 : index
    %163 = vector.load %arg13[%c0_70, %c0_71, %c0_72] : memref<2x8x32xf32, #tpu.memory_space<vmem>>, vector<2x8x32xf32>
    %164 = vector.broadcast %162 : vector<2x8x1xf32> to vector<2x8x32xf32>
    %165 = arith.mulf %164, %163 : vector<2x8x32xf32>
    %cst_73 = arith.constant dense<0.000000e+00> : vector<2x32xf32>
    %166 = vector.multi_reduction <add>, %165, %cst_73 [1] : vector<2x8x32xf32> to vector<2x32xf32>
    %167 = vector.extract_strided_slice %24 {offsets = [0, 4, 0], sizes = [2, 1, 64], strides = [1, 1, 1]} : vector<2x8x64xf32> to vector<2x1x64xf32>
    %168 = vector.shape_cast %167 : vector<2x1x64xf32> to vector<2x64xf32>
    %169 = vector.extract_strided_slice %28 {offsets = [0, 4, 0], sizes = [2, 1, 32], strides = [1, 1, 1]} : vector<2x8x32xf32> to vector<2x1x32xf32>
    %170 = vector.shape_cast %169 : vector<2x1x32xf32> to vector<2x32xf32>
    %cst_74 = arith.constant dense<0.000000e+00> : vector<2x64xf32>
    %171 = tpu.matmul %166, %4, %cst_74 {dimension_numbers = #tpu.dot_dimension_numbers<[1], [0], [0], [1], [0, 0, 1, 1], [], []>} : vector<2x32xf32>, vector<32x64xf32>, vector<2x64xf32> -> vector<2x64xf32>
    %172 = arith.addf %168, %171 : vector<2x64xf32>
    %173 = vector.broadcast %5 : vector<1x64xf32> to vector<2x64xf32>
    %174 = arith.addf %172, %173 : vector<2x64xf32>
    %175 = arith.negf %174 : vector<2x64xf32>
    %176 = math.exp %175 : vector<2x64xf32>
    %cst_75 = arith.constant 1.000000e+00 : f32
    %177 = vector.broadcast %cst_75 : f32 to vector<2x64xf32>
    %178 = arith.addf %177, %176 : vector<2x64xf32>
    %179 = arith.divf %177, %178 : vector<2x64xf32>
    %180 = vector.extract_strided_slice %179 {offsets = [0, 0], sizes = [2, 32], strides = [1, 1]} : vector<2x64xf32> to vector<2x32xf32>
    %181 = vector.extract_strided_slice %179 {offsets = [0, 32], sizes = [2, 32], strides = [1, 1]} : vector<2x64xf32> to vector<2x32xf32>
    %182 = arith.mulf %166, %180 : vector<2x32xf32>
    %cst_76 = arith.constant dense<0.000000e+00> : vector<2x32xf32>
    %183 = tpu.matmul %182, %8, %cst_76 {dimension_numbers = #tpu.dot_dimension_numbers<[1], [0], [0], [1], [0, 0, 1, 1], [], []>} : vector<2x32xf32>, vector<32x32xf32>, vector<2x32xf32> -> vector<2x32xf32>
    %184 = arith.addf %170, %183 : vector<2x32xf32>
    %185 = vector.broadcast %9 : vector<1x32xf32> to vector<2x32xf32>
    %186 = arith.addf %184, %185 : vector<2x32xf32>
    %187 = math.tanh %186 : vector<2x32xf32>
    %188 = arith.mulf %181, %166 : vector<2x32xf32>
    %cst_77 = arith.constant 1.000000e+00 : f32
    %189 = vector.broadcast %cst_77 : f32 to vector<2x32xf32>
    %190 = arith.subf %189, %181 : vector<2x32xf32>
    %191 = arith.mulf %190, %187 : vector<2x32xf32>
    %192 = arith.addf %188, %191 : vector<2x32xf32>
    %193 = vector.shape_cast %192 : vector<2x32xf32> to vector<2x1x32xf32>
    %c0_78 = arith.constant 0 : index
    %c4 = arith.constant 4 : index
    %c0_79 = arith.constant 0 : index
    %194 = vector.load %arg13[%c0_78, %c4, %c0_79] : memref<2x8x32xf32, #tpu.memory_space<vmem>>, vector<2x1x32xf32>
    tpu.vector_store %arg13[%c0_78, %c4, %c0_79], %193 {strides = array<i32>} : memref<2x8x32xf32, #tpu.memory_space<vmem>>, vector<2x1x32xf32>,
    %195 = vector.extract_strided_slice %19 {offsets = [0, 0, 5], sizes = [2, 8, 1], strides = [1, 1, 1]} : vector<2x8x8xf32> to vector<2x8x1xf32>
    %c0_80 = arith.constant 0 : index
    %c0_81 = arith.constant 0 : index
    %c0_82 = arith.constant 0 : index
    %196 = vector.load %arg13[%c0_80, %c0_81, %c0_82] : memref<2x8x32xf32, #tpu.memory_space<vmem>>, vector<2x8x32xf32>
    %197 = vector.broadcast %195 : vector<2x8x1xf32> to vector<2x8x32xf32>
    %198 = arith.mulf %197, %196 : vector<2x8x32xf32>
    %cst_83 = arith.constant dense<0.000000e+00> : vector<2x32xf32>
    %199 = vector.multi_reduction <add>, %198, %cst_83 [1] : vector<2x8x32xf32> to vector<2x32xf32>
    %200 = vector.extract_strided_slice %24 {offsets = [0, 5, 0], sizes = [2, 1, 64], strides = [1, 1, 1]} : vector<2x8x64xf32> to vector<2x1x64xf32>
    %201 = vector.shape_cast %200 : vector<2x1x64xf32> to vector<2x64xf32>
    %202 = vector.extract_strided_slice %28 {offsets = [0, 5, 0], sizes = [2, 1, 32], strides = [1, 1, 1]} : vector<2x8x32xf32> to vector<2x1x32xf32>
    %203 = vector.shape_cast %202 : vector<2x1x32xf32> to vector<2x32xf32>
    %cst_84 = arith.constant dense<0.000000e+00> : vector<2x64xf32>
    %204 = tpu.matmul %199, %4, %cst_84 {dimension_numbers = #tpu.dot_dimension_numbers<[1], [0], [0], [1], [0, 0, 1, 1], [], []>} : vector<2x32xf32>, vector<32x64xf32>, vector<2x64xf32> -> vector<2x64xf32>
    %205 = arith.addf %201, %204 : vector<2x64xf32>
    %206 = vector.broadcast %5 : vector<1x64xf32> to vector<2x64xf32>
    %207 = arith.addf %205, %206 : vector<2x64xf32>
    %208 = arith.negf %207 : vector<2x64xf32>
    %209 = math.exp %208 : vector<2x64xf32>
    %cst_85 = arith.constant 1.000000e+00 : f32
    %210 = vector.broadcast %cst_85 : f32 to vector<2x64xf32>
    %211 = arith.addf %210, %209 : vector<2x64xf32>
    %212 = arith.divf %210, %211 : vector<2x64xf32>
    %213 = vector.extract_strided_slice %212 {offsets = [0, 0], sizes = [2, 32], strides = [1, 1]} : vector<2x64xf32> to vector<2x32xf32>
    %214 = vector.extract_strided_slice %212 {offsets = [0, 32], sizes = [2, 32], strides = [1, 1]} : vector<2x64xf32> to vector<2x32xf32>
    %215 = arith.mulf %199, %213 : vector<2x32xf32>
    %cst_86 = arith.constant dense<0.000000e+00> : vector<2x32xf32>
    %216 = tpu.matmul %215, %8, %cst_86 {dimension_numbers = #tpu.dot_dimension_numbers<[1], [0], [0], [1], [0, 0, 1, 1], [], []>} : vector<2x32xf32>, vector<32x32xf32>, vector<2x32xf32> -> vector<2x32xf32>
    %217 = arith.addf %203, %216 : vector<2x32xf32>
    %218 = vector.broadcast %9 : vector<1x32xf32> to vector<2x32xf32>
    %219 = arith.addf %217, %218 : vector<2x32xf32>
    %220 = math.tanh %219 : vector<2x32xf32>
    %221 = arith.mulf %214, %199 : vector<2x32xf32>
    %cst_87 = arith.constant 1.000000e+00 : f32
    %222 = vector.broadcast %cst_87 : f32 to vector<2x32xf32>
    %223 = arith.subf %222, %214 : vector<2x32xf32>
    %224 = arith.mulf %223, %220 : vector<2x32xf32>
    %225 = arith.addf %221, %224 : vector<2x32xf32>
    %226 = vector.shape_cast %225 : vector<2x32xf32> to vector<2x1x32xf32>
    %c0_88 = arith.constant 0 : index
    %c5 = arith.constant 5 : index
    %c0_89 = arith.constant 0 : index
    %227 = vector.load %arg13[%c0_88, %c5, %c0_89] : memref<2x8x32xf32, #tpu.memory_space<vmem>>, vector<2x1x32xf32>
    tpu.vector_store %arg13[%c0_88, %c5, %c0_89], %226 {strides = array<i32>} : memref<2x8x32xf32, #tpu.memory_space<vmem>>, vector<2x1x32xf32>,
    %228 = vector.extract_strided_slice %19 {offsets = [0, 0, 6], sizes = [2, 8, 1], strides = [1, 1, 1]} : vector<2x8x8xf32> to vector<2x8x1xf32>
    %c0_90 = arith.constant 0 : index
    %c0_91 = arith.constant 0 : index
    %c0_92 = arith.constant 0 : index
    %229 = vector.load %arg13[%c0_90, %c0_91, %c0_92] : memref<2x8x32xf32, #tpu.memory_space<vmem>>, vector<2x8x32xf32>
    %230 = vector.broadcast %228 : vector<2x8x1xf32> to vector<2x8x32xf32>
    %231 = arith.mulf %230, %229 : vector<2x8x32xf32>
    %cst_93 = arith.constant dense<0.000000e+00> : vector<2x32xf32>
    %232 = vector.multi_reduction <add>, %231, %cst_93 [1] : vector<2x8x32xf32> to vector<2x32xf32>
    %233 = vector.extract_strided_slice %24 {offsets = [0, 6, 0], sizes = [2, 1, 64], strides = [1, 1, 1]} : vector<2x8x64xf32> to vector<2x1x64xf32>
    %234 = vector.shape_cast %233 : vector<2x1x64xf32> to vector<2x64xf32>
    %235 = vector.extract_strided_slice %28 {offsets = [0, 6, 0], sizes = [2, 1, 32], strides = [1, 1, 1]} : vector<2x8x32xf32> to vector<2x1x32xf32>
    %236 = vector.shape_cast %235 : vector<2x1x32xf32> to vector<2x32xf32>
    %cst_94 = arith.constant dense<0.000000e+00> : vector<2x64xf32>
    %237 = tpu.matmul %232, %4, %cst_94 {dimension_numbers = #tpu.dot_dimension_numbers<[1], [0], [0], [1], [0, 0, 1, 1], [], []>} : vector<2x32xf32>, vector<32x64xf32>, vector<2x64xf32> -> vector<2x64xf32>
    %238 = arith.addf %234, %237 : vector<2x64xf32>
    %239 = vector.broadcast %5 : vector<1x64xf32> to vector<2x64xf32>
    %240 = arith.addf %238, %239 : vector<2x64xf32>
    %241 = arith.negf %240 : vector<2x64xf32>
    %242 = math.exp %241 : vector<2x64xf32>
    %cst_95 = arith.constant 1.000000e+00 : f32
    %243 = vector.broadcast %cst_95 : f32 to vector<2x64xf32>
    %244 = arith.addf %243, %242 : vector<2x64xf32>
    %245 = arith.divf %243, %244 : vector<2x64xf32>
    %246 = vector.extract_strided_slice %245 {offsets = [0, 0], sizes = [2, 32], strides = [1, 1]} : vector<2x64xf32> to vector<2x32xf32>
    %247 = vector.extract_strided_slice %245 {offsets = [0, 32], sizes = [2, 32], strides = [1, 1]} : vector<2x64xf32> to vector<2x32xf32>
    %248 = arith.mulf %232, %246 : vector<2x32xf32>
    %cst_96 = arith.constant dense<0.000000e+00> : vector<2x32xf32>
    %249 = tpu.matmul %248, %8, %cst_96 {dimension_numbers = #tpu.dot_dimension_numbers<[1], [0], [0], [1], [0, 0, 1, 1], [], []>} : vector<2x32xf32>, vector<32x32xf32>, vector<2x32xf32> -> vector<2x32xf32>
    %250 = arith.addf %236, %249 : vector<2x32xf32>
    %251 = vector.broadcast %9 : vector<1x32xf32> to vector<2x32xf32>
    %252 = arith.addf %250, %251 : vector<2x32xf32>
    %253 = math.tanh %252 : vector<2x32xf32>
    %254 = arith.mulf %247, %232 : vector<2x32xf32>
    %cst_97 = arith.constant 1.000000e+00 : f32
    %255 = vector.broadcast %cst_97 : f32 to vector<2x32xf32>
    %256 = arith.subf %255, %247 : vector<2x32xf32>
    %257 = arith.mulf %256, %253 : vector<2x32xf32>
    %258 = arith.addf %254, %257 : vector<2x32xf32>
    %259 = vector.shape_cast %258 : vector<2x32xf32> to vector<2x1x32xf32>
    %c0_98 = arith.constant 0 : index
    %c6 = arith.constant 6 : index
    %c0_99 = arith.constant 0 : index
    %260 = vector.load %arg13[%c0_98, %c6, %c0_99] : memref<2x8x32xf32, #tpu.memory_space<vmem>>, vector<2x1x32xf32>
    tpu.vector_store %arg13[%c0_98, %c6, %c0_99], %259 {strides = array<i32>} : memref<2x8x32xf32, #tpu.memory_space<vmem>>, vector<2x1x32xf32>,
    %261 = vector.extract_strided_slice %19 {offsets = [0, 0, 7], sizes = [2, 8, 1], strides = [1, 1, 1]} : vector<2x8x8xf32> to vector<2x8x1xf32>
    %c0_100 = arith.constant 0 : index
    %c0_101 = arith.constant 0 : index
    %c0_102 = arith.constant 0 : index
    %262 = vector.load %arg13[%c0_100, %c0_101, %c0_102] : memref<2x8x32xf32, #tpu.memory_space<vmem>>, vector<2x8x32xf32>
    %263 = vector.broadcast %261 : vector<2x8x1xf32> to vector<2x8x32xf32>
    %264 = arith.mulf %263, %262 : vector<2x8x32xf32>
    %cst_103 = arith.constant dense<0.000000e+00> : vector<2x32xf32>
    %265 = vector.multi_reduction <add>, %264, %cst_103 [1] : vector<2x8x32xf32> to vector<2x32xf32>
    %266 = vector.extract_strided_slice %24 {offsets = [0, 7, 0], sizes = [2, 1, 64], strides = [1, 1, 1]} : vector<2x8x64xf32> to vector<2x1x64xf32>
    %267 = vector.shape_cast %266 : vector<2x1x64xf32> to vector<2x64xf32>
    %268 = vector.extract_strided_slice %28 {offsets = [0, 7, 0], sizes = [2, 1, 32], strides = [1, 1, 1]} : vector<2x8x32xf32> to vector<2x1x32xf32>
    %269 = vector.shape_cast %268 : vector<2x1x32xf32> to vector<2x32xf32>
    %cst_104 = arith.constant dense<0.000000e+00> : vector<2x64xf32>
    %270 = tpu.matmul %265, %4, %cst_104 {dimension_numbers = #tpu.dot_dimension_numbers<[1], [0], [0], [1], [0, 0, 1, 1], [], []>} : vector<2x32xf32>, vector<32x64xf32>, vector<2x64xf32> -> vector<2x64xf32>
    %271 = arith.addf %267, %270 : vector<2x64xf32>
    %272 = vector.broadcast %5 : vector<1x64xf32> to vector<2x64xf32>
    %273 = arith.addf %271, %272 : vector<2x64xf32>
    %274 = arith.negf %273 : vector<2x64xf32>
    %275 = math.exp %274 : vector<2x64xf32>
    %cst_105 = arith.constant 1.000000e+00 : f32
    %276 = vector.broadcast %cst_105 : f32 to vector<2x64xf32>
    %277 = arith.addf %276, %275 : vector<2x64xf32>
    %278 = arith.divf %276, %277 : vector<2x64xf32>
    %279 = vector.extract_strided_slice %278 {offsets = [0, 0], sizes = [2, 32], strides = [1, 1]} : vector<2x64xf32> to vector<2x32xf32>
    %280 = vector.extract_strided_slice %278 {offsets = [0, 32], sizes = [2, 32], strides = [1, 1]} : vector<2x64xf32> to vector<2x32xf32>
    %281 = arith.mulf %265, %279 : vector<2x32xf32>
    %cst_106 = arith.constant dense<0.000000e+00> : vector<2x32xf32>
    %282 = tpu.matmul %281, %8, %cst_106 {dimension_numbers = #tpu.dot_dimension_numbers<[1], [0], [0], [1], [0, 0, 1, 1], [], []>} : vector<2x32xf32>, vector<32x32xf32>, vector<2x32xf32> -> vector<2x32xf32>
    %283 = arith.addf %269, %282 : vector<2x32xf32>
    %284 = vector.broadcast %9 : vector<1x32xf32> to vector<2x32xf32>
    %285 = arith.addf %283, %284 : vector<2x32xf32>
    %286 = math.tanh %285 : vector<2x32xf32>
    %287 = arith.mulf %280, %265 : vector<2x32xf32>
    %cst_107 = arith.constant 1.000000e+00 : f32
    %288 = vector.broadcast %cst_107 : f32 to vector<2x32xf32>
    %289 = arith.subf %288, %280 : vector<2x32xf32>
    %290 = arith.mulf %289, %286 : vector<2x32xf32>
    %291 = arith.addf %287, %290 : vector<2x32xf32>
    %292 = vector.shape_cast %291 : vector<2x32xf32> to vector<2x1x32xf32>
    %c0_108 = arith.constant 0 : index
    %c7 = arith.constant 7 : index
    %c0_109 = arith.constant 0 : index
    %293 = vector.load %arg13[%c0_108, %c7, %c0_109] : memref<2x8x32xf32, #tpu.memory_space<vmem>>, vector<2x1x32xf32>
    tpu.vector_store %arg13[%c0_108, %c7, %c0_109], %292 {strides = array<i32>} : memref<2x8x32xf32, #tpu.memory_space<vmem>>, vector<2x1x32xf32>,
    %cst_110 = arith.constant dense<0.000000e+00> : vector<2x8xf32>
    %294 = vector.multi_reduction <add>, %1, %cst_110 [2] : vector<2x8x8xf32> to vector<2x8xf32>
    %295 = vector.shape_cast %294 : vector<2x8xf32> to vector<2x8x1xf32>
    %cst_111 = arith.constant 0.000000e+00 : f32
    %296 = vector.broadcast %cst_111 : f32 to vector<2x8x1xf32>
    %297 = arith.cmpf oeq, %295, %296 : vector<2x8x1xf32>
    %cst_112 = arith.constant 1.000000e+00 : f32
    %cst_113 = arith.constant 0.000000e+00 : f32
    %298 = vector.broadcast %cst_112 : f32 to vector<2x8x1xf32>
    %299 = vector.broadcast %cst_113 : f32 to vector<2x8x1xf32>
    %300 = arith.select %297, %298, %299 : vector<2x8x1xi1>, vector<2x8x1xf32>
    %c0_114 = arith.constant 0 : index
    %c0_115 = arith.constant 0 : index
    %c0_116 = arith.constant 0 : index
    %301 = vector.load %arg3[%c0_114, %c0_115, %c0_116] : memref<2x8x1xf32, #tpu.memory_space<vmem>>, vector<2x8x1xf32>
    %cst_117 = arith.constant 1.000000e+00 : f32
    %302 = vector.broadcast %cst_117 : f32 to vector<2x8x1xf32>
    %303 = arith.subf %302, %301 : vector<2x8x1xf32>
    %304 = arith.mulf %300, %303 : vector<2x8x1xf32>
    %c0_118 = arith.constant 0 : index
    %c0_119 = arith.constant 0 : index
    %c0_120 = arith.constant 0 : index
    %305 = vector.load %arg13[%c0_118, %c0_119, %c0_120] : memref<2x8x32xf32, #tpu.memory_space<vmem>>, vector<2x8x32xf32>
    %306 = vector.broadcast %304 : vector<2x8x1xf32> to vector<2x8x32xf32>
    %307 = arith.mulf %305, %306 : vector<2x8x32xf32>
    %cst_121 = arith.constant dense<0xFF800000> : vector<2x32xf32>
    %308 = vector.multi_reduction <maximumf>, %307, %cst_121 [1] : vector<2x8x32xf32> to vector<2x32xf32>
    %309 = vector.shape_cast %308 : vector<2x32xf32> to vector<2x1x32xf32>
    %c0_122 = arith.constant 0 : index
    %c0_123 = arith.constant 0 : index
    %c0_124 = arith.constant 0 : index
    %310 = vector.load %arg12[%c0_122, %c0_123, %c0_124] : memref<2x1x32xf32, #tpu.memory_space<vmem>>, vector<2x1x32xf32>
    tpu.vector_store %arg12[%c0_122, %c0_123, %c0_124], %309 {strides = array<i32>} : memref<2x1x32xf32, #tpu.memory_space<vmem>>, vector<2x1x32xf32>,
    return
  }
  func.func @transform_0(%arg0: i32) -> (i32, i32, i32) {
    %c0_i32 = arith.constant 0 : i32
    %c0_i32_0 = arith.constant 0 : i32
    %c0_i32_1 = arith.constant 0 : i32
    return %arg0, %c0_i32, %c0_i32_0 : i32, i32, i32
  }
  func.func @transform_1(%arg0: i32) -> (i32, i32, i32) {
    %c0_i32 = arith.constant 0 : i32
    %c0_i32_0 = arith.constant 0 : i32
    %c0_i32_1 = arith.constant 0 : i32
    return %arg0, %c0_i32, %c0_i32_0 : i32, i32, i32
  }
  func.func @transform_2(%arg0: i32) -> (i32, i32, i32) {
    %c0_i32 = arith.constant 0 : i32
    %c0_i32_0 = arith.constant 0 : i32
    %c0_i32_1 = arith.constant 0 : i32
    return %arg0, %c0_i32, %c0_i32_0 : i32, i32, i32
  }
  func.func @transform_3(%arg0: i32) -> (i32, i32) {
    %c0_i32 = arith.constant 0 : i32
    %c0_i32_0 = arith.constant 0 : i32
    %c0_i32_1 = arith.constant 0 : i32
    return %c0_i32, %c0_i32_0 : i32, i32
  }
  func.func @transform_4(%arg0: i32) -> (i32, i32) {
    %c0_i32 = arith.constant 0 : i32
    %c0_i32_0 = arith.constant 0 : i32
    %c0_i32_1 = arith.constant 0 : i32
    return %c0_i32, %c0_i32_0 : i32, i32
  }
  func.func @transform_5(%arg0: i32) -> (i32, i32) {
    %c0_i32 = arith.constant 0 : i32
    %c0_i32_0 = arith.constant 0 : i32
    %c0_i32_1 = arith.constant 0 : i32
    return %c0_i32, %c0_i32_0 : i32, i32
  }
  func.func @transform_6(%arg0: i32) -> (i32, i32) {
    %c0_i32 = arith.constant 0 : i32
    %c0_i32_0 = arith.constant 0 : i32
    %c0_i32_1 = arith.constant 0 : i32
    return %c0_i32, %c0_i32_0 : i32, i32
  }
  func.func @transform_7(%arg0: i32) -> (i32, i32) {
    %c0_i32 = arith.constant 0 : i32
    %c0_i32_0 = arith.constant 0 : i32
    %c0_i32_1 = arith.constant 0 : i32
    return %c0_i32, %c0_i32_0 : i32, i32
  }
  func.func @transform_8(%arg0: i32) -> (i32, i32) {
    %c0_i32 = arith.constant 0 : i32
    %c0_i32_0 = arith.constant 0 : i32
    %c0_i32_1 = arith.constant 0 : i32
    return %c0_i32, %c0_i32_0 : i32, i32
  }
  func.func @transform_9(%arg0: i32) -> (i32, i32) {
    %c0_i32 = arith.constant 0 : i32
    %c0_i32_0 = arith.constant 0 : i32
    %c0_i32_1 = arith.constant 0 : i32
    return %c0_i32, %c0_i32_0 : i32, i32
  }
  func.func @transform_10(%arg0: i32) -> (i32, i32) {
    %c0_i32 = arith.constant 0 : i32
    %c0_i32_0 = arith.constant 0 : i32
    %c0_i32_1 = arith.constant 0 : i32
    return %c0_i32, %c0_i32_0 : i32, i32
  }
  func.func @transform_11(%arg0: i32) -> (i32, i32, i32) {
    %c0_i32 = arith.constant 0 : i32
    %c0_i32_0 = arith.constant 0 : i32
    %c0_i32_1 = arith.constant 0 : i32
    return %arg0, %c0_i32, %c0_i32_0 : i32, i32, i32
  }
}

module attributes {stable_mosaic.version = 11 : i64} {
  func.func @recon_rvnn_kernel(%arg0: i32, %arg1: memref<2x1x32xf32, #tpu.memory_space<vmem>>, %arg2: memref<2x8x1xf32, #tpu.memory_space<vmem>>, %arg3: memref<8x1xf32, #tpu.memory_space<vmem>>, %arg4: memref<2x8x8xf32, #tpu.memory_space<vmem>>, %arg5: memref<32x64xf32, #tpu.memory_space<vmem>>, %arg6: memref<1x64xf32, #tpu.memory_space<vmem>>, %arg7: memref<32x64xf32, #tpu.memory_space<vmem>>, %arg8: memref<1x64xf32, #tpu.memory_space<vmem>>, %arg9: memref<32x32xf32, #tpu.memory_space<vmem>>, %arg10: memref<1x32xf32, #tpu.memory_space<vmem>>, %arg11: memref<32x32xf32, #tpu.memory_space<vmem>>, %arg12: memref<1x32xf32, #tpu.memory_space<vmem>>, %arg13: memref<32x16xf32, #tpu.memory_space<vmem>>, %arg14: memref<2x8x16xf32, #tpu.memory_space<vmem>>, %arg15: memref<2x8x32xf32, #tpu.memory_space<vmem>>) attributes {dimension_semantics = [#tpu.dimension_semantics<parallel>], iteration_bounds = array<i64: 1>, scalar_prefetch = 0 : i64, scratch_operands = 1 : i64, tpu.core_type = #tpu.core_type<tc>, window_params = [{transform_indices = @transform_0, window_bounds = array<i64: 2, 1, 32>}, {transform_indices = @transform_1, window_bounds = array<i64: 2, 8, 1>}, {pipeline_mode = #tpu.pipeline_mode<synchronous>, transform_indices = @transform_2, window_bounds = array<i64: 8, 1>}, {transform_indices = @transform_3, window_bounds = array<i64: 2, 8, 8>}, {pipeline_mode = #tpu.pipeline_mode<synchronous>, transform_indices = @transform_4, window_bounds = array<i64: 32, 64>}, {pipeline_mode = #tpu.pipeline_mode<synchronous>, transform_indices = @transform_5, window_bounds = array<i64: 1, 64>}, {pipeline_mode = #tpu.pipeline_mode<synchronous>, transform_indices = @transform_6, window_bounds = array<i64: 32, 64>}, {pipeline_mode = #tpu.pipeline_mode<synchronous>, transform_indices = @transform_7, window_bounds = array<i64: 1, 64>}, {pipeline_mode = #tpu.pipeline_mode<synchronous>, transform_indices = @transform_8, window_bounds = array<i64: 32, 32>}, {pipeline_mode = #tpu.pipeline_mode<synchronous>, transform_indices = @transform_9, window_bounds = array<i64: 1, 32>}, {pipeline_mode = #tpu.pipeline_mode<synchronous>, transform_indices = @transform_10, window_bounds = array<i64: 32, 32>}, {pipeline_mode = #tpu.pipeline_mode<synchronous>, transform_indices = @transform_11, window_bounds = array<i64: 1, 32>}, {pipeline_mode = #tpu.pipeline_mode<synchronous>, transform_indices = @transform_12, window_bounds = array<i64: 32, 16>}, {transform_indices = @transform_13, window_bounds = array<i64: 2, 8, 16>}]} {
    %c0 = arith.constant 0 : index
    %c0_0 = arith.constant 0 : index
    %c0_1 = arith.constant 0 : index
    %0 = vector.load %arg4[%c0, %c0_0, %c0_1] : memref<2x8x8xf32, #tpu.memory_space<vmem>>, vector<2x8x8xf32>
    %c0_2 = arith.constant 0 : index
    %c0_3 = arith.constant 0 : index
    %1 = vector.load %arg3[%c0_2, %c0_3] : memref<8x1xf32, #tpu.memory_space<vmem>>, vector<8x1xf32>
    %2 = vector.shape_cast %1 : vector<8x1xf32> to vector<1x8x1xf32>
    %c0_4 = arith.constant 0 : index
    %c0_5 = arith.constant 0 : index
    %c0_6 = arith.constant 0 : index
    %3 = vector.load %arg2[%c0_4, %c0_5, %c0_6] : memref<2x8x1xf32, #tpu.memory_space<vmem>>, vector<2x8x1xf32>
    %4 = vector.broadcast %2 : vector<1x8x1xf32> to vector<2x8x1xf32>
    %5 = arith.mulf %4, %3 : vector<2x8x1xf32>
    %c0_7 = arith.constant 0 : index
    %c0_8 = arith.constant 0 : index
    %c0_9 = arith.constant 0 : index
    %6 = vector.load %arg1[%c0_7, %c0_8, %c0_9] : memref<2x1x32xf32, #tpu.memory_space<vmem>>, vector<2x1x32xf32>
    %7 = vector.broadcast %6 : vector<2x1x32xf32> to vector<2x8x32xf32>
    %8 = vector.broadcast %5 : vector<2x8x1xf32> to vector<2x8x32xf32>
    %9 = arith.mulf %7, %8 : vector<2x8x32xf32>
    %c0_10 = arith.constant 0 : index
    %c0_11 = arith.constant 0 : index
    %10 = vector.load %arg5[%c0_10, %c0_11] : memref<32x64xf32, #tpu.memory_space<vmem>>, vector<32x64xf32>
    %c0_12 = arith.constant 0 : index
    %c0_13 = arith.constant 0 : index
    %11 = vector.load %arg6[%c0_12, %c0_13] : memref<1x64xf32, #tpu.memory_space<vmem>>, vector<1x64xf32>
    %c0_14 = arith.constant 0 : index
    %c0_15 = arith.constant 0 : index
    %12 = vector.load %arg7[%c0_14, %c0_15] : memref<32x64xf32, #tpu.memory_space<vmem>>, vector<32x64xf32>
    %c0_16 = arith.constant 0 : index
    %c0_17 = arith.constant 0 : index
    %13 = vector.load %arg8[%c0_16, %c0_17] : memref<1x64xf32, #tpu.memory_space<vmem>>, vector<1x64xf32>
    %c0_18 = arith.constant 0 : index
    %c0_19 = arith.constant 0 : index
    %14 = vector.load %arg9[%c0_18, %c0_19] : memref<32x32xf32, #tpu.memory_space<vmem>>, vector<32x32xf32>
    %c0_20 = arith.constant 0 : index
    %c0_21 = arith.constant 0 : index
    %15 = vector.load %arg10[%c0_20, %c0_21] : memref<1x32xf32, #tpu.memory_space<vmem>>, vector<1x32xf32>
    %c0_22 = arith.constant 0 : index
    %c0_23 = arith.constant 0 : index
    %16 = vector.load %arg11[%c0_22, %c0_23] : memref<32x32xf32, #tpu.memory_space<vmem>>, vector<32x32xf32>
    %c0_24 = arith.constant 0 : index
    %c0_25 = arith.constant 0 : index
    %17 = vector.load %arg12[%c0_24, %c0_25] : memref<1x32xf32, #tpu.memory_space<vmem>>, vector<1x32xf32>
    %cst = arith.constant dense<0.000000e+00> : vector<2x8xf32>
    %18 = vector.multi_reduction <add>, %0, %cst [2] : vector<2x8x8xf32> to vector<2x8xf32>
    %cst_26 = arith.constant 0.000000e+00 : f32
    %19 = vector.broadcast %cst_26 : f32 to vector<2x8xf32>
    %20 = arith.cmpf one, %18, %19 : vector<2x8xf32>
    %cst_27 = arith.constant 1.000000e+00 : f32
    %21 = vector.broadcast %cst_27 : f32 to vector<2x8xf32>
    %22 = arith.divf %21, %18 : vector<2x8xf32>
    %cst_28 = arith.constant 0.000000e+00 : f32
    %23 = vector.broadcast %cst_28 : f32 to vector<2x8xf32>
    %24 = arith.select %20, %22, %23 : vector<2x8xi1>, vector<2x8xf32>
    %25 = vector.shape_cast %24 : vector<2x8xf32> to vector<2x1x8xf32>
    %26 = vector.broadcast %25 : vector<2x1x8xf32> to vector<2x8x8xf32>
    %27 = arith.mulf %0, %26 : vector<2x8x8xf32>
    %28 = vector.shape_cast %9 : vector<2x8x32xf32> to vector<16x32xf32>
    %cst_29 = arith.constant dense<0.000000e+00> : vector<16x64xf32>
    %29 = tpu.matmul %28, %10, %cst_29 {dimension_numbers = #tpu.dot_dimension_numbers<[1], [0], [0], [1], [0, 0, 1, 1], [], []>} : vector<16x32xf32>, vector<32x64xf32>, vector<16x64xf32> -> vector<16x64xf32>
    %30 = vector.broadcast %11 : vector<1x64xf32> to vector<16x64xf32>
    %31 = arith.addf %29, %30 : vector<16x64xf32>
    %32 = vector.shape_cast %31 : vector<16x64xf32> to vector<2x8x64xf32>
    %cst_30 = arith.constant dense<0.000000e+00> : vector<16x32xf32>
    %33 = tpu.matmul %28, %14, %cst_30 {dimension_numbers = #tpu.dot_dimension_numbers<[1], [0], [0], [1], [0, 0, 1, 1], [], []>} : vector<16x32xf32>, vector<32x32xf32>, vector<16x32xf32> -> vector<16x32xf32>
    %34 = vector.broadcast %15 : vector<1x32xf32> to vector<16x32xf32>
    %35 = arith.addf %33, %34 : vector<16x32xf32>
    %36 = vector.shape_cast %35 : vector<16x32xf32> to vector<2x8x32xf32>
    %c0_31 = arith.constant 0 : index
    %c0_32 = arith.constant 0 : index
    %c0_33 = arith.constant 0 : index
    %37 = vector.load %arg15[%c0_31, %c0_32, %c0_33] : memref<2x8x32xf32, #tpu.memory_space<vmem>>, vector<2x8x32xf32>
    tpu.vector_store %arg15[%c0_31, %c0_32, %c0_33], %9 {strides = array<i32>} : memref<2x8x32xf32, #tpu.memory_space<vmem>>, vector<2x8x32xf32>,
    %38 = vector.extract_strided_slice %27 {offsets = [0, 0, 0], sizes = [2, 8, 1], strides = [1, 1, 1]} : vector<2x8x8xf32> to vector<2x8x1xf32>
    %c0_34 = arith.constant 0 : index
    %c0_35 = arith.constant 0 : index
    %c0_36 = arith.constant 0 : index
    %39 = vector.load %arg15[%c0_34, %c0_35, %c0_36] : memref<2x8x32xf32, #tpu.memory_space<vmem>>, vector<2x8x32xf32>
    %40 = vector.broadcast %38 : vector<2x8x1xf32> to vector<2x8x32xf32>
    %41 = arith.mulf %40, %39 : vector<2x8x32xf32>
    %cst_37 = arith.constant dense<0.000000e+00> : vector<2x32xf32>
    %42 = vector.multi_reduction <add>, %41, %cst_37 [1] : vector<2x8x32xf32> to vector<2x32xf32>
    %43 = vector.extract_strided_slice %32 {offsets = [0, 0, 0], sizes = [2, 1, 64], strides = [1, 1, 1]} : vector<2x8x64xf32> to vector<2x1x64xf32>
    %44 = vector.shape_cast %43 : vector<2x1x64xf32> to vector<2x64xf32>
    %45 = vector.extract_strided_slice %36 {offsets = [0, 0, 0], sizes = [2, 1, 32], strides = [1, 1, 1]} : vector<2x8x32xf32> to vector<2x1x32xf32>
    %46 = vector.shape_cast %45 : vector<2x1x32xf32> to vector<2x32xf32>
    %cst_38 = arith.constant dense<0.000000e+00> : vector<2x64xf32>
    %47 = tpu.matmul %42, %12, %cst_38 {dimension_numbers = #tpu.dot_dimension_numbers<[1], [0], [0], [1], [0, 0, 1, 1], [], []>} : vector<2x32xf32>, vector<32x64xf32>, vector<2x64xf32> -> vector<2x64xf32>
    %48 = arith.addf %44, %47 : vector<2x64xf32>
    %49 = vector.broadcast %13 : vector<1x64xf32> to vector<2x64xf32>
    %50 = arith.addf %48, %49 : vector<2x64xf32>
    %51 = arith.negf %50 : vector<2x64xf32>
    %52 = math.exp %51 : vector<2x64xf32>
    %cst_39 = arith.constant 1.000000e+00 : f32
    %53 = vector.broadcast %cst_39 : f32 to vector<2x64xf32>
    %54 = arith.addf %53, %52 : vector<2x64xf32>
    %55 = arith.divf %53, %54 : vector<2x64xf32>
    %56 = vector.extract_strided_slice %55 {offsets = [0, 0], sizes = [2, 32], strides = [1, 1]} : vector<2x64xf32> to vector<2x32xf32>
    %57 = vector.extract_strided_slice %55 {offsets = [0, 32], sizes = [2, 32], strides = [1, 1]} : vector<2x64xf32> to vector<2x32xf32>
    %58 = arith.mulf %42, %56 : vector<2x32xf32>
    %cst_40 = arith.constant dense<0.000000e+00> : vector<2x32xf32>
    %59 = tpu.matmul %58, %16, %cst_40 {dimension_numbers = #tpu.dot_dimension_numbers<[1], [0], [0], [1], [0, 0, 1, 1], [], []>} : vector<2x32xf32>, vector<32x32xf32>, vector<2x32xf32> -> vector<2x32xf32>
    %60 = arith.addf %46, %59 : vector<2x32xf32>
    %61 = vector.broadcast %17 : vector<1x32xf32> to vector<2x32xf32>
    %62 = arith.addf %60, %61 : vector<2x32xf32>
    %63 = math.tanh %62 : vector<2x32xf32>
    %64 = arith.mulf %57, %42 : vector<2x32xf32>
    %cst_41 = arith.constant 1.000000e+00 : f32
    %65 = vector.broadcast %cst_41 : f32 to vector<2x32xf32>
    %66 = arith.subf %65, %57 : vector<2x32xf32>
    %67 = arith.mulf %66, %63 : vector<2x32xf32>
    %68 = arith.addf %64, %67 : vector<2x32xf32>
    %69 = vector.shape_cast %68 : vector<2x32xf32> to vector<2x1x32xf32>
    %c0_42 = arith.constant 0 : index
    %c0_43 = arith.constant 0 : index
    %c0_44 = arith.constant 0 : index
    %70 = vector.load %arg15[%c0_42, %c0_43, %c0_44] : memref<2x8x32xf32, #tpu.memory_space<vmem>>, vector<2x1x32xf32>
    tpu.vector_store %arg15[%c0_42, %c0_43, %c0_44], %69 {strides = array<i32>} : memref<2x8x32xf32, #tpu.memory_space<vmem>>, vector<2x1x32xf32>,
    %71 = vector.extract_strided_slice %27 {offsets = [0, 0, 1], sizes = [2, 8, 1], strides = [1, 1, 1]} : vector<2x8x8xf32> to vector<2x8x1xf32>
    %c0_45 = arith.constant 0 : index
    %c0_46 = arith.constant 0 : index
    %c0_47 = arith.constant 0 : index
    %72 = vector.load %arg15[%c0_45, %c0_46, %c0_47] : memref<2x8x32xf32, #tpu.memory_space<vmem>>, vector<2x8x32xf32>
    %73 = vector.broadcast %71 : vector<2x8x1xf32> to vector<2x8x32xf32>
    %74 = arith.mulf %73, %72 : vector<2x8x32xf32>
    %cst_48 = arith.constant dense<0.000000e+00> : vector<2x32xf32>
    %75 = vector.multi_reduction <add>, %74, %cst_48 [1] : vector<2x8x32xf32> to vector<2x32xf32>
    %76 = vector.extract_strided_slice %32 {offsets = [0, 1, 0], sizes = [2, 1, 64], strides = [1, 1, 1]} : vector<2x8x64xf32> to vector<2x1x64xf32>
    %77 = vector.shape_cast %76 : vector<2x1x64xf32> to vector<2x64xf32>
    %78 = vector.extract_strided_slice %36 {offsets = [0, 1, 0], sizes = [2, 1, 32], strides = [1, 1, 1]} : vector<2x8x32xf32> to vector<2x1x32xf32>
    %79 = vector.shape_cast %78 : vector<2x1x32xf32> to vector<2x32xf32>
    %cst_49 = arith.constant dense<0.000000e+00> : vector<2x64xf32>
    %80 = tpu.matmul %75, %12, %cst_49 {dimension_numbers = #tpu.dot_dimension_numbers<[1], [0], [0], [1], [0, 0, 1, 1], [], []>} : vector<2x32xf32>, vector<32x64xf32>, vector<2x64xf32> -> vector<2x64xf32>
    %81 = arith.addf %77, %80 : vector<2x64xf32>
    %82 = vector.broadcast %13 : vector<1x64xf32> to vector<2x64xf32>
    %83 = arith.addf %81, %82 : vector<2x64xf32>
    %84 = arith.negf %83 : vector<2x64xf32>
    %85 = math.exp %84 : vector<2x64xf32>
    %cst_50 = arith.constant 1.000000e+00 : f32
    %86 = vector.broadcast %cst_50 : f32 to vector<2x64xf32>
    %87 = arith.addf %86, %85 : vector<2x64xf32>
    %88 = arith.divf %86, %87 : vector<2x64xf32>
    %89 = vector.extract_strided_slice %88 {offsets = [0, 0], sizes = [2, 32], strides = [1, 1]} : vector<2x64xf32> to vector<2x32xf32>
    %90 = vector.extract_strided_slice %88 {offsets = [0, 32], sizes = [2, 32], strides = [1, 1]} : vector<2x64xf32> to vector<2x32xf32>
    %91 = arith.mulf %75, %89 : vector<2x32xf32>
    %cst_51 = arith.constant dense<0.000000e+00> : vector<2x32xf32>
    %92 = tpu.matmul %91, %16, %cst_51 {dimension_numbers = #tpu.dot_dimension_numbers<[1], [0], [0], [1], [0, 0, 1, 1], [], []>} : vector<2x32xf32>, vector<32x32xf32>, vector<2x32xf32> -> vector<2x32xf32>
    %93 = arith.addf %79, %92 : vector<2x32xf32>
    %94 = vector.broadcast %17 : vector<1x32xf32> to vector<2x32xf32>
    %95 = arith.addf %93, %94 : vector<2x32xf32>
    %96 = math.tanh %95 : vector<2x32xf32>
    %97 = arith.mulf %90, %75 : vector<2x32xf32>
    %cst_52 = arith.constant 1.000000e+00 : f32
    %98 = vector.broadcast %cst_52 : f32 to vector<2x32xf32>
    %99 = arith.subf %98, %90 : vector<2x32xf32>
    %100 = arith.mulf %99, %96 : vector<2x32xf32>
    %101 = arith.addf %97, %100 : vector<2x32xf32>
    %102 = vector.shape_cast %101 : vector<2x32xf32> to vector<2x1x32xf32>
    %c0_53 = arith.constant 0 : index
    %c1 = arith.constant 1 : index
    %c0_54 = arith.constant 0 : index
    %103 = vector.load %arg15[%c0_53, %c1, %c0_54] : memref<2x8x32xf32, #tpu.memory_space<vmem>>, vector<2x1x32xf32>
    tpu.vector_store %arg15[%c0_53, %c1, %c0_54], %102 {strides = array<i32>} : memref<2x8x32xf32, #tpu.memory_space<vmem>>, vector<2x1x32xf32>,
    %104 = vector.extract_strided_slice %27 {offsets = [0, 0, 2], sizes = [2, 8, 1], strides = [1, 1, 1]} : vector<2x8x8xf32> to vector<2x8x1xf32>
    %c0_55 = arith.constant 0 : index
    %c0_56 = arith.constant 0 : index
    %c0_57 = arith.constant 0 : index
    %105 = vector.load %arg15[%c0_55, %c0_56, %c0_57] : memref<2x8x32xf32, #tpu.memory_space<vmem>>, vector<2x8x32xf32>
    %106 = vector.broadcast %104 : vector<2x8x1xf32> to vector<2x8x32xf32>
    %107 = arith.mulf %106, %105 : vector<2x8x32xf32>
    %cst_58 = arith.constant dense<0.000000e+00> : vector<2x32xf32>
    %108 = vector.multi_reduction <add>, %107, %cst_58 [1] : vector<2x8x32xf32> to vector<2x32xf32>
    %109 = vector.extract_strided_slice %32 {offsets = [0, 2, 0], sizes = [2, 1, 64], strides = [1, 1, 1]} : vector<2x8x64xf32> to vector<2x1x64xf32>
    %110 = vector.shape_cast %109 : vector<2x1x64xf32> to vector<2x64xf32>
    %111 = vector.extract_strided_slice %36 {offsets = [0, 2, 0], sizes = [2, 1, 32], strides = [1, 1, 1]} : vector<2x8x32xf32> to vector<2x1x32xf32>
    %112 = vector.shape_cast %111 : vector<2x1x32xf32> to vector<2x32xf32>
    %cst_59 = arith.constant dense<0.000000e+00> : vector<2x64xf32>
    %113 = tpu.matmul %108, %12, %cst_59 {dimension_numbers = #tpu.dot_dimension_numbers<[1], [0], [0], [1], [0, 0, 1, 1], [], []>} : vector<2x32xf32>, vector<32x64xf32>, vector<2x64xf32> -> vector<2x64xf32>
    %114 = arith.addf %110, %113 : vector<2x64xf32>
    %115 = vector.broadcast %13 : vector<1x64xf32> to vector<2x64xf32>
    %116 = arith.addf %114, %115 : vector<2x64xf32>
    %117 = arith.negf %116 : vector<2x64xf32>
    %118 = math.exp %117 : vector<2x64xf32>
    %cst_60 = arith.constant 1.000000e+00 : f32
    %119 = vector.broadcast %cst_60 : f32 to vector<2x64xf32>
    %120 = arith.addf %119, %118 : vector<2x64xf32>
    %121 = arith.divf %119, %120 : vector<2x64xf32>
    %122 = vector.extract_strided_slice %121 {offsets = [0, 0], sizes = [2, 32], strides = [1, 1]} : vector<2x64xf32> to vector<2x32xf32>
    %123 = vector.extract_strided_slice %121 {offsets = [0, 32], sizes = [2, 32], strides = [1, 1]} : vector<2x64xf32> to vector<2x32xf32>
    %124 = arith.mulf %108, %122 : vector<2x32xf32>
    %cst_61 = arith.constant dense<0.000000e+00> : vector<2x32xf32>
    %125 = tpu.matmul %124, %16, %cst_61 {dimension_numbers = #tpu.dot_dimension_numbers<[1], [0], [0], [1], [0, 0, 1, 1], [], []>} : vector<2x32xf32>, vector<32x32xf32>, vector<2x32xf32> -> vector<2x32xf32>
    %126 = arith.addf %112, %125 : vector<2x32xf32>
    %127 = vector.broadcast %17 : vector<1x32xf32> to vector<2x32xf32>
    %128 = arith.addf %126, %127 : vector<2x32xf32>
    %129 = math.tanh %128 : vector<2x32xf32>
    %130 = arith.mulf %123, %108 : vector<2x32xf32>
    %cst_62 = arith.constant 1.000000e+00 : f32
    %131 = vector.broadcast %cst_62 : f32 to vector<2x32xf32>
    %132 = arith.subf %131, %123 : vector<2x32xf32>
    %133 = arith.mulf %132, %129 : vector<2x32xf32>
    %134 = arith.addf %130, %133 : vector<2x32xf32>
    %135 = vector.shape_cast %134 : vector<2x32xf32> to vector<2x1x32xf32>
    %c0_63 = arith.constant 0 : index
    %c2 = arith.constant 2 : index
    %c0_64 = arith.constant 0 : index
    %136 = vector.load %arg15[%c0_63, %c2, %c0_64] : memref<2x8x32xf32, #tpu.memory_space<vmem>>, vector<2x1x32xf32>
    tpu.vector_store %arg15[%c0_63, %c2, %c0_64], %135 {strides = array<i32>} : memref<2x8x32xf32, #tpu.memory_space<vmem>>, vector<2x1x32xf32>,
    %137 = vector.extract_strided_slice %27 {offsets = [0, 0, 3], sizes = [2, 8, 1], strides = [1, 1, 1]} : vector<2x8x8xf32> to vector<2x8x1xf32>
    %c0_65 = arith.constant 0 : index
    %c0_66 = arith.constant 0 : index
    %c0_67 = arith.constant 0 : index
    %138 = vector.load %arg15[%c0_65, %c0_66, %c0_67] : memref<2x8x32xf32, #tpu.memory_space<vmem>>, vector<2x8x32xf32>
    %139 = vector.broadcast %137 : vector<2x8x1xf32> to vector<2x8x32xf32>
    %140 = arith.mulf %139, %138 : vector<2x8x32xf32>
    %cst_68 = arith.constant dense<0.000000e+00> : vector<2x32xf32>
    %141 = vector.multi_reduction <add>, %140, %cst_68 [1] : vector<2x8x32xf32> to vector<2x32xf32>
    %142 = vector.extract_strided_slice %32 {offsets = [0, 3, 0], sizes = [2, 1, 64], strides = [1, 1, 1]} : vector<2x8x64xf32> to vector<2x1x64xf32>
    %143 = vector.shape_cast %142 : vector<2x1x64xf32> to vector<2x64xf32>
    %144 = vector.extract_strided_slice %36 {offsets = [0, 3, 0], sizes = [2, 1, 32], strides = [1, 1, 1]} : vector<2x8x32xf32> to vector<2x1x32xf32>
    %145 = vector.shape_cast %144 : vector<2x1x32xf32> to vector<2x32xf32>
    %cst_69 = arith.constant dense<0.000000e+00> : vector<2x64xf32>
    %146 = tpu.matmul %141, %12, %cst_69 {dimension_numbers = #tpu.dot_dimension_numbers<[1], [0], [0], [1], [0, 0, 1, 1], [], []>} : vector<2x32xf32>, vector<32x64xf32>, vector<2x64xf32> -> vector<2x64xf32>
    %147 = arith.addf %143, %146 : vector<2x64xf32>
    %148 = vector.broadcast %13 : vector<1x64xf32> to vector<2x64xf32>
    %149 = arith.addf %147, %148 : vector<2x64xf32>
    %150 = arith.negf %149 : vector<2x64xf32>
    %151 = math.exp %150 : vector<2x64xf32>
    %cst_70 = arith.constant 1.000000e+00 : f32
    %152 = vector.broadcast %cst_70 : f32 to vector<2x64xf32>
    %153 = arith.addf %152, %151 : vector<2x64xf32>
    %154 = arith.divf %152, %153 : vector<2x64xf32>
    %155 = vector.extract_strided_slice %154 {offsets = [0, 0], sizes = [2, 32], strides = [1, 1]} : vector<2x64xf32> to vector<2x32xf32>
    %156 = vector.extract_strided_slice %154 {offsets = [0, 32], sizes = [2, 32], strides = [1, 1]} : vector<2x64xf32> to vector<2x32xf32>
    %157 = arith.mulf %141, %155 : vector<2x32xf32>
    %cst_71 = arith.constant dense<0.000000e+00> : vector<2x32xf32>
    %158 = tpu.matmul %157, %16, %cst_71 {dimension_numbers = #tpu.dot_dimension_numbers<[1], [0], [0], [1], [0, 0, 1, 1], [], []>} : vector<2x32xf32>, vector<32x32xf32>, vector<2x32xf32> -> vector<2x32xf32>
    %159 = arith.addf %145, %158 : vector<2x32xf32>
    %160 = vector.broadcast %17 : vector<1x32xf32> to vector<2x32xf32>
    %161 = arith.addf %159, %160 : vector<2x32xf32>
    %162 = math.tanh %161 : vector<2x32xf32>
    %163 = arith.mulf %156, %141 : vector<2x32xf32>
    %cst_72 = arith.constant 1.000000e+00 : f32
    %164 = vector.broadcast %cst_72 : f32 to vector<2x32xf32>
    %165 = arith.subf %164, %156 : vector<2x32xf32>
    %166 = arith.mulf %165, %162 : vector<2x32xf32>
    %167 = arith.addf %163, %166 : vector<2x32xf32>
    %168 = vector.shape_cast %167 : vector<2x32xf32> to vector<2x1x32xf32>
    %c0_73 = arith.constant 0 : index
    %c3 = arith.constant 3 : index
    %c0_74 = arith.constant 0 : index
    %169 = vector.load %arg15[%c0_73, %c3, %c0_74] : memref<2x8x32xf32, #tpu.memory_space<vmem>>, vector<2x1x32xf32>
    tpu.vector_store %arg15[%c0_73, %c3, %c0_74], %168 {strides = array<i32>} : memref<2x8x32xf32, #tpu.memory_space<vmem>>, vector<2x1x32xf32>,
    %170 = vector.extract_strided_slice %27 {offsets = [0, 0, 4], sizes = [2, 8, 1], strides = [1, 1, 1]} : vector<2x8x8xf32> to vector<2x8x1xf32>
    %c0_75 = arith.constant 0 : index
    %c0_76 = arith.constant 0 : index
    %c0_77 = arith.constant 0 : index
    %171 = vector.load %arg15[%c0_75, %c0_76, %c0_77] : memref<2x8x32xf32, #tpu.memory_space<vmem>>, vector<2x8x32xf32>
    %172 = vector.broadcast %170 : vector<2x8x1xf32> to vector<2x8x32xf32>
    %173 = arith.mulf %172, %171 : vector<2x8x32xf32>
    %cst_78 = arith.constant dense<0.000000e+00> : vector<2x32xf32>
    %174 = vector.multi_reduction <add>, %173, %cst_78 [1] : vector<2x8x32xf32> to vector<2x32xf32>
    %175 = vector.extract_strided_slice %32 {offsets = [0, 4, 0], sizes = [2, 1, 64], strides = [1, 1, 1]} : vector<2x8x64xf32> to vector<2x1x64xf32>
    %176 = vector.shape_cast %175 : vector<2x1x64xf32> to vector<2x64xf32>
    %177 = vector.extract_strided_slice %36 {offsets = [0, 4, 0], sizes = [2, 1, 32], strides = [1, 1, 1]} : vector<2x8x32xf32> to vector<2x1x32xf32>
    %178 = vector.shape_cast %177 : vector<2x1x32xf32> to vector<2x32xf32>
    %cst_79 = arith.constant dense<0.000000e+00> : vector<2x64xf32>
    %179 = tpu.matmul %174, %12, %cst_79 {dimension_numbers = #tpu.dot_dimension_numbers<[1], [0], [0], [1], [0, 0, 1, 1], [], []>} : vector<2x32xf32>, vector<32x64xf32>, vector<2x64xf32> -> vector<2x64xf32>
    %180 = arith.addf %176, %179 : vector<2x64xf32>
    %181 = vector.broadcast %13 : vector<1x64xf32> to vector<2x64xf32>
    %182 = arith.addf %180, %181 : vector<2x64xf32>
    %183 = arith.negf %182 : vector<2x64xf32>
    %184 = math.exp %183 : vector<2x64xf32>
    %cst_80 = arith.constant 1.000000e+00 : f32
    %185 = vector.broadcast %cst_80 : f32 to vector<2x64xf32>
    %186 = arith.addf %185, %184 : vector<2x64xf32>
    %187 = arith.divf %185, %186 : vector<2x64xf32>
    %188 = vector.extract_strided_slice %187 {offsets = [0, 0], sizes = [2, 32], strides = [1, 1]} : vector<2x64xf32> to vector<2x32xf32>
    %189 = vector.extract_strided_slice %187 {offsets = [0, 32], sizes = [2, 32], strides = [1, 1]} : vector<2x64xf32> to vector<2x32xf32>
    %190 = arith.mulf %174, %188 : vector<2x32xf32>
    %cst_81 = arith.constant dense<0.000000e+00> : vector<2x32xf32>
    %191 = tpu.matmul %190, %16, %cst_81 {dimension_numbers = #tpu.dot_dimension_numbers<[1], [0], [0], [1], [0, 0, 1, 1], [], []>} : vector<2x32xf32>, vector<32x32xf32>, vector<2x32xf32> -> vector<2x32xf32>
    %192 = arith.addf %178, %191 : vector<2x32xf32>
    %193 = vector.broadcast %17 : vector<1x32xf32> to vector<2x32xf32>
    %194 = arith.addf %192, %193 : vector<2x32xf32>
    %195 = math.tanh %194 : vector<2x32xf32>
    %196 = arith.mulf %189, %174 : vector<2x32xf32>
    %cst_82 = arith.constant 1.000000e+00 : f32
    %197 = vector.broadcast %cst_82 : f32 to vector<2x32xf32>
    %198 = arith.subf %197, %189 : vector<2x32xf32>
    %199 = arith.mulf %198, %195 : vector<2x32xf32>
    %200 = arith.addf %196, %199 : vector<2x32xf32>
    %201 = vector.shape_cast %200 : vector<2x32xf32> to vector<2x1x32xf32>
    %c0_83 = arith.constant 0 : index
    %c4 = arith.constant 4 : index
    %c0_84 = arith.constant 0 : index
    %202 = vector.load %arg15[%c0_83, %c4, %c0_84] : memref<2x8x32xf32, #tpu.memory_space<vmem>>, vector<2x1x32xf32>
    tpu.vector_store %arg15[%c0_83, %c4, %c0_84], %201 {strides = array<i32>} : memref<2x8x32xf32, #tpu.memory_space<vmem>>, vector<2x1x32xf32>,
    %203 = vector.extract_strided_slice %27 {offsets = [0, 0, 5], sizes = [2, 8, 1], strides = [1, 1, 1]} : vector<2x8x8xf32> to vector<2x8x1xf32>
    %c0_85 = arith.constant 0 : index
    %c0_86 = arith.constant 0 : index
    %c0_87 = arith.constant 0 : index
    %204 = vector.load %arg15[%c0_85, %c0_86, %c0_87] : memref<2x8x32xf32, #tpu.memory_space<vmem>>, vector<2x8x32xf32>
    %205 = vector.broadcast %203 : vector<2x8x1xf32> to vector<2x8x32xf32>
    %206 = arith.mulf %205, %204 : vector<2x8x32xf32>
    %cst_88 = arith.constant dense<0.000000e+00> : vector<2x32xf32>
    %207 = vector.multi_reduction <add>, %206, %cst_88 [1] : vector<2x8x32xf32> to vector<2x32xf32>
    %208 = vector.extract_strided_slice %32 {offsets = [0, 5, 0], sizes = [2, 1, 64], strides = [1, 1, 1]} : vector<2x8x64xf32> to vector<2x1x64xf32>
    %209 = vector.shape_cast %208 : vector<2x1x64xf32> to vector<2x64xf32>
    %210 = vector.extract_strided_slice %36 {offsets = [0, 5, 0], sizes = [2, 1, 32], strides = [1, 1, 1]} : vector<2x8x32xf32> to vector<2x1x32xf32>
    %211 = vector.shape_cast %210 : vector<2x1x32xf32> to vector<2x32xf32>
    %cst_89 = arith.constant dense<0.000000e+00> : vector<2x64xf32>
    %212 = tpu.matmul %207, %12, %cst_89 {dimension_numbers = #tpu.dot_dimension_numbers<[1], [0], [0], [1], [0, 0, 1, 1], [], []>} : vector<2x32xf32>, vector<32x64xf32>, vector<2x64xf32> -> vector<2x64xf32>
    %213 = arith.addf %209, %212 : vector<2x64xf32>
    %214 = vector.broadcast %13 : vector<1x64xf32> to vector<2x64xf32>
    %215 = arith.addf %213, %214 : vector<2x64xf32>
    %216 = arith.negf %215 : vector<2x64xf32>
    %217 = math.exp %216 : vector<2x64xf32>
    %cst_90 = arith.constant 1.000000e+00 : f32
    %218 = vector.broadcast %cst_90 : f32 to vector<2x64xf32>
    %219 = arith.addf %218, %217 : vector<2x64xf32>
    %220 = arith.divf %218, %219 : vector<2x64xf32>
    %221 = vector.extract_strided_slice %220 {offsets = [0, 0], sizes = [2, 32], strides = [1, 1]} : vector<2x64xf32> to vector<2x32xf32>
    %222 = vector.extract_strided_slice %220 {offsets = [0, 32], sizes = [2, 32], strides = [1, 1]} : vector<2x64xf32> to vector<2x32xf32>
    %223 = arith.mulf %207, %221 : vector<2x32xf32>
    %cst_91 = arith.constant dense<0.000000e+00> : vector<2x32xf32>
    %224 = tpu.matmul %223, %16, %cst_91 {dimension_numbers = #tpu.dot_dimension_numbers<[1], [0], [0], [1], [0, 0, 1, 1], [], []>} : vector<2x32xf32>, vector<32x32xf32>, vector<2x32xf32> -> vector<2x32xf32>
    %225 = arith.addf %211, %224 : vector<2x32xf32>
    %226 = vector.broadcast %17 : vector<1x32xf32> to vector<2x32xf32>
    %227 = arith.addf %225, %226 : vector<2x32xf32>
    %228 = math.tanh %227 : vector<2x32xf32>
    %229 = arith.mulf %222, %207 : vector<2x32xf32>
    %cst_92 = arith.constant 1.000000e+00 : f32
    %230 = vector.broadcast %cst_92 : f32 to vector<2x32xf32>
    %231 = arith.subf %230, %222 : vector<2x32xf32>
    %232 = arith.mulf %231, %228 : vector<2x32xf32>
    %233 = arith.addf %229, %232 : vector<2x32xf32>
    %234 = vector.shape_cast %233 : vector<2x32xf32> to vector<2x1x32xf32>
    %c0_93 = arith.constant 0 : index
    %c5 = arith.constant 5 : index
    %c0_94 = arith.constant 0 : index
    %235 = vector.load %arg15[%c0_93, %c5, %c0_94] : memref<2x8x32xf32, #tpu.memory_space<vmem>>, vector<2x1x32xf32>
    tpu.vector_store %arg15[%c0_93, %c5, %c0_94], %234 {strides = array<i32>} : memref<2x8x32xf32, #tpu.memory_space<vmem>>, vector<2x1x32xf32>,
    %236 = vector.extract_strided_slice %27 {offsets = [0, 0, 6], sizes = [2, 8, 1], strides = [1, 1, 1]} : vector<2x8x8xf32> to vector<2x8x1xf32>
    %c0_95 = arith.constant 0 : index
    %c0_96 = arith.constant 0 : index
    %c0_97 = arith.constant 0 : index
    %237 = vector.load %arg15[%c0_95, %c0_96, %c0_97] : memref<2x8x32xf32, #tpu.memory_space<vmem>>, vector<2x8x32xf32>
    %238 = vector.broadcast %236 : vector<2x8x1xf32> to vector<2x8x32xf32>
    %239 = arith.mulf %238, %237 : vector<2x8x32xf32>
    %cst_98 = arith.constant dense<0.000000e+00> : vector<2x32xf32>
    %240 = vector.multi_reduction <add>, %239, %cst_98 [1] : vector<2x8x32xf32> to vector<2x32xf32>
    %241 = vector.extract_strided_slice %32 {offsets = [0, 6, 0], sizes = [2, 1, 64], strides = [1, 1, 1]} : vector<2x8x64xf32> to vector<2x1x64xf32>
    %242 = vector.shape_cast %241 : vector<2x1x64xf32> to vector<2x64xf32>
    %243 = vector.extract_strided_slice %36 {offsets = [0, 6, 0], sizes = [2, 1, 32], strides = [1, 1, 1]} : vector<2x8x32xf32> to vector<2x1x32xf32>
    %244 = vector.shape_cast %243 : vector<2x1x32xf32> to vector<2x32xf32>
    %cst_99 = arith.constant dense<0.000000e+00> : vector<2x64xf32>
    %245 = tpu.matmul %240, %12, %cst_99 {dimension_numbers = #tpu.dot_dimension_numbers<[1], [0], [0], [1], [0, 0, 1, 1], [], []>} : vector<2x32xf32>, vector<32x64xf32>, vector<2x64xf32> -> vector<2x64xf32>
    %246 = arith.addf %242, %245 : vector<2x64xf32>
    %247 = vector.broadcast %13 : vector<1x64xf32> to vector<2x64xf32>
    %248 = arith.addf %246, %247 : vector<2x64xf32>
    %249 = arith.negf %248 : vector<2x64xf32>
    %250 = math.exp %249 : vector<2x64xf32>
    %cst_100 = arith.constant 1.000000e+00 : f32
    %251 = vector.broadcast %cst_100 : f32 to vector<2x64xf32>
    %252 = arith.addf %251, %250 : vector<2x64xf32>
    %253 = arith.divf %251, %252 : vector<2x64xf32>
    %254 = vector.extract_strided_slice %253 {offsets = [0, 0], sizes = [2, 32], strides = [1, 1]} : vector<2x64xf32> to vector<2x32xf32>
    %255 = vector.extract_strided_slice %253 {offsets = [0, 32], sizes = [2, 32], strides = [1, 1]} : vector<2x64xf32> to vector<2x32xf32>
    %256 = arith.mulf %240, %254 : vector<2x32xf32>
    %cst_101 = arith.constant dense<0.000000e+00> : vector<2x32xf32>
    %257 = tpu.matmul %256, %16, %cst_101 {dimension_numbers = #tpu.dot_dimension_numbers<[1], [0], [0], [1], [0, 0, 1, 1], [], []>} : vector<2x32xf32>, vector<32x32xf32>, vector<2x32xf32> -> vector<2x32xf32>
    %258 = arith.addf %244, %257 : vector<2x32xf32>
    %259 = vector.broadcast %17 : vector<1x32xf32> to vector<2x32xf32>
    %260 = arith.addf %258, %259 : vector<2x32xf32>
    %261 = math.tanh %260 : vector<2x32xf32>
    %262 = arith.mulf %255, %240 : vector<2x32xf32>
    %cst_102 = arith.constant 1.000000e+00 : f32
    %263 = vector.broadcast %cst_102 : f32 to vector<2x32xf32>
    %264 = arith.subf %263, %255 : vector<2x32xf32>
    %265 = arith.mulf %264, %261 : vector<2x32xf32>
    %266 = arith.addf %262, %265 : vector<2x32xf32>
    %267 = vector.shape_cast %266 : vector<2x32xf32> to vector<2x1x32xf32>
    %c0_103 = arith.constant 0 : index
    %c6 = arith.constant 6 : index
    %c0_104 = arith.constant 0 : index
    %268 = vector.load %arg15[%c0_103, %c6, %c0_104] : memref<2x8x32xf32, #tpu.memory_space<vmem>>, vector<2x1x32xf32>
    tpu.vector_store %arg15[%c0_103, %c6, %c0_104], %267 {strides = array<i32>} : memref<2x8x32xf32, #tpu.memory_space<vmem>>, vector<2x1x32xf32>,
    %269 = vector.extract_strided_slice %27 {offsets = [0, 0, 7], sizes = [2, 8, 1], strides = [1, 1, 1]} : vector<2x8x8xf32> to vector<2x8x1xf32>
    %c0_105 = arith.constant 0 : index
    %c0_106 = arith.constant 0 : index
    %c0_107 = arith.constant 0 : index
    %270 = vector.load %arg15[%c0_105, %c0_106, %c0_107] : memref<2x8x32xf32, #tpu.memory_space<vmem>>, vector<2x8x32xf32>
    %271 = vector.broadcast %269 : vector<2x8x1xf32> to vector<2x8x32xf32>
    %272 = arith.mulf %271, %270 : vector<2x8x32xf32>
    %cst_108 = arith.constant dense<0.000000e+00> : vector<2x32xf32>
    %273 = vector.multi_reduction <add>, %272, %cst_108 [1] : vector<2x8x32xf32> to vector<2x32xf32>
    %274 = vector.extract_strided_slice %32 {offsets = [0, 7, 0], sizes = [2, 1, 64], strides = [1, 1, 1]} : vector<2x8x64xf32> to vector<2x1x64xf32>
    %275 = vector.shape_cast %274 : vector<2x1x64xf32> to vector<2x64xf32>
    %276 = vector.extract_strided_slice %36 {offsets = [0, 7, 0], sizes = [2, 1, 32], strides = [1, 1, 1]} : vector<2x8x32xf32> to vector<2x1x32xf32>
    %277 = vector.shape_cast %276 : vector<2x1x32xf32> to vector<2x32xf32>
    %cst_109 = arith.constant dense<0.000000e+00> : vector<2x64xf32>
    %278 = tpu.matmul %273, %12, %cst_109 {dimension_numbers = #tpu.dot_dimension_numbers<[1], [0], [0], [1], [0, 0, 1, 1], [], []>} : vector<2x32xf32>, vector<32x64xf32>, vector<2x64xf32> -> vector<2x64xf32>
    %279 = arith.addf %275, %278 : vector<2x64xf32>
    %280 = vector.broadcast %13 : vector<1x64xf32> to vector<2x64xf32>
    %281 = arith.addf %279, %280 : vector<2x64xf32>
    %282 = arith.negf %281 : vector<2x64xf32>
    %283 = math.exp %282 : vector<2x64xf32>
    %cst_110 = arith.constant 1.000000e+00 : f32
    %284 = vector.broadcast %cst_110 : f32 to vector<2x64xf32>
    %285 = arith.addf %284, %283 : vector<2x64xf32>
    %286 = arith.divf %284, %285 : vector<2x64xf32>
    %287 = vector.extract_strided_slice %286 {offsets = [0, 0], sizes = [2, 32], strides = [1, 1]} : vector<2x64xf32> to vector<2x32xf32>
    %288 = vector.extract_strided_slice %286 {offsets = [0, 32], sizes = [2, 32], strides = [1, 1]} : vector<2x64xf32> to vector<2x32xf32>
    %289 = arith.mulf %273, %287 : vector<2x32xf32>
    %cst_111 = arith.constant dense<0.000000e+00> : vector<2x32xf32>
    %290 = tpu.matmul %289, %16, %cst_111 {dimension_numbers = #tpu.dot_dimension_numbers<[1], [0], [0], [1], [0, 0, 1, 1], [], []>} : vector<2x32xf32>, vector<32x32xf32>, vector<2x32xf32> -> vector<2x32xf32>
    %291 = arith.addf %277, %290 : vector<2x32xf32>
    %292 = vector.broadcast %17 : vector<1x32xf32> to vector<2x32xf32>
    %293 = arith.addf %291, %292 : vector<2x32xf32>
    %294 = math.tanh %293 : vector<2x32xf32>
    %295 = arith.mulf %288, %273 : vector<2x32xf32>
    %cst_112 = arith.constant 1.000000e+00 : f32
    %296 = vector.broadcast %cst_112 : f32 to vector<2x32xf32>
    %297 = arith.subf %296, %288 : vector<2x32xf32>
    %298 = arith.mulf %297, %294 : vector<2x32xf32>
    %299 = arith.addf %295, %298 : vector<2x32xf32>
    %300 = vector.shape_cast %299 : vector<2x32xf32> to vector<2x1x32xf32>
    %c0_113 = arith.constant 0 : index
    %c7 = arith.constant 7 : index
    %c0_114 = arith.constant 0 : index
    %301 = vector.load %arg15[%c0_113, %c7, %c0_114] : memref<2x8x32xf32, #tpu.memory_space<vmem>>, vector<2x1x32xf32>
    tpu.vector_store %arg15[%c0_113, %c7, %c0_114], %300 {strides = array<i32>} : memref<2x8x32xf32, #tpu.memory_space<vmem>>, vector<2x1x32xf32>,
    %c0_115 = arith.constant 0 : index
    %c0_116 = arith.constant 0 : index
    %c0_117 = arith.constant 0 : index
    %302 = vector.load %arg15[%c0_115, %c0_116, %c0_117] : memref<2x8x32xf32, #tpu.memory_space<vmem>>, vector<2x8x32xf32>
    %303 = vector.shape_cast %302 : vector<2x8x32xf32> to vector<16x32xf32>
    %c0_118 = arith.constant 0 : index
    %c0_119 = arith.constant 0 : index
    %304 = vector.load %arg13[%c0_118, %c0_119] : memref<32x16xf32, #tpu.memory_space<vmem>>, vector<32x16xf32>
    %cst_120 = arith.constant dense<0.000000e+00> : vector<16x16xf32>
    %305 = tpu.matmul %303, %304, %cst_120 {dimension_numbers = #tpu.dot_dimension_numbers<[1], [0], [0], [1], [0, 0, 1, 1], [], []>} : vector<16x32xf32>, vector<32x16xf32>, vector<16x16xf32> -> vector<16x16xf32>
    %306 = vector.shape_cast %305 : vector<16x16xf32> to vector<2x8x16xf32>
    %c0_121 = arith.constant 0 : index
    %c0_122 = arith.constant 0 : index
    %c0_123 = arith.constant 0 : index
    %307 = vector.load %arg14[%c0_121, %c0_122, %c0_123] : memref<2x8x16xf32, #tpu.memory_space<vmem>>, vector<2x8x16xf32>
    tpu.vector_store %arg14[%c0_121, %c0_122, %c0_123], %306 {strides = array<i32>} : memref<2x8x16xf32, #tpu.memory_space<vmem>>, vector<2x8x16xf32>,
    return
  }
  func.func @transform_0(%arg0: i32) -> (i32, i32, i32) {
    %c0_i32 = arith.constant 0 : i32
    %c0_i32_0 = arith.constant 0 : i32
    %c0_i32_1 = arith.constant 0 : i32
    return %arg0, %c0_i32, %c0_i32_0 : i32, i32, i32
  }
  func.func @transform_1(%arg0: i32) -> (i32, i32, i32) {
    %c0_i32 = arith.constant 0 : i32
    %c0_i32_0 = arith.constant 0 : i32
    %c0_i32_1 = arith.constant 0 : i32
    return %arg0, %c0_i32, %c0_i32_0 : i32, i32, i32
  }
  func.func @transform_2(%arg0: i32) -> (i32, i32) {
    %c0_i32 = arith.constant 0 : i32
    %c0_i32_0 = arith.constant 0 : i32
    %c0_i32_1 = arith.constant 0 : i32
    return %c0_i32, %c0_i32_0 : i32, i32
  }
  func.func @transform_3(%arg0: i32) -> (i32, i32, i32) {
    %c0_i32 = arith.constant 0 : i32
    %c0_i32_0 = arith.constant 0 : i32
    %c0_i32_1 = arith.constant 0 : i32
    return %arg0, %c0_i32, %c0_i32_0 : i32, i32, i32
  }
  func.func @transform_4(%arg0: i32) -> (i32, i32) {
    %c0_i32 = arith.constant 0 : i32
    %c0_i32_0 = arith.constant 0 : i32
    %c0_i32_1 = arith.constant 0 : i32
    return %c0_i32, %c0_i32_0 : i32, i32
  }
  func.func @transform_5(%arg0: i32) -> (i32, i32) {
    %c0_i32 = arith.constant 0 : i32
    %c0_i32_0 = arith.constant 0 : i32
    %c0_i32_1 = arith.constant 0 : i32
    return %c0_i32, %c0_i32_0 : i32, i32
  }
  func.func @transform_6(%arg0: i32) -> (i32, i32) {
    %c0_i32 = arith.constant 0 : i32
    %c0_i32_0 = arith.constant 0 : i32
    %c0_i32_1 = arith.constant 0 : i32
    return %c0_i32, %c0_i32_0 : i32, i32
  }
  func.func @transform_7(%arg0: i32) -> (i32, i32) {
    %c0_i32 = arith.constant 0 : i32
    %c0_i32_0 = arith.constant 0 : i32
    %c0_i32_1 = arith.constant 0 : i32
    return %c0_i32, %c0_i32_0 : i32, i32
  }
  func.func @transform_8(%arg0: i32) -> (i32, i32) {
    %c0_i32 = arith.constant 0 : i32
    %c0_i32_0 = arith.constant 0 : i32
    %c0_i32_1 = arith.constant 0 : i32
    return %c0_i32, %c0_i32_0 : i32, i32
  }
  func.func @transform_9(%arg0: i32) -> (i32, i32) {
    %c0_i32 = arith.constant 0 : i32
    %c0_i32_0 = arith.constant 0 : i32
    %c0_i32_1 = arith.constant 0 : i32
    return %c0_i32, %c0_i32_0 : i32, i32
  }
  func.func @transform_10(%arg0: i32) -> (i32, i32) {
    %c0_i32 = arith.constant 0 : i32
    %c0_i32_0 = arith.constant 0 : i32
    %c0_i32_1 = arith.constant 0 : i32
    return %c0_i32, %c0_i32_0 : i32, i32
  }
  func.func @transform_11(%arg0: i32) -> (i32, i32) {
    %c0_i32 = arith.constant 0 : i32
    %c0_i32_0 = arith.constant 0 : i32
    %c0_i32_1 = arith.constant 0 : i32
    return %c0_i32, %c0_i32_0 : i32, i32
  }
  func.func @transform_12(%arg0: i32) -> (i32, i32) {
    %c0_i32 = arith.constant 0 : i32
    %c0_i32_0 = arith.constant 0 : i32
    %c0_i32_1 = arith.constant 0 : i32
    return %c0_i32, %c0_i32_0 : i32, i32
  }
  func.func @transform_13(%arg0: i32) -> (i32, i32, i32) {
    %c0_i32 = arith.constant 0 : i32
    %c0_i32_0 = arith.constant 0 : i32
    %c0_i32_1 = arith.constant 0 : i32
    return %arg0, %c0_i32, %c0_i32_0 : i32, i32, i32
  }
}

</mosaic_0001>

<llo_original>
// kernel: _lambda_.3
$region0: #{_lambda_.3}
  #allocation0 [shape = 'u32[]', space=smem, size = 0x4, offset = 0x4, fixed_abs, tag = 'smem constant byte address 0x4 - core index']
  #allocation1 [shape = 'u32[144,128]{1,0:T(1,128)}', space=vmem, size = 0x12000, scoped, tag = 'internal scratch']
  #allocation2 [shape = 'f32[16,32]{1,0:T(8,128)}', space=vmem, size = 0x2000, scoped, tag = 'scratch operand']
  %s0 = inlined_call_operand.vmem [shape: f32[16,16], index: 0, kind: input, shape index: {}]
  %s1 = inlined_call_operand.vmem [shape: f32[16,32], index: 1, kind: input, shape index: {}]
  %s2 = inlined_call_operand.vmem [shape: f32[16,32], index: 2, kind: output, shape index: {}]
  %s3 = sld [smem:[#allocation0]]
  $region22: #{_lambda_.3} parent=0
    _
  %s5 = ssub.s32 1, %s3
  %s6 = scalar_select 0, %s5, %s3
  // Predicated region
  $region2: #{_lambda_.3} parent=0 // pred_check
    _
  $region3: #{_lambda_.3} parent=0 // pred_check_branch
    %8 = sbr.rel (0) target = $region5
  $region4: #{_lambda_.3} parent=0 // pred_region
    _
  $region5: #{_lambda_.3} parent=0 // pred_fallthru
    _
  // Predicated region
  $region6: #{_lambda_.3} parent=0 // pred_check
    _
  $region7: #{_lambda_.3} parent=0 // pred_check_branch
    %10 = sbr.rel (0) target = $region9
  $region8: #{_lambda_.3} parent=0 // pred_region
    _
  $region9: #{_lambda_.3} parent=0 // pred_fallthru
    _
  %p11 = scmp.eq.s32.totalorder 0, 0
  // Predicated region
  $region10: #{_lambda_.3} parent=0 // pred_check
    %p12 = pneg %p11
  $region11: #{_lambda_.3} parent=0 // pred_check_branch
    %14 = sbr.rel (%p12) target = $region13
  $region12: #{_lambda_.3} parent=0 // pred_region
    %vm15 = vcmask 261120
    %16 = vst.msk [vmem:[#allocation2] sm:$0xff] %vm15, 0.0
    %17 = vst.msk [vmem:[#allocation2 + $0x8] sm:$0xff] %vm15, 0.0
  $region13: #{_lambda_.3} parent=0 // pred_fallthru
    _
  %v18 = vld [vmem:[#allocation2] sm:$0xff]
  %v19 = vld [vmem:[#allocation2 + $0x8] sm:$0xff]
  %v20 = vld [vmem:[%s0] sm:$0xff]
  %v21 = vld [vmem:[%s0 + $0x8] sm:$0xff]
  %v22 = vld [vmem:[%s1] sm:$0xff]
  %v23 = vld [vmem:[%s1 + $0x8] sm:$0xff]
  %vm24 = vcmask 130048
  %v26 = vsel %vm24, %v20, 0
  %v29 = vsel %vm24, %v21, 0
  %31 = vmatprep.subr.mxu0 0.0
  %32 = vmatpush1.msra.mxu0 %v22
  %33 = vmatprep.subr.mxu0 0.0
  %34 = vmatpush1.msra.mxu0 %v23
  %35 = vmatprep.subr.mxu0 0.0
  %36 = vmatpush1.msra.mxu0 0.0
  %37 = vmatprep.subr.mxu0 0.0
  %38 = vmatpush1.msra.mxu0 0.0
  %39 = vmatprep.subr.mxu0 0.0
  %40 = vmatpush1.msra.mxu0 0.0
  %41 = vmatprep.subr.mxu0 0.0
  %42 = vmatpush1.msra.mxu0 0.0
  %43 = vmatprep.subr.mxu0 0.0
  %44 = vmatpush1.msra.mxu0 0.0
  %45 = vmatprep.subr.mxu0 0.0
  %46 = vmatpush1.msra.mxu0 0.0
  %47 = vmatprep.subr.mxu0 0.0
  %48 = vmatpush1.msra.mxu0 0.0
  %49 = vmatprep.subr.mxu0 0.0
  %50 = vmatpush1.msra.mxu0 0.0
  %51 = vmatprep.subr.mxu0 0.0
  %52 = vmatpush1.msra.mxu0 0.0
  %53 = vmatprep.subr.mxu0 0.0
  %54 = vmatpush1.msra.mxu0 0.0
  %55 = vmatprep.subr.mxu0 0.0
  %56 = vmatpush1.msra.mxu0 0.0
  %57 = vmatprep.subr.mxu0 0.0
  %58 = vmatpush1.msra.mxu0 0.0
  %59 = vmatprep.subr.mxu0 0.0
  %60 = vmatpush1.msra.mxu0 0.0
  %61 = vmatprep.subr.mxu0 0.0
  %62 = vmatpush1.msra.mxu0 0.0
  %63 = vmatprep.subr.mxu0 0.0
  %64 = vmatpush1.msra.mxu0 0.0
  %65 = vmatprep.subr.mxu0 0.0
  %66 = vmatpush1.msra.mxu0 0.0
  %67 = vmatprep.subr.mxu0 0.0
  %68 = vmatpush1.msra.mxu0 0.0
  %69 = vmatprep.subr.mxu0 0.0
  %70 = vmatpush1.msra.mxu0 0.0
  %71 = vmatprep.subr.mxu0 0.0
  %72 = vmatpush1.msra.mxu0 0.0
  %73 = vmatprep.subr.mxu0 0.0
  %74 = vmatpush1.msra.mxu0 0.0
  %75 = vmatprep.subr.mxu0 0.0
  %76 = vmatpush1.msra.mxu0 0.0
  %77 = vmatprep.subr.mxu0 0.0
  %78 = vmatpush1.msra.mxu0 0.0
  %79 = vmatprep.subr.mxu0 0.0
  %80 = vmatpush1.msra.mxu0 0.0
  %81 = vmatprep.subr.mxu0 0.0
  %82 = vmatpush1.msra.mxu0 0.0
  %83 = vmatprep.subr.mxu0 0.0
  %84 = vmatpush1.msra.mxu0 0.0
  %85 = vmatprep.subr.mxu0 0.0
  %86 = vmatpush1.msra.mxu0 0.0
  %87 = vmatprep.subr.mxu0 0.0
  %88 = vmatpush1.msra.mxu0 0.0
  %89 = vmatprep.subr.mxu0 0.0
  %90 = vmatpush1.msra.mxu0 0.0
  %91 = vmatprep.subr.mxu0 0.0
  %92 = vmatpush1.msra.mxu0 0.0
  %93 = vmatprep.subr.mxu0 0.0
  %94 = vmatpush1.msra.mxu0 0.0
  %95 = vmatprep.mubr.f32.mxu0 0.0
  %96 = vmatmul.mubr.f32.gmra.mrb[0].mxu0 %v26
  %v97 = vpop.f32.mrb[0].mxu0
  %v98 = vadd.f32 0.0, %v97
  %v99 = vpop.f32.mrb[0].mxu0
  %100 = vmatprep.mubr.f32.mxu0 0.0
  %101 = vmatmul.mubr.f32.gmra.mrb[0].mxu0 %v29
  %v102 = vpop.f32.mrb[0].mxu0
  %v103 = vadd.f32 0.0, %v102
  %v104 = vpop.f32.mrb[0].mxu0
  %105 = vdwg.mxu0
  %v106 = vadd.f32 %v18, %v98
  %v107 = vadd.f32 %v19, %v103
  %vm108 = vcmask 261120
  %109 = vst.msk [vmem:[#allocation2] sm:$0xff] %vm108, %v106
  %110 = vst.msk [vmem:[#allocation2 + $0x8] sm:$0xff] %vm108, %v107
  %v111 = vld [vmem:[#allocation2] sm:$0xff]
  %v112 = vld [vmem:[#allocation2 + $0x8] sm:$0xff]
  %113 = vst.msk [vmem:[%s2] sm:$0xff] %vm108, %v111
  %114 = vst.msk [vmem:[%s2 + $0x8] sm:$0xff] %vm108, %v112
  // Predicated region
  $region14: #{_lambda_.3} parent=0 // pred_check
    _
  $region15: #{_lambda_.3} parent=0 // pred_check_branch
    %116 = sbr.rel (0) target = $region17
  $region16: #{_lambda_.3} parent=0 // pred_region
    _
  $region17: #{_lambda_.3} parent=0 // pred_fallthru
    _
  // Predicated region
  $region18: #{_lambda_.3} parent=0 // pred_check
    _
  $region19: #{_lambda_.3} parent=0 // pred_check_branch
    %118 = sbr.rel (0) target = $region21
  $region20: #{_lambda_.3} parent=0 // pred_region
    _
  $region21: #{_lambda_.3} parent=0 // pred_fallthru
    _

// kernel: _lambda_.4
$region0: #{_lambda_.4}
  #allocation0 [shape = 'u32[]', space=smem, size = 0x4, offset = 0x4, fixed_abs, tag = 'smem constant byte address 0x4 - core index']
  #allocation1 [shape = 'u32[144,128]{1,0:T(1,128)}', space=vmem, size = 0x12000, scoped, tag = 'internal scratch']
  #allocation2 [shape = 'f32[2,8,32]{2,1,0:T(8,128)}', space=vmem, size = 0x2000, scoped, tag = 'scratch operand']
  %s0 = inlined_call_operand.vmem [shape: f32[2,8,32], index: 0, kind: input, shape index: {}]
  %s1 = inlined_call_operand.vmem [shape: f32[2,8,8], index: 1, kind: input, shape index: {}]
  %s2 = inlined_call_operand.vmem [shape: f32[2,8,1], index: 2, kind: input, shape index: {}]
  %s3 = inlined_call_operand.vmem [shape: f32[32,64], index: 3, kind: input, shape index: {}]
  %s4 = inlined_call_operand.hbm [shape: f32[1,64], index: 4, kind: input, shape index: {}]
  %s5 = inlined_call_operand.vmem [shape: f32[32,64], index: 5, kind: input, shape index: {}]
  %s6 = inlined_call_operand.vmem [shape: f32[1,64], index: 6, kind: input, shape index: {}]
  %s7 = inlined_call_operand.vmem [shape: f32[32,32], index: 7, kind: input, shape index: {}]
  %s8 = inlined_call_operand.vmem [shape: f32[1,32], index: 8, kind: input, shape index: {}]
  %s9 = inlined_call_operand.vmem [shape: f32[32,32], index: 9, kind: input, shape index: {}]
  %s10 = inlined_call_operand.vmem [shape: f32[1,32], index: 10, kind: input, shape index: {}]
  %s11 = inlined_call_operand.vmem [shape: f32[2,1,32], index: 11, kind: output, shape index: {}]
  %s12 = sld [smem:[#allocation0]]
  $region58: #{_lambda_.4} parent=0
    _
  %s14 = ssub.s32 1, %s12
  %s15 = scalar_select 0, %s14, %s12
  $region1: #{_lambda_.4} parent=0
    #allocation3 [shape = 'u8[512]{0}', space=vmem, size = 0x400, scoped, tag = 'input window, operand 4, single buffered']
    #allocation4 [shape = 's32[1]{0}', space=sflag, size = 0x4, scoped, tag = 'scoped memory for _lambda_.4']
    %16 = vsyncpa [#allocation4], 0
    // Predicated region
    $region2: #{_lambda_.4} parent=1 // pred_check
      _
    $region3: #{_lambda_.4} parent=1 // pred_check_branch
      %18 = sbr.rel (0) target = $region5
    $region4: #{_lambda_.4} parent=1 // pred_region
      _
    $region5: #{_lambda_.4} parent=1 // pred_fallthru
      _
    // Predicated region
    $region6: #{_lambda_.4} parent=1 // pred_check
      _
    $region7: #{_lambda_.4} parent=1 // pred_check_branch
      %20 = sbr.rel (0) target = $region9
    $region8: #{_lambda_.4} parent=1 // pred_region
      _
    $region9: #{_lambda_.4} parent=1 // pred_fallthru
      _
    // Predicated region
    $region10: #{_lambda_.4} parent=1 // pred_check
      _
    $region11: #{_lambda_.4} parent=1 // pred_check_branch
      %22 = sbr.rel (0) target = $region13
    $region12: #{_lambda_.4} parent=1 // pred_region
      _
    $region13: #{_lambda_.4} parent=1 // pred_fallthru
      _
    // Predicated region
    $region14: #{_lambda_.4} parent=1 // pred_check
      _
    $region15: #{_lambda_.4} parent=1 // pred_check_branch
      %24 = sbr.rel (0) target = $region17
    $region16: #{_lambda_.4} parent=1 // pred_region
      _
    $region17: #{_lambda_.4} parent=1 // pred_fallthru
      _
    // Predicated region
    $region18: #{_lambda_.4} parent=1 // pred_check
      _
    $region19: #{_lambda_.4} parent=1 // pred_check_branch
      %26 = sbr.rel (0) target = $region21
    $region20: #{_lambda_.4} parent=1 // pred_region
      %s28 = ssub.s32 16, 16
      %29 = vsyncadd [#allocation4], %s28
      %s31 = sshll.u32 [#allocation3], 4
      %s32 = int_to_ptr.vmem [resolvable:$true] %s31
      %34 = dma.hbm_to_vmem [thread:$0]  %s4, 16, %s32, [#allocation4]
    $region21: #{_lambda_.4} parent=1 // pred_fallthru
      _
    // Predicated region
    $region22: #{_lambda_.4} parent=1 // pred_check
      _
    $region23: #{_lambda_.4} parent=1 // pred_check_branch
      %36 = sbr.rel (0) target = $region25
    $region24: #{_lambda_.4} parent=1 // pred_region
      _
    $region25: #{_lambda_.4} parent=1 // pred_fallthru
      _
    // Predicated region
    $region26: #{_lambda_.4} parent=1 // pred_check
      _
    $region27: #{_lambda_.4} parent=1 // pred_check_branch
      %38 = sbr.rel (0) target = $region29
    $region28: #{_lambda_.4} parent=1 // pred_region
      _
    $region29: #{_lambda_.4} parent=1 // pred_fallthru
      _
    // Predicated region
    $region30: #{_lambda_.4} parent=1 // pred_check
      _
    $region31: #{_lambda_.4} parent=1 // pred_check_branch
      %40 = sbr.rel (0) target = $region33
    $region32: #{_lambda_.4} parent=1 // pred_region
      _
    $region33: #{_lambda_.4} parent=1 // pred_fallthru
      _
    // Predicated region
    $region34: #{_lambda_.4} parent=1 // pred_check
      _
    $region35: #{_lambda_.4} parent=1 // pred_check_branch
      %42 = sbr.rel (0) target = $region37
    $region36: #{_lambda_.4} parent=1 // pred_region
      _
    $region37: #{_lambda_.4} parent=1 // pred_fallthru
      _
    // Predicated region
    $region38: #{_lambda_.4} parent=1 // pred_check
      _
    $region39: #{_lambda_.4} parent=1 // pred_check_branch
      %44 = sbr.rel (0) target = $region41
    $region40: #{_lambda_.4} parent=1 // pred_region
      _
    $region41: #{_lambda_.4} parent=1 // pred_fallthru
      _
    // Predicated region
    $region42: #{_lambda_.4} parent=1 // pred_check
      _
    $region43: #{_lambda_.4} parent=1 // pred_check_branch
      %46 = sbr.rel (0) target = $region45
    $region44: #{_lambda_.4} parent=1 // pred_region
      _
    $region45: #{_lambda_.4} parent=1 // pred_fallthru
      _
    // Predicated region
    $region46: #{_lambda_.4} parent=1 // pred_check
      _
    $region47: #{_lambda_.4} parent=1 // pred_check_branch
      %48 = sbr.rel (0) target = $region49
    $region48: #{_lambda_.4} parent=1 // pred_region
      %49 = dma.done [#allocation4], 16
    $region49: #{_lambda_.4} parent=1 // pred_fallthru
      _
    %v50 = vld [vmem:[%s0] sm:$0xff]
    %v51 = vld [vmem:[%s0 + $0x8] sm:$0xff]
    %v52 = vld [vmem:[%s1] sm:$0xff]
    %v53 = vld [vmem:[%s1 + $0x8] sm:$0xff]
    %v54 = vld [vmem:[%s3] sm:$0xff]
    %v55 = vld [vmem:[%s3 + $0x8] sm:$0xff]
    %v56 = vld [vmem:[%s3 + $0x10] sm:$0xff]
    %v57 = vld [vmem:[%s3 + $0x18] sm:$0xff]
    %v58 = vld [vmem:[#allocation3] sm:$0x1]
    %v59 = vld [vmem:[%s5] sm:$0xff]
    %v60 = vld [vmem:[%s5 + $0x8] sm:$0xff]
    %v61 = vld [vmem:[%s5 + $0x10] sm:$0xff]
    %v62 = vld [vmem:[%s5 + $0x18] sm:$0xff]
    %v63 = vld [vmem:[%s6] sm:$0x1]
    %v64 = vld [vmem:[%s7] sm:$0xff]
    %v65 = vld [vmem:[%s7 + $0x8] sm:$0xff]
    %v66 = vld [vmem:[%s7 + $0x10] sm:$0xff]
    %v67 = vld [vmem:[%s7 + $0x18] sm:$0xff]
    %v68 = vld [vmem:[%s8] sm:$0x1]
    %v69 = vld [vmem:[%s9] sm:$0xff]
    %v70 = vld [vmem:[%s9 + $0x8] sm:$0xff]
    %v71 = vld [vmem:[%s9 + $0x10] sm:$0xff]
    %v72 = vld [vmem:[%s9 + $0x18] sm:$0xff]
    %v73 = vld [vmem:[%s10] sm:$0x1]
    %vm74 = vcmask 64512
    %v75 = vsel %vm74, %v52, 0.0
    %76 = vadd.xlane.f32.xlu0 %v75
    %v77 = vpop.xlane.xlu0 %76
    %v78 = vsel %vm74, %v53, 0.0
    %79 = vadd.xlane.f32.xlu0 %v78
    %v80 = vpop.xlane.xlu0 %79
    %vm81 = vcmp.ne.f32.partialorder %v77, 0.0
    %vm82 = vcmp.ne.f32.partialorder %v80, 0.0
    %v83 = vrcp.pop %v77
    %v84 = vmul.f32 1.0, %v83
    %v85 = vrcp.pop %v80
    %v86 = vmul.f32 1.0, %v85
    %v87 = vsel %vm81, %v84, 0.0
    %v88 = vsel %vm82, %v86, 0.0
    %v91 = vlaneseq
    %v92 = vand.u32 %v91, 127
    %v93 = vlaneseq
    %v94 = vshrl.u32 %v93, 7
    %v95 = vsub.s32 %v92, %v94
    %v96 = vrot.slane %v87, %v95
    %v97 = vlaneseq
    %v98 = vshrl.u32 %v97, 7
    %v99 = vsub.s32 %v92, %v98
    %v100 = vrot.slane %v88, %v99
    %vm101 = vcmask 1041409
    %vm102 = vcmask 1042434
    %v103 = vsel %vm102, %v96, %v96
    %vm104 = vcmask 1043459
    %v105 = vsel %vm104, %v96, %v103
    %vm106 = vcmask 1044484
    %v107 = vsel %vm106, %v96, %v105
    %vm108 = vcmask 1045509
    %v109 = vsel %vm108, %v96, %v107
    %vm110 = vcmask 1046534
    %v111 = vsel %vm110, %v96, %v109
    %vm112 = vcmask 1047559
    %v113 = vsel %vm112, %v96, %v111
    %v114 = vsel %vm102, %v100, %v100
    %v115 = vsel %vm104, %v100, %v114
    %v116 = vsel %vm106, %v100, %v115
    %v117 = vsel %vm108, %v100, %v116
    %v118 = vsel %vm110, %v100, %v117
    %v119 = vsel %vm112, %v100, %v118
    %v122 = vmul.f32 %v52, %v113
    %v123 = vmul.f32 %v53, %v119
    %v125 = vlaneseq
    %v126 = vshrl.u32 %v125, 7
    %v127 = vsub.s32 0, %v126
    %v128 = vrot.slane %v58, %v127
    %vm130 = vcmask 261120
    %v132 = vsel %vm130, %v50, 0
    %v135 = vsel %vm130, %v51, 0
    %137 = vmatprep.subr.mxu0 0.0
    %138 = vmatpush1.msra.mxu0 %v54
    %139 = vmatprep.subr.mxu0 0.0
    %140 = vmatpush1.msra.mxu0 %v55
    %141 = vmatprep.subr.mxu0 0.0
    %142 = vmatpush1.msra.mxu0 %v56
    %143 = vmatprep.subr.mxu0 0.0
    %144 = vmatpush1.msra.mxu0 %v57
    %145 = vmatprep.subr.mxu0 0.0
    %146 = vmatpush1.msra.mxu0 0.0
    %147 = vmatprep.subr.mxu0 0.0
    %148 = vmatpush1.msra.mxu0 0.0
    %149 = vmatprep.subr.mxu0 0.0
    %150 = vmatpush1.msra.mxu0 0.0
    %151 = vmatprep.subr.mxu0 0.0
    %152 = vmatpush1.msra.mxu0 0.0
    %153 = vmatprep.subr.mxu0 0.0
    %154 = vmatpush1.msra.mxu0 0.0
    %155 = vmatprep.subr.mxu0 0.0
    %156 = vmatpush1.msra.mxu0 0.0
    %157 = vmatprep.subr.mxu0 0.0
    %158 = vmatpush1.msra.mxu0 0.0
    %159 = vmatprep.subr.mxu0 0.0
    %160 = vmatpush1.msra.mxu0 0.0
    %161 = vmatprep.subr.mxu0 0.0
    %162 = vmatpush1.msra.mxu0 0.0
    %163 = vmatprep.subr.mxu0 0.0
    %164 = vmatpush1.msra.mxu0 0.0
    %165 = vmatprep.subr.mxu0 0.0
    %166 = vmatpush1.msra.mxu0 0.0
    %167 = vmatprep.subr.mxu0 0.0
    %168 = vmatpush1.msra.mxu0 0.0
    %169 = vmatprep.subr.mxu0 0.0
    %170 = vmatpush1.msra.mxu0 0.0
    %171 = vmatprep.subr.mxu0 0.0
    %172 = vmatpush1.msra.mxu0 0.0
    %173 = vmatprep.subr.mxu0 0.0
    %174 = vmatpush1.msra.mxu0 0.0
    %175 = vmatprep.subr.mxu0 0.0
    %176 = vmatpush1.msra.mxu0 0.0
    %177 = vmatprep.subr.mxu0 0.0
    %178 = vmatpush1.msra.mxu0 0.0
    %179 = vmatprep.subr.mxu0 0.0
    %180 = vmatpush1.msra.mxu0 0.0
    %181 = vmatprep.subr.mxu0 0.0
    %182 = vmatpush1.msra.mxu0 0.0
    %183 = vmatprep.subr.mxu0 0.0
    %184 = vmatpush1.msra.mxu0 0.0
    %185 = vmatprep.subr.mxu0 0.0
    %186 = vmatpush1.msra.mxu0 0.0
    %187 = vmatprep.subr.mxu0 0.0
    %188 = vmatpush1.msra.mxu0 0.0
    %189 = vmatprep.subr.mxu0 0.0
    %190 = vmatpush1.msra.mxu0 0.0
    %191 = vmatprep.subr.mxu0 0.0
    %192 = vmatpush1.msra.mxu0 0.0
    %193 = vmatprep.subr.mxu0 0.0
    %194 = vmatpush1.msra.mxu0 0.0
    %195 = vmatprep.subr.mxu0 0.0
    %196 = vmatpush1.msra.mxu0 0.0
    %197 = vmatprep.subr.mxu0 0.0
    %198 = vmatpush1.msra.mxu0 0.0
    %199 = vmatprep.subr.mxu0 0.0
    %200 = vmatpush1.msra.mxu0 0.0
    %201 = vmatprep.mubr.f32.mxu0 0.0
    %202 = vmatmul.mubr.f32.gmra.mrb[0].mxu0 %v132
    %v203 = vpop.f32.mrb[0].mxu0
    %v204 = vadd.f32 %v128, %v203
    %v205 = vpop.f32.mrb[0].mxu0
    %206 = vmatprep.mubr.f32.mxu0 0.0
    %207 = vmatmul.mubr.f32.gmra.mrb[0].mxu0 %v135
    %v208 = vpop.f32.mrb[0].mxu0
    %v209 = vadd.f32 %v128, %v208
    %v210 = vpop.f32.mrb[0].mxu0
    %211 = vdwg.mxu0
    %v213 = vlaneseq
    %v214 = vshrl.u32 %v213, 7
    %v215 = vsub.s32 0, %v214
    %v216 = vrot.slane %v68, %v215
    %218 = vmatprep.subr.mxu0 0.0
    %219 = vmatpush1.msra.mxu0 %v64
    %220 = vmatprep.subr.mxu0 0.0
    %221 = vmatpush1.msra.mxu0 %v65
    %222 = vmatprep.subr.mxu0 0.0
    %223 = vmatpush1.msra.mxu0 %v66
    %224 = vmatprep.subr.mxu0 0.0
    %225 = vmatpush1.msra.mxu0 %v67
    %226 = vmatprep.subr.mxu0 0.0
    %227 = vmatpush1.msra.mxu0 0.0
    %228 = vmatprep.subr.mxu0 0.0
    %229 = vmatpush1.msra.mxu0 0.0
    %230 = vmatprep.subr.mxu0 0.0
    %231 = vmatpush1.msra.mxu0 0.0
    %232 = vmatprep.subr.mxu0 0.0
    %233 = vmatpush1.msra.mxu0 0.0
    %234 = vmatprep.subr.mxu0 0.0
    %235 = vmatpush1.msra.mxu0 0.0
    %236 = vmatprep.subr.mxu0 0.0
    %237 = vmatpush1.msra.mxu0 0.0
    %238 = vmatprep.subr.mxu0 0.0
    %239 = vmatpush1.msra.mxu0 0.0
    %240 = vmatprep.subr.mxu0 0.0
    %241 = vmatpush1.msra.mxu0 0.0
    %242 = vmatprep.subr.mxu0 0.0
    %243 = vmatpush1.msra.mxu0 0.0
    %244 = vmatprep.subr.mxu0 0.0
    %245 = vmatpush1.msra.mxu0 0.0
    %246 = vmatprep.subr.mxu0 0.0
    %247 = vmatpush1.msra.mxu0 0.0
    %248 = vmatprep.subr.mxu0 0.0
    %249 = vmatpush1.msra.mxu0 0.0
    %250 = vmatprep.subr.mxu0 0.0
    %251 = vmatpush1.msra.mxu0 0.0
    %252 = vmatprep.subr.mxu0 0.0
    %253 = vmatpush1.msra.mxu0 0.0
    %254 = vmatprep.subr.mxu0 0.0
    %255 = vmatpush1.msra.mxu0 0.0
    %256 = vmatprep.subr.mxu0 0.0
    %257 = vmatpush1.msra.mxu0 0.0
    %258 = vmatprep.subr.mxu0 0.0
    %259 = vmatpush1.msra.mxu0 0.0
    %260 = vmatprep.subr.mxu0 0.0
    %261 = vmatpush1.msra.mxu0 0.0
    %262 = vmatprep.subr.mxu0 0.0
    %263 = vmatpush1.msra.mxu0 0.0
    %264 = vmatprep.subr.mxu0 0.0
    %265 = vmatpush1.msra.mxu0 0.0
    %266 = vmatprep.subr.mxu0 0.0
    %267 = vmatpush1.msra.mxu0 0.0
    %268 = vmatprep.subr.mxu0 0.0
    %269 = vmatpush1.msra.mxu0 0.0
    %270 = vmatprep.subr.mxu0 0.0
    %271 = vmatpush1.msra.mxu0 0.0
    %272 = vmatprep.subr.mxu0 0.0
    %273 = vmatpush1.msra.mxu0 0.0
    %274 = vmatprep.subr.mxu0 0.0
    %275 = vmatpush1.msra.mxu0 0.0
    %276 = vmatprep.subr.mxu0 0.0
    %277 = vmatpush1.msra.mxu0 0.0
    %278 = vmatprep.subr.mxu0 0.0
    %279 = vmatpush1.msra.mxu0 0.0
    %280 = vmatprep.subr.mxu0 0.0
    %281 = vmatpush1.msra.mxu0 0.0
    %282 = vmatprep.mubr.f32.mxu0 0.0
    %283 = vmatmul.mubr.f32.gmra.mrb[0].mxu0 %v132
    %v284 = vpop.f32.mrb[0].mxu0
    %v285 = vadd.f32 %v216, %v284
    %v286 = vpop.f32.mrb[0].mxu0
    %287 = vmatprep.mubr.f32.mxu0 0.0
    %288 = vmatmul.mubr.f32.gmra.mrb[0].mxu0 %v135
    %v289 = vpop.f32.mrb[0].mxu0
    %v290 = vadd.f32 %v216, %v289
    %v291 = vpop.f32.mrb[0].mxu0
    %292 = vdwg.mxu0
    %293 = vst.msk [vmem:[#allocation2] sm:$0xff] %vm130, %v50
    %294 = vst.msk [vmem:[#allocation2 + $0x8] sm:$0xff] %vm130, %v51
    %v295 = vld [vmem:[#allocation2] sm:$0xff]
    %v296 = vld [vmem:[#allocation2 + $0x8] sm:$0xff]
    %298 = vset.pattern.permute.xlu0 0
    %299 = vperm.xlu0 %298, %v122
    %v300 = vpop.permute.xlu0 %299
    %303 = vset.pattern.permute.xlu0 0
    %304 = vperm.xlu0 %303, %v123
    %v305 = vpop.permute.xlu0 %304
    %v307 = vmul.f32 %v300, %v295
    %v308 = vmul.f32 %v305, %v296
    %v309 = vsel %vm130, %v307, 0.0
    %v310 = vrot.slane %v309, 4
    %v311 = vadd.f32 %v309, %v310
    %v312 = vrot.slane %v311, 2
    %v313 = vadd.f32 %v311, %v312
    %v314 = vrot.slane %v313, 1
    %v315 = vadd.f32 %v313, %v314
    %v316 = vsel %vm130, %v308, 0.0
    %v317 = vrot.slane %v316, 4
    %v318 = vadd.f32 %v316, %v317
    %v319 = vrot.slane %v318, 2
    %v320 = vadd.f32 %v318, %v319
    %v321 = vrot.slane %v320, 1
    %v322 = vadd.f32 %v320, %v321
    %v325 = vsel %vm101, %v322, %v315
    %v326 = vsel %vm130, %v325, 0
    %328 = vmatprep.subr.mxu0 0.0
    %329 = vmatpush1.msra.mxu0 %v59
    %330 = vmatprep.subr.mxu0 0.0
    %331 = vmatpush1.msra.mxu0 %v60
    %332 = vmatprep.subr.mxu0 0.0
    %333 = vmatpush1.msra.mxu0 %v61
    %334 = vmatprep.subr.mxu0 0.0
    %335 = vmatpush1.msra.mxu0 %v62
    %336 = vmatprep.subr.mxu0 0.0
    %337 = vmatpush1.msra.mxu0 0.0
    %338 = vmatprep.subr.mxu0 0.0
    %339 = vmatpush1.msra.mxu0 0.0
    %340 = vmatprep.subr.mxu0 0.0
    %341 = vmatpush1.msra.mxu0 0.0
    %342 = vmatprep.subr.mxu0 0.0
    %343 = vmatpush1.msra.mxu0 0.0
    %344 = vmatprep.subr.mxu0 0.0
    %345 = vmatpush1.msra.mxu0 0.0
    %346 = vmatprep.subr.mxu0 0.0
    %347 = vmatpush1.msra.mxu0 0.0
    %348 = vmatprep.subr.mxu0 0.0
    %349 = vmatpush1.msra.mxu0 0.0
    %350 = vmatprep.subr.mxu0 0.0
    %351 = vmatpush1.msra.mxu0 0.0
    %352 = vmatprep.subr.mxu0 0.0
    %353 = vmatpush1.msra.mxu0 0.0
    %354 = vmatprep.subr.mxu0 0.0
    %355 = vmatpush1.msra.mxu0 0.0
    %356 = vmatprep.subr.mxu0 0.0
    %357 = vmatpush1.msra.mxu0 0.0
    %358 = vmatprep.subr.mxu0 0.0
    %359 = vmatpush1.msra.mxu0 0.0
    %360 = vmatprep.subr.mxu0 0.0
    %361 = vmatpush1.msra.mxu0 0.0
    %362 = vmatprep.subr.mxu0 0.0
    %363 = vmatpush1.msra.mxu0 0.0
    %364 = vmatprep.subr.mxu0 0.0
    %365 = vmatpush1.msra.mxu0 0.0
    %366 = vmatprep.subr.mxu0 0.0
    %367 = vmatpush1.msra.mxu0 0.0
    %368 = vmatprep.subr.mxu0 0.0
    %369 = vmatpush1.msra.mxu0 0.0
    %370 = vmatprep.subr.mxu0 0.0
    %371 = vmatpush1.msra.mxu0 0.0
    %372 = vmatprep.subr.mxu0 0.0
    %373 = vmatpush1.msra.mxu0 0.0
    %374 = vmatprep.subr.mxu0 0.0
    %375 = vmatpush1.msra.mxu0 0.0
    %376 = vmatprep.subr.mxu0 0.0
    %377 = vmatpush1.msra.mxu0 0.0
    %378 = vmatprep.subr.mxu0 0.0
    %379 = vmatpush1.msra.mxu0 0.0
    %380 = vmatprep.subr.mxu0 0.0
    %381 = vmatpush1.msra.mxu0 0.0
    %382 = vmatprep.subr.mxu0 0.0
    %383 = vmatpush1.msra.mxu0 0.0
    %384 = vmatprep.subr.mxu0 0.0
    %385 = vmatpush1.msra.mxu0 0.0
    %386 = vmatprep.subr.mxu0 0.0
    %387 = vmatpush1.msra.mxu0 0.0
    %388 = vmatprep.subr.mxu0 0.0
    %389 = vmatpush1.msra.mxu0 0.0
    %390 = vmatprep.subr.mxu0 0.0
    %391 = vmatpush1.msra.mxu0 0.0
    %392 = vmatprep.mubr.f32.mxu0 0.0
    %393 = vmatmul.mubr.f32.gmra.mrb[0].mxu0 %v326
    %v394 = vpop.f32.mrb[0].mxu0
    %v395 = vadd.f32 0.0, %v394
    %v396 = vpop.f32.mrb[0].mxu0
    %397 = vdwg.mxu0
    %v399 = vrot.slane %v395, 1
    %v402 = vadd.f32 %v204, %v395
    %v403 = vadd.f32 %v209, %v399
    %v405 = vlaneseq
    %v406 = vshrl.u32 %v405, 7
    %v407 = vsub.s32 0, %v406
    %v408 = vrot.slane %v63, %v407
    %v410 = vadd.f32 %v402, %v408
    %v411 = vadd.f32 %v403, %v408
    %v412 = vxor.u32 %v410, 2147483648
    %v413 = vxor.u32 %v411, 2147483648
    %v414 = vmul.f32 %v412, 1.442695
    %v415 = vpow.pop %v414
    %v416 = vmul.f32 %v413, 1.442695
    %v417 = vpow.pop %v416
    %v418 = vadd.f32 %v415, 1.0
    %v419 = vadd.f32 %v417, 1.0
    %v420 = vrcp.pop %v418
    %v421 = vmul.f32 1.0, %v420
    %v422 = vrcp.pop %v419
    %v423 = vmul.f32 1.0, %v422
    %v424 = vmul.f32 %v315, %v421
    %v425 = vmul.f32 %v322, %v423
    %v428 = vrot.slane %v425, 7
    %v429 = vsel %vm101, %v428, %v424
    %v430 = vsel %vm130, %v429, 0
    %432 = vmatprep.subr.mxu0 0.0
    %433 = vmatpush1.msra.mxu0 %v69
    %434 = vmatprep.subr.mxu0 0.0
    %435 = vmatpush1.msra.mxu0 %v70
    %436 = vmatprep.subr.mxu0 0.0
    %437 = vmatpush1.msra.mxu0 %v71
    %438 = vmatprep.subr.mxu0 0.0
    %439 = vmatpush1.msra.mxu0 %v72
    %440 = vmatprep.subr.mxu0 0.0
    %441 = vmatpush1.msra.mxu0 0.0
    %442 = vmatprep.subr.mxu0 0.0
    %443 = vmatpush1.msra.mxu0 0.0
    %444 = vmatprep.subr.mxu0 0.0
    %445 = vmatpush1.msra.mxu0 0.0
    %446 = vmatprep.subr.mxu0 0.0
    %447 = vmatpush1.msra.mxu0 0.0
    %448 = vmatprep.subr.mxu0 0.0
    %449 = vmatpush1.msra.mxu0 0.0
    %450 = vmatprep.subr.mxu0 0.0
    %451 = vmatpush1.msra.mxu0 0.0
    %452 = vmatprep.subr.mxu0 0.0
    %453 = vmatpush1.msra.mxu0 0.0
    %454 = vmatprep.subr.mxu0 0.0
    %455 = vmatpush1.msra.mxu0 0.0
    %456 = vmatprep.subr.mxu0 0.0
    %457 = vmatpush1.msra.mxu0 0.0
    %458 = vmatprep.subr.mxu0 0.0
    %459 = vmatpush1.msra.mxu0 0.0
    %460 = vmatprep.subr.mxu0 0.0
    %461 = vmatpush1.msra.mxu0 0.0
    %462 = vmatprep.subr.mxu0 0.0
    %463 = vmatpush1.msra.mxu0 0.0
    %464 = vmatprep.subr.mxu0 0.0
    %465 = vmatpush1.msra.mxu0 0.0
    %466 = vmatprep.subr.mxu0 0.0
    %467 = vmatpush1.msra.mxu0 0.0
    %468 = vmatprep.subr.mxu0 0.0
    %469 = vmatpush1.msra.mxu0 0.0
    %470 = vmatprep.subr.mxu0 0.0
    %471 = vmatpush1.msra.mxu0 0.0
    %472 = vmatprep.subr.mxu0 0.0
    %473 = vmatpush1.msra.mxu0 0.0
    %474 = vmatprep.subr.mxu0 0.0
    %475 = vmatpush1.msra.mxu0 0.0
    %476 = vmatprep.subr.mxu0 0.0
    %477 = vmatpush1.msra.mxu0 0.0
    %478 = vmatprep.subr.mxu0 0.0
    %479 = vmatpush1.msra.mxu0 0.0
    %480 = vmatprep.subr.mxu0 0.0
    %481 = vmatpush1.msra.mxu0 0.0
    %482 = vmatprep.subr.mxu0 0.0
    %483 = vmatpush1.msra.mxu0 0.0
    %484 = vmatprep.subr.mxu0 0.0
    %485 = vmatpush1.msra.mxu0 0.0
    %486 = vmatprep.subr.mxu0 0.0
    %487 = vmatpush1.msra.mxu0 0.0
    %488 = vmatprep.subr.mxu0 0.0
    %489 = vmatpush1.msra.mxu0 0.0
    %490 = vmatprep.subr.mxu0 0.0
    %491 = vmatpush1.msra.mxu0 0.0
    %492 = vmatprep.subr.mxu0 0.0
    %493 = vmatpush1.msra.mxu0 0.0
    %494 = vmatprep.subr.mxu0 0.0
    %495 = vmatpush1.msra.mxu0 0.0
    %496 = vmatprep.mubr.f32.mxu0 0.0
    %497 = vmatmul.mubr.f32.gmra.mrb[0].mxu0 %v430
    %v498 = vpop.f32.mrb[0].mxu0
    %v499 = vadd.f32 0.0, %v498
    %v500 = vpop.f32.mrb[0].mxu0
    %501 = vdwg.mxu0
    %v503 = vrot.slane %v499, 1
    %v506 = vadd.f32 %v285, %v499
    %v507 = vadd.f32 %v290, %v503
    %v509 = vlaneseq
    %v510 = vshrl.u32 %v509, 7
    %v511 = vsub.s32 0, %v510
    %v512 = vrot.slane %v73, %v511
    %v514 = vadd.f32 %v506, %v512
    %v515 = vadd.f32 %v507, %v512
    %v516 = vtanh.pop %v514
    %v517 = vtanh.pop %v515
    %518 = vrot.lane.b32.xlu0 %v315, 32
    %v519 = vpop.permute.xlu0 %518
    %520 = vrot.lane.b32.xlu0 %v322, 32
    %v521 = vpop.permute.xlu0 %520
    %v524 = vmul.f32 %v421, %v519
    %v525 = vmul.f32 %v423, %v521
    %v526 = vsub.f32 1.0, %v421
    %v527 = vsub.f32 1.0, %v423
    %530 = vrot.lane.b32.xlu0 %v516, 32
    %v531 = vpop.permute.xlu0 %530
    %532 = vrot.lane.b32.xlu0 %v517, 32
    %v533 = vpop.permute.xlu0 %532
    %v536 = vmul.f32 %v526, %v531
    %v537 = vmul.f32 %v527, %v533
    %v538 = vadd.f32 %v524, %v536
    %v539 = vadd.f32 %v525, %v537
    %542 = vrot.lane.b32.xlu0 %v538, 96
    %v543 = vpop.permute.xlu0 %542
    %544 = vrot.lane.b32.xlu0 %v539, 96
    %v545 = vpop.permute.xlu0 %544
    %vm548 = vcmask 253952
    %549 = vst.msk [vmem:[#allocation2] sm:$0x1] %vm548, %v543
    %550 = vst.msk [vmem:[#allocation2 + $0x8] sm:$0x1] %vm548, %v545
    %v551 = vld [vmem:[#allocation2] sm:$0xff]
    %v552 = vld [vmem:[#allocation2 + $0x8] sm:$0xff]
    %553 = vset.pattern.permute.xlu0 1
    %554 = vperm.xlu0 %553, %v122
    %v555 = vpop.permute.xlu0 %554
    %557 = vset.pattern.permute.xlu0 1
    %558 = vperm.xlu0 %557, %v123
    %v559 = vpop.permute.xlu0 %558
    %v561 = vmul.f32 %v555, %v551
    %v562 = vmul.f32 %v559, %v552
    %v563 = vsel %vm130, %v561, 0.0
    %v564 = vrot.slane %v563, 4
    %v565 = vadd.f32 %v563, %v564
    %v566 = vrot.slane %v565, 2
    %v567 = vadd.f32 %v565, %v566
    %v568 = vrot.slane %v567, 1
    %v569 = vadd.f32 %v567, %v568
    %v570 = vsel %vm130, %v562, 0.0
    %v571 = vrot.slane %v570, 4
    %v572 = vadd.f32 %v570, %v571
    %v573 = vrot.slane %v572, 2
    %v574 = vadd.f32 %v572, %v573
    %v575 = vrot.slane %v574, 1
    %v576 = vadd.f32 %v574, %v575
    %v579 = vsel %vm101, %v576, %v569
    %v580 = vsel %vm130, %v579, 0
    %582 = vmatprep.subr.mxu0 0.0
    %583 = vmatpush1.msra.mxu0 %v59
    %584 = vmatprep.subr.mxu0 0.0
    %585 = vmatpush1.msra.mxu0 %v60
    %586 = vmatprep.subr.mxu0 0.0
    %587 = vmatpush1.msra.mxu0 %v61
    %588 = vmatprep.subr.mxu0 0.0
    %589 = vmatpush1.msra.mxu0 %v62
    %590 = vmatprep.subr.mxu0 0.0
    %591 = vmatpush1.msra.mxu0 0.0
    %592 = vmatprep.subr.mxu0 0.0
    %593 = vmatpush1.msra.mxu0 0.0
    %594 = vmatprep.subr.mxu0 0.0
    %595 = vmatpush1.msra.mxu0 0.0
    %596 = vmatprep.subr.mxu0 0.0
    %597 = vmatpush1.msra.mxu0 0.0
    %598 = vmatprep.subr.mxu0 0.0
    %599 = vmatpush1.msra.mxu0 0.0
    %600 = vmatprep.subr.mxu0 0.0
    %601 = vmatpush1.msra.mxu0 0.0
    %602 = vmatprep.subr.mxu0 0.0
    %603 = vmatpush1.msra.mxu0 0.0
    %604 = vmatprep.subr.mxu0 0.0
    %605 = vmatpush1.msra.mxu0 0.0
    %606 = vmatprep.subr.mxu0 0.0
    %607 = vmatpush1.msra.mxu0 0.0
    %608 = vmatprep.subr.mxu0 0.0
    %609 = vmatpush1.msra.mxu0 0.0
    %610 = vmatprep.subr.mxu0 0.0
    %611 = vmatpush1.msra.mxu0 0.0
    %612 = vmatprep.subr.mxu0 0.0
    %613 = vmatpush1.msra.mxu0 0.0
    %614 = vmatprep.subr.mxu0 0.0
    %615 = vmatpush1.msra.mxu0 0.0
    %616 = vmatprep.subr.mxu0 0.0
    %617 = vmatpush1.msra.mxu0 0.0
    %618 = vmatprep.subr.mxu0 0.0
    %619 = vmatpush1.msra.mxu0 0.0
    %620 = vmatprep.subr.mxu0 0.0
    %621 = vmatpush1.msra.mxu0 0.0
    %622 = vmatprep.subr.mxu0 0.0
    %623 = vmatpush1.msra.mxu0 0.0
    %624 = vmatprep.subr.mxu0 0.0
    %625 = vmatpush1.msra.mxu0 0.0
    %626 = vmatprep.subr.mxu0 0.0
    %627 = vmatpush1.msra.mxu0 0.0
    %628 = vmatprep.subr.mxu0 0.0
    %629 = vmatpush1.msra.mxu0 0.0
    %630 = vmatprep.subr.mxu0 0.0
    %631 = vmatpush1.msra.mxu0 0.0
    %632 = vmatprep.subr.mxu0 0.0
    %633 = vmatpush1.msra.mxu0 0.0
    %634 = vmatprep.subr.mxu0 0.0
    %635 = vmatpush1.msra.mxu0 0.0
    %636 = vmatprep.subr.mxu0 0.0
    %637 = vmatpush1.msra.mxu0 0.0
    %638 = vmatprep.subr.mxu0 0.0
    %639 = vmatpush1.msra.mxu0 0.0
    %640 = vmatprep.subr.mxu0 0.0
    %641 = vmatpush1.msra.mxu0 0.0
    %642 = vmatprep.subr.mxu0 0.0
    %643 = vmatpush1.msra.mxu0 0.0
    %644 = vmatprep.subr.mxu0 0.0
    %645 = vmatpush1.msra.mxu0 0.0
    %646 = vmatprep.mubr.f32.mxu0 0.0
    %647 = vmatmul.mubr.f32.gmra.mrb[0].mxu0 %v580
    %v648 = vpop.f32.mrb[0].mxu0
    %v649 = vadd.f32 0.0, %v648
    %v650 = vpop.f32.mrb[0].mxu0
    %651 = vdwg.mxu0
    %v653 = vrot.slane %v649, 7
    %v656 = vadd.f32 %v204, %v653
    %v657 = vadd.f32 %v209, %v649
    %v658 = vadd.f32 %v656, %v408
    %v659 = vadd.f32 %v657, %v408
    %v660 = vxor.u32 %v658, 2147483648
    %v661 = vxor.u32 %v659, 2147483648
    %v662 = vmul.f32 %v660, 1.442695
    %v663 = vpow.pop %v662
    %v664 = vmul.f32 %v661, 1.442695
    %v665 = vpow.pop %v664
    %v666 = vadd.f32 %v663, 1.0
    %v667 = vadd.f32 %v665, 1.0
    %v668 = vrcp.pop %v666
    %v669 = vmul.f32 1.0, %v668
    %v670 = vrcp.pop %v667
    %v671 = vmul.f32 1.0, %v670
    %v672 = vmul.f32 %v569, %v669
    %v673 = vmul.f32 %v576, %v671
    %v676 = vrot.slane %v672, 1
    %v677 = vsel %vm101, %v673, %v676
    %v678 = vsel %vm130, %v677, 0
    %680 = vmatprep.subr.mxu0 0.0
    %681 = vmatpush1.msra.mxu0 %v69
    %682 = vmatprep.subr.mxu0 0.0
    %683 = vmatpush1.msra.mxu0 %v70
    %684 = vmatprep.subr.mxu0 0.0
    %685 = vmatpush1.msra.mxu0 %v71
    %686 = vmatprep.subr.mxu0 0.0
    %687 = vmatpush1.msra.mxu0 %v72
    %688 = vmatprep.subr.mxu0 0.0
    %689 = vmatpush1.msra.mxu0 0.0
    %690 = vmatprep.subr.mxu0 0.0
    %691 = vmatpush1.msra.mxu0 0.0
    %692 = vmatprep.subr.mxu0 0.0
    %693 = vmatpush1.msra.mxu0 0.0
    %694 = vmatprep.subr.mxu0 0.0
    %695 = vmatpush1.msra.mxu0 0.0
    %696 = vmatprep.subr.mxu0 0.0
    %697 = vmatpush1.msra.mxu0 0.0
    %698 = vmatprep.subr.mxu0 0.0
    %699 = vmatpush1.msra.mxu0 0.0
    %700 = vmatprep.subr.mxu0 0.0
    %701 = vmatpush1.msra.mxu0 0.0
    %702 = vmatprep.subr.mxu0 0.0
    %703 = vmatpush1.msra.mxu0 0.0
    %704 = vmatprep.subr.mxu0 0.0
    %705 = vmatpush1.msra.mxu0 0.0
    %706 = vmatprep.subr.mxu0 0.0
    %707 = vmatpush1.msra.mxu0 0.0
    %708 = vmatprep.subr.mxu0 0.0
    %709 = vmatpush1.msra.mxu0 0.0
    %710 = vmatprep.subr.mxu0 0.0
    %711 = vmatpush1.msra.mxu0 0.0
    %712 = vmatprep.subr.mxu0 0.0
    %713 = vmatpush1.msra.mxu0 0.0
    %714 = vmatprep.subr.mxu0 0.0
    %715 = vmatpush1.msra.mxu0 0.0
    %716 = vmatprep.subr.mxu0 0.0
    %717 = vmatpush1.msra.mxu0 0.0
    %718 = vmatprep.subr.mxu0 0.0
    %719 = vmatpush1.msra.mxu0 0.0
    %720 = vmatprep.subr.mxu0 0.0
    %721 = vmatpush1.msra.mxu0 0.0
    %722 = vmatprep.subr.mxu0 0.0
    %723 = vmatpush1.msra.mxu0 0.0
    %724 = vmatprep.subr.mxu0 0.0
    %725 = vmatpush1.msra.mxu0 0.0
    %726 = vmatprep.subr.mxu0 0.0
    %727 = vmatpush1.msra.mxu0 0.0
    %728 = vmatprep.subr.mxu0 0.0
    %729 = vmatpush1.msra.mxu0 0.0
    %730 = vmatprep.subr.mxu0 0.0
    %731 = vmatpush1.msra.mxu0 0.0
    %732 = vmatprep.subr.mxu0 0.0
    %733 = vmatpush1.msra.mxu0 0.0
    %734 = vmatprep.subr.mxu0 0.0
    %735 = vmatpush1.msra.mxu0 0.0
    %736 = vmatprep.subr.mxu0 0.0
    %737 = vmatpush1.msra.mxu0 0.0
    %738 = vmatprep.subr.mxu0 0.0
    %739 = vmatpush1.msra.mxu0 0.0
    %740 = vmatprep.subr.mxu0 0.0
    %741 = vmatpush1.msra.mxu0 0.0
    %742 = vmatprep.subr.mxu0 0.0
    %743 = vmatpush1.msra.mxu0 0.0
    %744 = vmatprep.mubr.f32.mxu0 0.0
    %745 = vmatmul.mubr.f32.gmra.mrb[0].mxu0 %v678
    %v746 = vpop.f32.mrb[0].mxu0
    %v747 = vadd.f32 0.0, %v746
    %v748 = vpop.f32.mrb[0].mxu0
    %749 = vdwg.mxu0
    %v751 = vrot.slane %v747, 7
    %v754 = vadd.f32 %v285, %v751
    %v755 = vadd.f32 %v290, %v747
    %v756 = vadd.f32 %v754, %v512
    %v757 = vadd.f32 %v755, %v512
    %v758 = vtanh.pop %v756
    %v759 = vtanh.pop %v757
    %760 = vrot.lane.b32.xlu0 %v569, 32
    %v761 = vpop.permute.xlu0 %760
    %762 = vrot.lane.b32.xlu0 %v576, 32
    %v763 = vpop.permute.xlu0 %762
    %v766 = vmul.f32 %v669, %v761
    %v767 = vmul.f32 %v671, %v763
    %v768 = vsub.f32 1.0, %v669
    %v769 = vsub.f32 1.0, %v671
    %772 = vrot.lane.b32.xlu0 %v758, 32
    %v773 = vpop.permute.xlu0 %772
    %774 = vrot.lane.b32.xlu0 %v759, 32
    %v775 = vpop.permute.xlu0 %774
    %v778 = vmul.f32 %v768, %v773
    %v779 = vmul.f32 %v769, %v775
    %v780 = vadd.f32 %v766, %v778
    %v781 = vadd.f32 %v767, %v779
    %784 = vrot.lane.b32.xlu0 %v780, 96
    %v785 = vpop.permute.xlu0 %784
    %786 = vrot.lane.b32.xlu0 %v781, 96
    %v787 = vpop.permute.xlu0 %786
    %vm790 = vcmask 254977
    %791 = vst.msk [vmem:[#allocation2] sm:$0x2] %vm790, %v785
    %792 = vst.msk [vmem:[#allocation2 + $0x8] sm:$0x2] %vm790, %v787
    %v793 = vld [vmem:[#allocation2] sm:$0xff]
    %v794 = vld [vmem:[#allocation2 + $0x8] sm:$0xff]
    %795 = vset.pattern.permute.xlu0 2
    %796 = vperm.xlu0 %795, %v122
    %v797 = vpop.permute.xlu0 %796
    %799 = vset.pattern.permute.xlu0 2
    %800 = vperm.xlu0 %799, %v123
    %v801 = vpop.permute.xlu0 %800
    %v803 = vmul.f32 %v797, %v793
    %v804 = vmul.f32 %v801, %v794
    %v805 = vsel %vm130, %v803, 0.0
    %v806 = vrot.slane %v805, 4
    %v807 = vadd.f32 %v805, %v806
    %v808 = vrot.slane %v807, 2
    %v809 = vadd.f32 %v807, %v808
    %v810 = vrot.slane %v809, 1
    %v811 = vadd.f32 %v809, %v810
    %v812 = vsel %vm130, %v804, 0.0
    %v813 = vrot.slane %v812, 4
    %v814 = vadd.f32 %v812, %v813
    %v815 = vrot.slane %v814, 2
    %v816 = vadd.f32 %v814, %v815
    %v817 = vrot.slane %v816, 1
    %v818 = vadd.f32 %v816, %v817
    %v821 = vsel %vm101, %v818, %v811
    %v822 = vsel %vm130, %v821, 0
    %824 = vmatprep.subr.mxu0 0.0
    %825 = vmatpush1.msra.mxu0 %v59
    %826 = vmatprep.subr.mxu0 0.0
    %827 = vmatpush1.msra.mxu0 %v60
    %828 = vmatprep.subr.mxu0 0.0
    %829 = vmatpush1.msra.mxu0 %v61
    %830 = vmatprep.subr.mxu0 0.0
    %831 = vmatpush1.msra.mxu0 %v62
    %832 = vmatprep.subr.mxu0 0.0
    %833 = vmatpush1.msra.mxu0 0.0
    %834 = vmatprep.subr.mxu0 0.0
    %835 = vmatpush1.msra.mxu0 0.0
    %836 = vmatprep.subr.mxu0 0.0
    %837 = vmatpush1.msra.mxu0 0.0
    %838 = vmatprep.subr.mxu0 0.0
    %839 = vmatpush1.msra.mxu0 0.0
    %840 = vmatprep.subr.mxu0 0.0
    %841 = vmatpush1.msra.mxu0 0.0
    %842 = vmatprep.subr.mxu0 0.0
    %843 = vmatpush1.msra.mxu0 0.0
    %844 = vmatprep.subr.mxu0 0.0
    %845 = vmatpush1.msra.mxu0 0.0
    %846 = vmatprep.subr.mxu0 0.0
    %847 = vmatpush1.msra.mxu0 0.0
    %848 = vmatprep.subr.mxu0 0.0
    %849 = vmatpush1.msra.mxu0 0.0
    %850 = vmatprep.subr.mxu0 0.0
    %851 = vmatpush1.msra.mxu0 0.0
    %852 = vmatprep.subr.mxu0 0.0
    %853 = vmatpush1.msra.mxu0 0.0
    %854 = vmatprep.subr.mxu0 0.0
    %855 = vmatpush1.msra.mxu0 0.0
    %856 = vmatprep.subr.mxu0 0.0
    %857 = vmatpush1.msra.mxu0 0.0
    %858 = vmatprep.subr.mxu0 0.0
    %859 = vmatpush1.msra.mxu0 0.0
    %860 = vmatprep.subr.mxu0 0.0
    %861 = vmatpush1.msra.mxu0 0.0
    %862 = vmatprep.subr.mxu0 0.0
    %863 = vmatpush1.msra.mxu0 0.0
    %864 = vmatprep.subr.mxu0 0.0
    %865 = vmatpush1.msra.mxu0 0.0
    %866 = vmatprep.subr.mxu0 0.0
    %867 = vmatpush1.msra.mxu0 0.0
    %868 = vmatprep.subr.mxu0 0.0
    %869 = vmatpush1.msra.mxu0 0.0
    %870 = vmatprep.subr.mxu0 0.0
    %871 = vmatpush1.msra.mxu0 0.0
    %872 = vmatprep.subr.mxu0 0.0
    %873 = vmatpush1.msra.mxu0 0.0
    %874 = vmatprep.subr.mxu0 0.0
    %875 = vmatpush1.msra.mxu0 0.0
    %876 = vmatprep.subr.mxu0 0.0
    %877 = vmatpush1.msra.mxu0 0.0
    %878 = vmatprep.subr.mxu0 0.0
    %879 = vmatpush1.msra.mxu0 0.0
    %880 = vmatprep.subr.mxu0 0.0
    %881 = vmatpush1.msra.mxu0 0.0
    %882 = vmatprep.subr.mxu0 0.0
    %883 = vmatpush1.msra.mxu0 0.0
    %884 = vmatprep.subr.mxu0 0.0
    %885 = vmatpush1.msra.mxu0 0.0
    %886 = vmatprep.subr.mxu0 0.0
    %887 = vmatpush1.msra.mxu0 0.0
    %888 = vmatprep.mubr.f32.mxu0 0.0
    %889 = vmatmul.mubr.f32.gmra.mrb[0].mxu0 %v822
    %v890 = vpop.f32.mrb[0].mxu0
    %v891 = vadd.f32 0.0, %v890
    %v892 = vpop.f32.mrb[0].mxu0
    %893 = vdwg.mxu0
    %v895 = vrot.slane %v891, 6
    %v896 = vrot.slane %v891, 7
    %v899 = vadd.f32 %v204, %v895
    %v900 = vadd.f32 %v209, %v896
    %v901 = vadd.f32 %v899, %v408
    %v902 = vadd.f32 %v900, %v408
    %v903 = vxor.u32 %v901, 2147483648
    %v904 = vxor.u32 %v902, 2147483648
    %v905 = vmul.f32 %v903, 1.442695
    %v906 = vpow.pop %v905
    %v907 = vmul.f32 %v904, 1.442695
    %v908 = vpow.pop %v907
    %v909 = vadd.f32 %v906, 1.0
    %v910 = vadd.f32 %v908, 1.0
    %v911 = vrcp.pop %v909
    %v912 = vmul.f32 1.0, %v911
    %v913 = vrcp.pop %v910
    %v914 = vmul.f32 1.0, %v913
    %v915 = vmul.f32 %v811, %v912
    %v916 = vmul.f32 %v818, %v914
    %v919 = vrot.slane %v915, 2
    %v920 = vrot.slane %v916, 1
    %v921 = vsel %vm101, %v920, %v919
    %v922 = vsel %vm130, %v921, 0
    %924 = vmatprep.subr.mxu0 0.0
    %925 = vmatpush1.msra.mxu0 %v69
    %926 = vmatprep.subr.mxu0 0.0
    %927 = vmatpush1.msra.mxu0 %v70
    %928 = vmatprep.subr.mxu0 0.0
    %929 = vmatpush1.msra.mxu0 %v71
    %930 = vmatprep.subr.mxu0 0.0
    %931 = vmatpush1.msra.mxu0 %v72
    %932 = vmatprep.subr.mxu0 0.0
    %933 = vmatpush1.msra.mxu0 0.0
    %934 = vmatprep.subr.mxu0 0.0
    %935 = vmatpush1.msra.mxu0 0.0
    %936 = vmatprep.subr.mxu0 0.0
    %937 = vmatpush1.msra.mxu0 0.0
    %938 = vmatprep.subr.mxu0 0.0
    %939 = vmatpush1.msra.mxu0 0.0
    %940 = vmatprep.subr.mxu0 0.0
    %941 = vmatpush1.msra.mxu0 0.0
    %942 = vmatprep.subr.mxu0 0.0
    %943 = vmatpush1.msra.mxu0 0.0
    %944 = vmatprep.subr.mxu0 0.0
    %945 = vmatpush1.msra.mxu0 0.0
    %946 = vmatprep.subr.mxu0 0.0
    %947 = vmatpush1.msra.mxu0 0.0
    %948 = vmatprep.subr.mxu0 0.0
    %949 = vmatpush1.msra.mxu0 0.0
    %950 = vmatprep.subr.mxu0 0.0
    %951 = vmatpush1.msra.mxu0 0.0
    %952 = vmatprep.subr.mxu0 0.0
    %953 = vmatpush1.msra.mxu0 0.0
    %954 = vmatprep.subr.mxu0 0.0
    %955 = vmatpush1.msra.mxu0 0.0
    %956 = vmatprep.subr.mxu0 0.0
    %957 = vmatpush1.msra.mxu0 0.0
    %958 = vmatprep.subr.mxu0 0.0
    %959 = vmatpush1.msra.mxu0 0.0
    %960 = vmatprep.subr.mxu0 0.0
    %961 = vmatpush1.msra.mxu0 0.0
    %962 = vmatprep.subr.mxu0 0.0
    %963 = vmatpush1.msra.mxu0 0.0
    %964 = vmatprep.subr.mxu0 0.0
    %965 = vmatpush1.msra.mxu0 0.0
    %966 = vmatprep.subr.mxu0 0.0
    %967 = vmatpush1.msra.mxu0 0.0
    %968 = vmatprep.subr.mxu0 0.0
    %969 = vmatpush1.msra.mxu0 0.0
    %970 = vmatprep.subr.mxu0 0.0
    %971 = vmatpush1.msra.mxu0 0.0
    %972 = vmatprep.subr.mxu0 0.0
    %973 = vmatpush1.msra.mxu0 0.0
    %974 = vmatprep.subr.mxu0 0.0
    %975 = vmatpush1.msra.mxu0 0.0
    %976 = vmatprep.subr.mxu0 0.0
    %977 = vmatpush1.msra.mxu0 0.0
    %978 = vmatprep.subr.mxu0 0.0
    %979 = vmatpush1.msra.mxu0 0.0
    %980 = vmatprep.subr.mxu0 0.0
    %981 = vmatpush1.msra.mxu0 0.0
    %982 = vmatprep.subr.mxu0 0.0
    %983 = vmatpush1.msra.mxu0 0.0
    %984 = vmatprep.subr.mxu0 0.0
    %985 = vmatpush1.msra.mxu0 0.0
    %986 = vmatprep.subr.mxu0 0.0
    %987 = vmatpush1.msra.mxu0 0.0
    %988 = vmatprep.mubr.f32.mxu0 0.0
    %989 = vmatmul.mubr.f32.gmra.mrb[0].mxu0 %v922
    %v990 = vpop.f32.mrb[0].mxu0
    %v991 = vadd.f32 0.0, %v990
    %v992 = vpop.f32.mrb[0].mxu0
    %993 = vdwg.mxu0
    %v995 = vrot.slane %v991, 6
    %v996 = vrot.slane %v991, 7
    %v999 = vadd.f32 %v285, %v995
    %v1000 = vadd.f32 %v290, %v996
    %v1001 = vadd.f32 %v999, %v512
    %v1002 = vadd.f32 %v1000, %v512
    %v1003 = vtanh.pop %v1001
    %v1004 = vtanh.pop %v1002
    %1005 = vrot.lane.b32.xlu0 %v811, 32
    %v1006 = vpop.permute.xlu0 %1005
    %1007 = vrot.lane.b32.xlu0 %v818, 32
    %v1008 = vpop.permute.xlu0 %1007
    %v1011 = vmul.f32 %v912, %v1006
    %v1012 = vmul.f32 %v914, %v1008
    %v1013 = vsub.f32 1.0, %v912
    %v1014 = vsub.f32 1.0, %v914
    %1017 = vrot.lane.b32.xlu0 %v1003, 32
    %v1018 = vpop.permute.xlu0 %1017
    %1019 = vrot.lane.b32.xlu0 %v1004, 32
    %v1020 = vpop.permute.xlu0 %1019
    %v1023 = vmul.f32 %v1013, %v1018
    %v1024 = vmul.f32 %v1014, %v1020
    %v1025 = vadd.f32 %v1011, %v1023
    %v1026 = vadd.f32 %v1012, %v1024
    %1029 = vrot.lane.b32.xlu0 %v1025, 96
    %v1030 = vpop.permute.xlu0 %1029
    %1031 = vrot.lane.b32.xlu0 %v1026, 96
    %v1032 = vpop.permute.xlu0 %1031
    %vm1035 = vcmask 256002
    %1036 = vst.msk [vmem:[#allocation2] sm:$0x4] %vm1035, %v1030
    %1037 = vst.msk [vmem:[#allocation2 + $0x8] sm:$0x4] %vm1035, %v1032
    %v1038 = vld [vmem:[#allocation2] sm:$0xff]
    %v1039 = vld [vmem:[#allocation2 + $0x8] sm:$0xff]
    %1040 = vset.pattern.permute.xlu0 3
    %1041 = vperm.xlu0 %1040, %v122
    %v1042 = vpop.permute.xlu0 %1041
    %1044 = vset.pattern.permute.xlu0 3
    %1045 = vperm.xlu0 %1044, %v123
    %v1046 = vpop.permute.xlu0 %1045
    %v1048 = vmul.f32 %v1042, %v1038
    %v1049 = vmul.f32 %v1046, %v1039
    %v1050 = vsel %vm130, %v1048, 0.0
    %v1051 = vrot.slane %v1050, 4
    %v1052 = vadd.f32 %v1050, %v1051
    %v1053 = vrot.slane %v1052, 2
    %v1054 = vadd.f32 %v1052, %v1053
    %v1055 = vrot.slane %v1054, 1
    %v1056 = vadd.f32 %v1054, %v1055
    %v1057 = vsel %vm130, %v1049, 0.0
    %v1058 = vrot.slane %v1057, 4
    %v1059 = vadd.f32 %v1057, %v1058
    %v1060 = vrot.slane %v1059, 2
    %v1061 = vadd.f32 %v1059, %v1060
    %v1062 = vrot.slane %v1061, 1
    %v1063 = vadd.f32 %v1061, %v1062
    %v1066 = vsel %vm101, %v1063, %v1056
    %v1067 = vsel %vm130, %v1066, 0
    %1069 = vmatprep.subr.mxu0 0.0
    %1070 = vmatpush1.msra.mxu0 %v59
    %1071 = vmatprep.subr.mxu0 0.0
    %1072 = vmatpush1.msra.mxu0 %v60
    %1073 = vmatprep.subr.mxu0 0.0
    %1074 = vmatpush1.msra.mxu0 %v61
    %1075 = vmatprep.subr.mxu0 0.0
    %1076 = vmatpush1.msra.mxu0 %v62
    %1077 = vmatprep.subr.mxu0 0.0
    %1078 = vmatpush1.msra.mxu0 0.0
    %1079 = vmatprep.subr.mxu0 0.0
    %1080 = vmatpush1.msra.mxu0 0.0
    %1081 = vmatprep.subr.mxu0 0.0
    %1082 = vmatpush1.msra.mxu0 0.0
    %1083 = vmatprep.subr.mxu0 0.0
    %1084 = vmatpush1.msra.mxu0 0.0
    %1085 = vmatprep.subr.mxu0 0.0
    %1086 = vmatpush1.msra.mxu0 0.0
    %1087 = vmatprep.subr.mxu0 0.0
    %1088 = vmatpush1.msra.mxu0 0.0
    %1089 = vmatprep.subr.mxu0 0.0
    %1090 = vmatpush1.msra.mxu0 0.0
    %1091 = vmatprep.subr.mxu0 0.0
    %1092 = vmatpush1.msra.mxu0 0.0
    %1093 = vmatprep.subr.mxu0 0.0
    %1094 = vmatpush1.msra.mxu0 0.0
    %1095 = vmatprep.subr.mxu0 0.0
    %1096 = vmatpush1.msra.mxu0 0.0
    %1097 = vmatprep.subr.mxu0 0.0
    %1098 = vmatpush1.msra.mxu0 0.0
    %1099 = vmatprep.subr.mxu0 0.0
    %1100 = vmatpush1.msra.mxu0 0.0
    %1101 = vmatprep.subr.mxu0 0.0
    %1102 = vmatpush1.msra.mxu0 0.0
    %1103 = vmatprep.subr.mxu0 0.0
    %1104 = vmatpush1.msra.mxu0 0.0
    %1105 = vmatprep.subr.mxu0 0.0
    %1106 = vmatpush1.msra.mxu0 0.0
    %1107 = vmatprep.subr.mxu0 0.0
    %1108 = vmatpush1.msra.mxu0 0.0
    %1109 = vmatprep.subr.mxu0 0.0
    %1110 = vmatpush1.msra.mxu0 0.0
    %1111 = vmatprep.subr.mxu0 0.0
    %1112 = vmatpush1.msra.mxu0 0.0
    %1113 = vmatprep.subr.mxu0 0.0
    %1114 = vmatpush1.msra.mxu0 0.0
    %1115 = vmatprep.subr.mxu0 0.0
    %1116 = vmatpush1.msra.mxu0 0.0
    %1117 = vmatprep.subr.mxu0 0.0
    %1118 = vmatpush1.msra.mxu0 0.0
    %1119 = vmatprep.subr.mxu0 0.0
    %1120 = vmatpush1.msra.mxu0 0.0
    %1121 = vmatprep.subr.mxu0 0.0
    %1122 = vmatpush1.msra.mxu0 0.0
    %1123 = vmatprep.subr.mxu0 0.0
    %1124 = vmatpush1.msra.mxu0 0.0
    %1125 = vmatprep.subr.mxu0 0.0
    %1126 = vmatpush1.msra.mxu0 0.0
    %1127 = vmatprep.subr.mxu0 0.0
    %1128 = vmatpush1.msra.mxu0 0.0
    %1129 = vmatprep.subr.mxu0 0.0
    %1130 = vmatpush1.msra.mxu0 0.0
    %1131 = vmatprep.subr.mxu0 0.0
    %1132 = vmatpush1.msra.mxu0 0.0
    %1133 = vmatprep.mubr.f32.mxu0 0.0
    %1134 = vmatmul.mubr.f32.gmra.mrb[0].mxu0 %v1067
    %v1135 = vpop.f32.mrb[0].mxu0
    %v1136 = vadd.f32 0.0, %v1135
    %v1137 = vpop.f32.mrb[0].mxu0
    %1138 = vdwg.mxu0
    %v1140 = vrot.slane %v1136, 5
    %v1141 = vrot.slane %v1136, 6
    %v1144 = vadd.f32 %v204, %v1140
    %v1145 = vadd.f32 %v209, %v1141
    %v1146 = vadd.f32 %v1144, %v408
    %v1147 = vadd.f32 %v1145, %v408
    %v1148 = vxor.u32 %v1146, 2147483648
    %v1149 = vxor.u32 %v1147, 2147483648
    %v1150 = vmul.f32 %v1148, 1.442695
    %v1151 = vpow.pop %v1150
    %v1152 = vmul.f32 %v1149, 1.442695
    %v1153 = vpow.pop %v1152
    %v1154 = vadd.f32 %v1151, 1.0
    %v1155 = vadd.f32 %v1153, 1.0
    %v1156 = vrcp.pop %v1154
    %v1157 = vmul.f32 1.0, %v1156
    %v1158 = vrcp.pop %v1155
    %v1159 = vmul.f32 1.0, %v1158
    %v1160 = vmul.f32 %v1056, %v1157
    %v1161 = vmul.f32 %v1063, %v1159
    %v1164 = vrot.slane %v1160, 3
    %v1165 = vrot.slane %v1161, 2
    %v1166 = vsel %vm101, %v1165, %v1164
    %v1167 = vsel %vm130, %v1166, 0
    %1169 = vmatprep.subr.mxu0 0.0
    %1170 = vmatpush1.msra.mxu0 %v69
    %1171 = vmatprep.subr.mxu0 0.0
    %1172 = vmatpush1.msra.mxu0 %v70
    %1173 = vmatprep.subr.mxu0 0.0
    %1174 = vmatpush1.msra.mxu0 %v71
    %1175 = vmatprep.subr.mxu0 0.0
    %1176 = vmatpush1.msra.mxu0 %v72
    %1177 = vmatprep.subr.mxu0 0.0
    %1178 = vmatpush1.msra.mxu0 0.0
    %1179 = vmatprep.subr.mxu0 0.0
    %1180 = vmatpush1.msra.mxu0 0.0
    %1181 = vmatprep.subr.mxu0 0.0
    %1182 = vmatpush1.msra.mxu0 0.0
    %1183 = vmatprep.subr.mxu0 0.0
    %1184 = vmatpush1.msra.mxu0 0.0
    %1185 = vmatprep.subr.mxu0 0.0
    %1186 = vmatpush1.msra.mxu0 0.0
    %1187 = vmatprep.subr.mxu0 0.0
    %1188 = vmatpush1.msra.mxu0 0.0
    %1189 = vmatprep.subr.mxu0 0.0
    %1190 = vmatpush1.msra.mxu0 0.0
    %1191 = vmatprep.subr.mxu0 0.0
    %1192 = vmatpush1.msra.mxu0 0.0
    %1193 = vmatprep.subr.mxu0 0.0
    %1194 = vmatpush1.msra.mxu0 0.0
    %1195 = vmatprep.subr.mxu0 0.0
    %1196 = vmatpush1.msra.mxu0 0.0
    %1197 = vmatprep.subr.mxu0 0.0
    %1198 = vmatpush1.msra.mxu0 0.0
    %1199 = vmatprep.subr.mxu0 0.0
    %1200 = vmatpush1.msra.mxu0 0.0
    %1201 = vmatprep.subr.mxu0 0.0
    %1202 = vmatpush1.msra.mxu0 0.0
    %1203 = vmatprep.subr.mxu0 0.0
    %1204 = vmatpush1.msra.mxu0 0.0
    %1205 = vmatprep.subr.mxu0 0.0
    %1206 = vmatpush1.msra.mxu0 0.0
    %1207 = vmatprep.subr.mxu0 0.0
    %1208 = vmatpush1.msra.mxu0 0.0
    %1209 = vmatprep.subr.mxu0 0.0
    %1210 = vmatpush1.msra.mxu0 0.0
    %1211 = vmatprep.subr.mxu0 0.0
    %1212 = vmatpush1.msra.mxu0 0.0
    %1213 = vmatprep.subr.mxu0 0.0
    %1214 = vmatpush1.msra.mxu0 0.0
    %1215 = vmatprep.subr.mxu0 0.0
    %1216 = vmatpush1.msra.mxu0 0.0
    %1217 = vmatprep.subr.mxu0 0.0
    %1218 = vmatpush1.msra.mxu0 0.0
    %1219 = vmatprep.subr.mxu0 0.0
    %1220 = vmatpush1.msra.mxu0 0.0
    %1221 = vmatprep.subr.mxu0 0.0
    %1222 = vmatpush1.msra.mxu0 0.0
    %1223 = vmatprep.subr.mxu0 0.0
    %1224 = vmatpush1.msra.mxu0 0.0
    %1225 = vmatprep.subr.mxu0 0.0
    %1226 = vmatpush1.msra.mxu0 0.0
    %1227 = vmatprep.subr.mxu0 0.0
    %1228 = vmatpush1.msra.mxu0 0.0
    %1229 = vmatprep.subr.mxu0 0.0
    %1230 = vmatpush1.msra.mxu0 0.0
    %1231 = vmatprep.subr.mxu0 0.0
    %1232 = vmatpush1.msra.mxu0 0.0
    %1233 = vmatprep.mubr.f32.mxu0 0.0
    %1234 = vmatmul.mubr.f32.gmra.mrb[0].mxu0 %v1167
    %v1235 = vpop.f32.mrb[0].mxu0
    %v1236 = vadd.f32 0.0, %v1235
    %v1237 = vpop.f32.mrb[0].mxu0
    %1238 = vdwg.mxu0
    %v1240 = vrot.slane %v1236, 5
    %v1241 = vrot.slane %v1236, 6
    %v1244 = vadd.f32 %v285, %v1240
    %v1245 = vadd.f32 %v290, %v1241
    %v1246 = vadd.f32 %v1244, %v512
    %v1247 = vadd.f32 %v1245, %v512
    %v1248 = vtanh.pop %v1246
    %v1249 = vtanh.pop %v1247
    %1250 = vrot.lane.b32.xlu0 %v1056, 32
    %v1251 = vpop.permute.xlu0 %1250
    %1252 = vrot.lane.b32.xlu0 %v1063, 32
    %v1253 = vpop.permute.xlu0 %1252
    %v1256 = vmul.f32 %v1157, %v1251
    %v1257 = vmul.f32 %v1159, %v1253
    %v1258 = vsub.f32 1.0, %v1157
    %v1259 = vsub.f32 1.0, %v1159
    %1262 = vrot.lane.b32.xlu0 %v1248, 32
    %v1263 = vpop.permute.xlu0 %1262
    %1264 = vrot.lane.b32.xlu0 %v1249, 32
    %v1265 = vpop.permute.xlu0 %1264
    %v1268 = vmul.f32 %v1258, %v1263
    %v1269 = vmul.f32 %v1259, %v1265
    %v1270 = vadd.f32 %v1256, %v1268
    %v1271 = vadd.f32 %v1257, %v1269
    %1274 = vrot.lane.b32.xlu0 %v1270, 96
    %v1275 = vpop.permute.xlu0 %1274
    %1276 = vrot.lane.b32.xlu0 %v1271, 96
    %v1277 = vpop.permute.xlu0 %1276
    %vm1280 = vcmask 257027
    %1281 = vst.msk [vmem:[#allocation2] sm:$0x8] %vm1280, %v1275
    %1282 = vst.msk [vmem:[#allocation2 + $0x8] sm:$0x8] %vm1280, %v1277
    %v1283 = vld [vmem:[#allocation2] sm:$0xff]
    %v1284 = vld [vmem:[#allocation2 + $0x8] sm:$0xff]
    %1285 = vset.pattern.permute.xlu0 4
    %1286 = vperm.xlu0 %1285, %v122
    %v1287 = vpop.permute.xlu0 %1286
    %1289 = vset.pattern.permute.xlu0 4
    %1290 = vperm.xlu0 %1289, %v123
    %v1291 = vpop.permute.xlu0 %1290
    %v1293 = vmul.f32 %v1287, %v1283
    %v1294 = vmul.f32 %v1291, %v1284
    %v1295 = vsel %vm130, %v1293, 0.0
    %v1296 = vrot.slane %v1295, 4
    %v1297 = vadd.f32 %v1295, %v1296
    %v1298 = vrot.slane %v1297, 2
    %v1299 = vadd.f32 %v1297, %v1298
    %v1300 = vrot.slane %v1299, 1
    %v1301 = vadd.f32 %v1299, %v1300
    %v1302 = vsel %vm130, %v1294, 0.0
    %v1303 = vrot.slane %v1302, 4
    %v1304 = vadd.f32 %v1302, %v1303
    %v1305 = vrot.slane %v1304, 2
    %v1306 = vadd.f32 %v1304, %v1305
    %v1307 = vrot.slane %v1306, 1
    %v1308 = vadd.f32 %v1306, %v1307
    %v1311 = vsel %vm101, %v1308, %v1301
    %v1312 = vsel %vm130, %v1311, 0
    %1314 = vmatprep.subr.mxu0 0.0
    %1315 = vmatpush1.msra.mxu0 %v59
    %1316 = vmatprep.subr.mxu0 0.0
    %1317 = vmatpush1.msra.mxu0 %v60
    %1318 = vmatprep.subr.mxu0 0.0
    %1319 = vmatpush1.msra.mxu0 %v61
    %1320 = vmatprep.subr.mxu0 0.0
    %1321 = vmatpush1.msra.mxu0 %v62
    %1322 = vmatprep.subr.mxu0 0.0
    %1323 = vmatpush1.msra.mxu0 0.0
    %1324 = vmatprep.subr.mxu0 0.0
    %1325 = vmatpush1.msra.mxu0 0.0
    %1326 = vmatprep.subr.mxu0 0.0
    %1327 = vmatpush1.msra.mxu0 0.0
    %1328 = vmatprep.subr.mxu0 0.0
    %1329 = vmatpush1.msra.mxu0 0.0
    %1330 = vmatprep.subr.mxu0 0.0
    %1331 = vmatpush1.msra.mxu0 0.0
    %1332 = vmatprep.subr.mxu0 0.0
    %1333 = vmatpush1.msra.mxu0 0.0
    %1334 = vmatprep.subr.mxu0 0.0
    %1335 = vmatpush1.msra.mxu0 0.0
    %1336 = vmatprep.subr.mxu0 0.0
    %1337 = vmatpush1.msra.mxu0 0.0
    %1338 = vmatprep.subr.mxu0 0.0
    %1339 = vmatpush1.msra.mxu0 0.0
    %1340 = vmatprep.subr.mxu0 0.0
    %1341 = vmatpush1.msra.mxu0 0.0
    %1342 = vmatprep.subr.mxu0 0.0
    %1343 = vmatpush1.msra.mxu0 0.0
    %1344 = vmatprep.subr.mxu0 0.0
    %1345 = vmatpush1.msra.mxu0 0.0
    %1346 = vmatprep.subr.mxu0 0.0
    %1347 = vmatpush1.msra.mxu0 0.0
    %1348 = vmatprep.subr.mxu0 0.0
    %1349 = vmatpush1.msra.mxu0 0.0
    %1350 = vmatprep.subr.mxu0 0.0
    %1351 = vmatpush1.msra.mxu0 0.0
    %1352 = vmatprep.subr.mxu0 0.0
    %1353 = vmatpush1.msra.mxu0 0.0
    %1354 = vmatprep.subr.mxu0 0.0
    %1355 = vmatpush1.msra.mxu0 0.0
    %1356 = vmatprep.subr.mxu0 0.0
    %1357 = vmatpush1.msra.mxu0 0.0
    %1358 = vmatprep.subr.mxu0 0.0
    %1359 = vmatpush1.msra.mxu0 0.0
    %1360 = vmatprep.subr.mxu0 0.0
    %1361 = vmatpush1.msra.mxu0 0.0
    %1362 = vmatprep.subr.mxu0 0.0
    %1363 = vmatpush1.msra.mxu0 0.0
    %1364 = vmatprep.subr.mxu0 0.0
    %1365 = vmatpush1.msra.mxu0 0.0
    %1366 = vmatprep.subr.mxu0 0.0
    %1367 = vmatpush1.msra.mxu0 0.0
    %1368 = vmatprep.subr.mxu0 0.0
    %1369 = vmatpush1.msra.mxu0 0.0
    %1370 = vmatprep.subr.mxu0 0.0
    %1371 = vmatpush1.msra.mxu0 0.0
    %1372 = vmatprep.subr.mxu0 0.0
    %1373 = vmatpush1.msra.mxu0 0.0
    %1374 = vmatprep.subr.mxu0 0.0
    %1375 = vmatpush1.msra.mxu0 0.0
    %1376 = vmatprep.subr.mxu0 0.0
    %1377 = vmatpush1.msra.mxu0 0.0
    %1378 = vmatprep.mubr.f32.mxu0 0.0
    %1379 = vmatmul.mubr.f32.gmra.mrb[0].mxu0 %v1312
    %v1380 = vpop.f32.mrb[0].mxu0
    %v1381 = vadd.f32 0.0, %v1380
    %v1382 = vpop.f32.mrb[0].mxu0
    %1383 = vdwg.mxu0
    %v1385 = vrot.slane %v1381, 4
    %v1386 = vrot.slane %v1381, 5
    %v1389 = vadd.f32 %v204, %v1385
    %v1390 = vadd.f32 %v209, %v1386
    %v1391 = vadd.f32 %v1389, %v408
    %v1392 = vadd.f32 %v1390, %v408
    %v1393 = vxor.u32 %v1391, 2147483648
    %v1394 = vxor.u32 %v1392, 2147483648
    %v1395 = vmul.f32 %v1393, 1.442695
    %v1396 = vpow.pop %v1395
    %v1397 = vmul.f32 %v1394, 1.442695
    %v1398 = vpow.pop %v1397
    %v1399 = vadd.f32 %v1396, 1.0
    %v1400 = vadd.f32 %v1398, 1.0
    %v1401 = vrcp.pop %v1399
    %v1402 = vmul.f32 1.0, %v1401
    %v1403 = vrcp.pop %v1400
    %v1404 = vmul.f32 1.0, %v1403
    %v1405 = vmul.f32 %v1301, %v1402
    %v1406 = vmul.f32 %v1308, %v1404
    %v1409 = vrot.slane %v1405, 4
    %v1410 = vrot.slane %v1406, 3
    %v1411 = vsel %vm101, %v1410, %v1409
    %v1412 = vsel %vm130, %v1411, 0
    %1414 = vmatprep.subr.mxu0 0.0
    %1415 = vmatpush1.msra.mxu0 %v69
    %1416 = vmatprep.subr.mxu0 0.0
    %1417 = vmatpush1.msra.mxu0 %v70
    %1418 = vmatprep.subr.mxu0 0.0
    %1419 = vmatpush1.msra.mxu0 %v71
    %1420 = vmatprep.subr.mxu0 0.0
    %1421 = vmatpush1.msra.mxu0 %v72
    %1422 = vmatprep.subr.mxu0 0.0
    %1423 = vmatpush1.msra.mxu0 0.0
    %1424 = vmatprep.subr.mxu0 0.0
    %1425 = vmatpush1.msra.mxu0 0.0
    %1426 = vmatprep.subr.mxu0 0.0
    %1427 = vmatpush1.msra.mxu0 0.0
    %1428 = vmatprep.subr.mxu0 0.0
    %1429 = vmatpush1.msra.mxu0 0.0
    %1430 = vmatprep.subr.mxu0 0.0
    %1431 = vmatpush1.msra.mxu0 0.0
    %1432 = vmatprep.subr.mxu0 0.0
    %1433 = vmatpush1.msra.mxu0 0.0
    %1434 = vmatprep.subr.mxu0 0.0
    %1435 = vmatpush1.msra.mxu0 0.0
    %1436 = vmatprep.subr.mxu0 0.0
    %1437 = vmatpush1.msra.mxu0 0.0
    %1438 = vmatprep.subr.mxu0 0.0
    %1439 = vmatpush1.msra.mxu0 0.0
    %1440 = vmatprep.subr.mxu0 0.0
    %1441 = vmatpush1.msra.mxu0 0.0
    %1442 = vmatprep.subr.mxu0 0.0
    %1443 = vmatpush1.msra.mxu0 0.0
    %1444 = vmatprep.subr.mxu0 0.0
    %1445 = vmatpush1.msra.mxu0 0.0
    %1446 = vmatprep.subr.mxu0 0.0
    %1447 = vmatpush1.msra.mxu0 0.0
    %1448 = vmatprep.subr.mxu0 0.0
    %1449 = vmatpush1.msra.mxu0 0.0
    %1450 = vmatprep.subr.mxu0 0.0
    %1451 = vmatpush1.msra.mxu0 0.0
    %1452 = vmatprep.subr.mxu0 0.0
    %1453 = vmatpush1.msra.mxu0 0.0
    %1454 = vmatprep.subr.mxu0 0.0
    %1455 = vmatpush1.msra.mxu0 0.0
    %1456 = vmatprep.subr.mxu0 0.0
    %1457 = vmatpush1.msra.mxu0 0.0
    %1458 = vmatprep.subr.mxu0 0.0
    %1459 = vmatpush1.msra.mxu0 0.0
    %1460 = vmatprep.subr.mxu0 0.0
    %1461 = vmatpush1.msra.mxu0 0.0
    %1462 = vmatprep.subr.mxu0 0.0
    %1463 = vmatpush1.msra.mxu0 0.0
    %1464 = vmatprep.subr.mxu0 0.0
    %1465 = vmatpush1.msra.mxu0 0.0
    %1466 = vmatprep.subr.mxu0 0.0
    %1467 = vmatpush1.msra.mxu0 0.0
    %1468 = vmatprep.subr.mxu0 0.0
    %1469 = vmatpush1.msra.mxu0 0.0
    %1470 = vmatprep.subr.mxu0 0.0
    %1471 = vmatpush1.msra.mxu0 0.0
    %1472 = vmatprep.subr.mxu0 0.0
    %1473 = vmatpush1.msra.mxu0 0.0
    %1474 = vmatprep.subr.mxu0 0.0
    %1475 = vmatpush1.msra.mxu0 0.0
    %1476 = vmatprep.subr.mxu0 0.0
    %1477 = vmatpush1.msra.mxu0 0.0
    %1478 = vmatprep.mubr.f32.mxu0 0.0
    %1479 = vmatmul.mubr.f32.gmra.mrb[0].mxu0 %v1412
    %v1480 = vpop.f32.mrb[0].mxu0
    %v1481 = vadd.f32 0.0, %v1480
    %v1482 = vpop.f32.mrb[0].mxu0
    %1483 = vdwg.mxu0
    %v1485 = vrot.slane %v1481, 4
    %v1486 = vrot.slane %v1481, 5
    %v1489 = vadd.f32 %v285, %v1485
    %v1490 = vadd.f32 %v290, %v1486
    %v1491 = vadd.f32 %v1489, %v512
    %v1492 = vadd.f32 %v1490, %v512
    %v1493 = vtanh.pop %v1491
    %v1494 = vtanh.pop %v1492
    %1495 = vrot.lane.b32.xlu0 %v1301, 32
    %v1496 = vpop.permute.xlu0 %1495
    %1497 = vrot.lane.b32.xlu0 %v1308, 32
    %v1498 = vpop.permute.xlu0 %1497
    %v1501 = vmul.f32 %v1402, %v1496
    %v1502 = vmul.f32 %v1404, %v1498
    %v1503 = vsub.f32 1.0, %v1402
    %v1504 = vsub.f32 1.0, %v1404
    %1507 = vrot.lane.b32.xlu0 %v1493, 32
    %v1508 = vpop.permute.xlu0 %1507
    %1509 = vrot.lane.b32.xlu0 %v1494, 32
    %v1510 = vpop.permute.xlu0 %1509
    %v1513 = vmul.f32 %v1503, %v1508
    %v1514 = vmul.f32 %v1504, %v1510
    %v1515 = vadd.f32 %v1501, %v1513
    %v1516 = vadd.f32 %v1502, %v1514
    %1519 = vrot.lane.b32.xlu0 %v1515, 96
    %v1520 = vpop.permute.xlu0 %1519
    %1521 = vrot.lane.b32.xlu0 %v1516, 96
    %v1522 = vpop.permute.xlu0 %1521
    %vm1525 = vcmask 258052
    %1526 = vst.msk [vmem:[#allocation2] sm:$0x10] %vm1525, %v1520
    %1527 = vst.msk [vmem:[#allocation2 + $0x8] sm:$0x10] %vm1525, %v1522
    %v1528 = vld [vmem:[#allocation2] sm:$0xff]
    %v1529 = vld [vmem:[#allocation2 + $0x8] sm:$0xff]
    %1530 = vset.pattern.permute.xlu0 5
    %1531 = vperm.xlu0 %1530, %v122
    %v1532 = vpop.permute.xlu0 %1531
    %1534 = vset.pattern.permute.xlu0 5
    %1535 = vperm.xlu0 %1534, %v123
    %v1536 = vpop.permute.xlu0 %1535
    %v1538 = vmul.f32 %v1532, %v1528
    %v1539 = vmul.f32 %v1536, %v1529
    %v1540 = vsel %vm130, %v1538, 0.0
    %v1541 = vrot.slane %v1540, 4
    %v1542 = vadd.f32 %v1540, %v1541
    %v1543 = vrot.slane %v1542, 2
    %v1544 = vadd.f32 %v1542, %v1543
    %v1545 = vrot.slane %v1544, 1
    %v1546 = vadd.f32 %v1544, %v1545
    %v1547 = vsel %vm130, %v1539, 0.0
    %v1548 = vrot.slane %v1547, 4
    %v1549 = vadd.f32 %v1547, %v1548
    %v1550 = vrot.slane %v1549, 2
    %v1551 = vadd.f32 %v1549, %v1550
    %v1552 = vrot.slane %v1551, 1
    %v1553 = vadd.f32 %v1551, %v1552
    %v1556 = vsel %vm101, %v1553, %v1546
    %v1557 = vsel %vm130, %v1556, 0
    %1559 = vmatprep.subr.mxu0 0.0
    %1560 = vmatpush1.msra.mxu0 %v59
    %1561 = vmatprep.subr.mxu0 0.0
    %1562 = vmatpush1.msra.mxu0 %v60
    %1563 = vmatprep.subr.mxu0 0.0
    %1564 = vmatpush1.msra.mxu0 %v61
    %1565 = vmatprep.subr.mxu0 0.0
    %1566 = vmatpush1.msra.mxu0 %v62
    %1567 = vmatprep.subr.mxu0 0.0
    %1568 = vmatpush1.msra.mxu0 0.0
    %1569 = vmatprep.subr.mxu0 0.0
    %1570 = vmatpush1.msra.mxu0 0.0
    %1571 = vmatprep.subr.mxu0 0.0
    %1572 = vmatpush1.msra.mxu0 0.0
    %1573 = vmatprep.subr.mxu0 0.0
    %1574 = vmatpush1.msra.mxu0 0.0
    %1575 = vmatprep.subr.mxu0 0.0
    %1576 = vmatpush1.msra.mxu0 0.0
    %1577 = vmatprep.subr.mxu0 0.0
    %1578 = vmatpush1.msra.mxu0 0.0
    %1579 = vmatprep.subr.mxu0 0.0
    %1580 = vmatpush1.msra.mxu0 0.0
    %1581 = vmatprep.subr.mxu0 0.0
    %1582 = vmatpush1.msra.mxu0 0.0
    %1583 = vmatprep.subr.mxu0 0.0
    %1584 = vmatpush1.msra.mxu0 0.0
    %1585 = vmatprep.subr.mxu0 0.0
    %1586 = vmatpush1.msra.mxu0 0.0
    %1587 = vmatprep.subr.mxu0 0.0
    %1588 = vmatpush1.msra.mxu0 0.0
    %1589 = vmatprep.subr.mxu0 0.0
    %1590 = vmatpush1.msra.mxu0 0.0
    %1591 = vmatprep.subr.mxu0 0.0
    %1592 = vmatpush1.msra.mxu0 0.0
    %1593 = vmatprep.subr.mxu0 0.0
    %1594 = vmatpush1.msra.mxu0 0.0
    %1595 = vmatprep.subr.mxu0 0.0
    %1596 = vmatpush1.msra.mxu0 0.0
    %1597 = vmatprep.subr.mxu0 0.0
    %1598 = vmatpush1.msra.mxu0 0.0
    %1599 = vmatprep.subr.mxu0 0.0
    %1600 = vmatpush1.msra.mxu0 0.0
    %1601 = vmatprep.subr.mxu0 0.0
    %1602 = vmatpush1.msra.mxu0 0.0
    %1603 = vmatprep.subr.mxu0 0.0
    %1604 = vmatpush1.msra.mxu0 0.0
    %1605 = vmatprep.subr.mxu0 0.0
    %1606 = vmatpush1.msra.mxu0 0.0
    %1607 = vmatprep.subr.mxu0 0.0
    %1608 = vmatpush1.msra.mxu0 0.0
    %1609 = vmatprep.subr.mxu0 0.0
    %1610 = vmatpush1.msra.mxu0 0.0
    %1611 = vmatprep.subr.mxu0 0.0
    %1612 = vmatpush1.msra.mxu0 0.0
    %1613 = vmatprep.subr.mxu0 0.0
    %1614 = vmatpush1.msra.mxu0 0.0
    %1615 = vmatprep.subr.mxu0 0.0
    %1616 = vmatpush1.msra.mxu0 0.0
    %1617 = vmatprep.subr.mxu0 0.0
    %1618 = vmatpush1.msra.mxu0 0.0
    %1619 = vmatprep.subr.mxu0 0.0
    %1620 = vmatpush1.msra.mxu0 0.0
    %1621 = vmatprep.subr.mxu0 0.0
    %1622 = vmatpush1.msra.mxu0 0.0
    %1623 = vmatprep.mubr.f32.mxu0 0.0
    %1624 = vmatmul.mubr.f32.gmra.mrb[0].mxu0 %v1557
    %v1625 = vpop.f32.mrb[0].mxu0
    %v1626 = vadd.f32 0.0, %v1625
    %v1627 = vpop.f32.mrb[0].mxu0
    %1628 = vdwg.mxu0
    %v1630 = vrot.slane %v1626, 3
    %v1631 = vrot.slane %v1626, 4
    %v1634 = vadd.f32 %v204, %v1630
    %v1635 = vadd.f32 %v209, %v1631
    %v1636 = vadd.f32 %v1634, %v408
    %v1637 = vadd.f32 %v1635, %v408
    %v1638 = vxor.u32 %v1636, 2147483648
    %v1639 = vxor.u32 %v1637, 2147483648
    %v1640 = vmul.f32 %v1638, 1.442695
    %v1641 = vpow.pop %v1640
    %v1642 = vmul.f32 %v1639, 1.442695
    %v1643 = vpow.pop %v1642
    %v1644 = vadd.f32 %v1641, 1.0
    %v1645 = vadd.f32 %v1643, 1.0
    %v1646 = vrcp.pop %v1644
    %v1647 = vmul.f32 1.0, %v1646
    %v1648 = vrcp.pop %v1645
    %v1649 = vmul.f32 1.0, %v1648
    %v1650 = vmul.f32 %v1546, %v1647
    %v1651 = vmul.f32 %v1553, %v1649
    %v1654 = vrot.slane %v1650, 5
    %v1655 = vrot.slane %v1651, 4
    %v1656 = vsel %vm101, %v1655, %v1654
    %v1657 = vsel %vm130, %v1656, 0
    %1659 = vmatprep.subr.mxu0 0.0
    %1660 = vmatpush1.msra.mxu0 %v69
    %1661 = vmatprep.subr.mxu0 0.0
    %1662 = vmatpush1.msra.mxu0 %v70
    %1663 = vmatprep.subr.mxu0 0.0
    %1664 = vmatpush1.msra.mxu0 %v71
    %1665 = vmatprep.subr.mxu0 0.0
    %1666 = vmatpush1.msra.mxu0 %v72
    %1667 = vmatprep.subr.mxu0 0.0
    %1668 = vmatpush1.msra.mxu0 0.0
    %1669 = vmatprep.subr.mxu0 0.0
    %1670 = vmatpush1.msra.mxu0 0.0
    %1671 = vmatprep.subr.mxu0 0.0
    %1672 = vmatpush1.msra.mxu0 0.0
    %1673 = vmatprep.subr.mxu0 0.0
    %1674 = vmatpush1.msra.mxu0 0.0
    %1675 = vmatprep.subr.mxu0 0.0
    %1676 = vmatpush1.msra.mxu0 0.0
    %1677 = vmatprep.subr.mxu0 0.0
    %1678 = vmatpush1.msra.mxu0 0.0
    %1679 = vmatprep.subr.mxu0 0.0
    %1680 = vmatpush1.msra.mxu0 0.0
    %1681 = vmatprep.subr.mxu0 0.0
    %1682 = vmatpush1.msra.mxu0 0.0
    %1683 = vmatprep.subr.mxu0 0.0
    %1684 = vmatpush1.msra.mxu0 0.0
    %1685 = vmatprep.subr.mxu0 0.0
    %1686 = vmatpush1.msra.mxu0 0.0
    %1687 = vmatprep.subr.mxu0 0.0
    %1688 = vmatpush1.msra.mxu0 0.0
    %1689 = vmatprep.subr.mxu0 0.0
    %1690 = vmatpush1.msra.mxu0 0.0
    %1691 = vmatprep.subr.mxu0 0.0
    %1692 = vmatpush1.msra.mxu0 0.0
    %1693 = vmatprep.subr.mxu0 0.0
    %1694 = vmatpush1.msra.mxu0 0.0
    %1695 = vmatprep.subr.mxu0 0.0
    %1696 = vmatpush1.msra.mxu0 0.0
    %1697 = vmatprep.subr.mxu0 0.0
    %1698 = vmatpush1.msra.mxu0 0.0
    %1699 = vmatprep.subr.mxu0 0.0
    %1700 = vmatpush1.msra.mxu0 0.0
    %1701 = vmatprep.subr.mxu0 0.0
    %1702 = vmatpush1.msra.mxu0 0.0
    %1703 = vmatprep.subr.mxu0 0.0
    %1704 = vmatpush1.msra.mxu0 0.0
    %1705 = vmatprep.subr.mxu0 0.0
    %1706 = vmatpush1.msra.mxu0 0.0
    %1707 = vmatprep.subr.mxu0 0.0
    %1708 = vmatpush1.msra.mxu0 0.0
    %1709 = vmatprep.subr.mxu0 0.0
    %1710 = vmatpush1.msra.mxu0 0.0
    %1711 = vmatprep.subr.mxu0 0.0
    %1712 = vmatpush1.msra.mxu0 0.0
    %1713 = vmatprep.subr.mxu0 0.0
    %1714 = vmatpush1.msra.mxu0 0.0
    %1715 = vmatprep.subr.mxu0 0.0
    %1716 = vmatpush1.msra.mxu0 0.0
    %1717 = vmatprep.subr.mxu0 0.0
    %1718 = vmatpush1.msra.mxu0 0.0
    %1719 = vmatprep.subr.mxu0 0.0
    %1720 = vmatpush1.msra.mxu0 0.0
    %1721 = vmatprep.subr.mxu0 0.0
    %1722 = vmatpush1.msra.mxu0 0.0
    %1723 = vmatprep.mubr.f32.mxu0 0.0
    %1724 = vmatmul.mubr.f32.gmra.mrb[0].mxu0 %v1657
    %v1725 = vpop.f32.mrb[0].mxu0
    %v1726 = vadd.f32 0.0, %v1725
    %v1727 = vpop.f32.mrb[0].mxu0
    %1728 = vdwg.mxu0
    %v1730 = vrot.slane %v1726, 3
    %v1731 = vrot.slane %v1726, 4
    %v1734 = vadd.f32 %v285, %v1730
    %v1735 = vadd.f32 %v290, %v1731
    %v1736 = vadd.f32 %v1734, %v512
    %v1737 = vadd.f32 %v1735, %v512
    %v1738 = vtanh.pop %v1736
    %v1739 = vtanh.pop %v1737
    %1740 = vrot.lane.b32.xlu0 %v1546, 32
    %v1741 = vpop.permute.xlu0 %1740
    %1742 = vrot.lane.b32.xlu0 %v1553, 32
    %v1743 = vpop.permute.xlu0 %1742
    %v1746 = vmul.f32 %v1647, %v1741
    %v1747 = vmul.f32 %v1649, %v1743
    %v1748 = vsub.f32 1.0, %v1647
    %v1749 = vsub.f32 1.0, %v1649
    %1752 = vrot.lane.b32.xlu0 %v1738, 32
    %v1753 = vpop.permute.xlu0 %1752
    %1754 = vrot.lane.b32.xlu0 %v1739, 32
    %v1755 = vpop.permute.xlu0 %1754
    %v1758 = vmul.f32 %v1748, %v1753
    %v1759 = vmul.f32 %v1749, %v1755
    %v1760 = vadd.f32 %v1746, %v1758
    %v1761 = vadd.f32 %v1747, %v1759
    %1764 = vrot.lane.b32.xlu0 %v1760, 96
    %v1765 = vpop.permute.xlu0 %1764
    %1766 = vrot.lane.b32.xlu0 %v1761, 96
    %v1767 = vpop.permute.xlu0 %1766
    %vm1770 = vcmask 259077
    %1771 = vst.msk [vmem:[#allocation2] sm:$0x20] %vm1770, %v1765
    %1772 = vst.msk [vmem:[#allocation2 + $0x8] sm:$0x20] %vm1770, %v1767
    %v1773 = vld [vmem:[#allocation2] sm:$0xff]
    %v1774 = vld [vmem:[#allocation2 + $0x8] sm:$0xff]
    %1775 = vset.pattern.permute.xlu0 6
    %1776 = vperm.xlu0 %1775, %v122
    %v1777 = vpop.permute.xlu0 %1776
    %1779 = vset.pattern.permute.xlu0 6
    %1780 = vperm.xlu0 %1779, %v123
    %v1781 = vpop.permute.xlu0 %1780
    %v1783 = vmul.f32 %v1777, %v1773
    %v1784 = vmul.f32 %v1781, %v1774
    %v1785 = vsel %vm130, %v1783, 0.0
    %v1786 = vrot.slane %v1785, 4
    %v1787 = vadd.f32 %v1785, %v1786
    %v1788 = vrot.slane %v1787, 2
    %v1789 = vadd.f32 %v1787, %v1788
    %v1790 = vrot.slane %v1789, 1
    %v1791 = vadd.f32 %v1789, %v1790
    %v1792 = vsel %vm130, %v1784, 0.0
    %v1793 = vrot.slane %v1792, 4
    %v1794 = vadd.f32 %v1792, %v1793
    %v1795 = vrot.slane %v1794, 2
    %v1796 = vadd.f32 %v1794, %v1795
    %v1797 = vrot.slane %v1796, 1
    %v1798 = vadd.f32 %v1796, %v1797
    %v1801 = vsel %vm101, %v1798, %v1791
    %v1802 = vsel %vm130, %v1801, 0
    %1804 = vmatprep.subr.mxu0 0.0
    %1805 = vmatpush1.msra.mxu0 %v59
    %1806 = vmatprep.subr.mxu0 0.0
    %1807 = vmatpush1.msra.mxu0 %v60
    %1808 = vmatprep.subr.mxu0 0.0
    %1809 = vmatpush1.msra.mxu0 %v61
    %1810 = vmatprep.subr.mxu0 0.0
    %1811 = vmatpush1.msra.mxu0 %v62
    %1812 = vmatprep.subr.mxu0 0.0
    %1813 = vmatpush1.msra.mxu0 0.0
    %1814 = vmatprep.subr.mxu0 0.0
    %1815 = vmatpush1.msra.mxu0 0.0
    %1816 = vmatprep.subr.mxu0 0.0
    %1817 = vmatpush1.msra.mxu0 0.0
    %1818 = vmatprep.subr.mxu0 0.0
    %1819 = vmatpush1.msra.mxu0 0.0
    %1820 = vmatprep.subr.mxu0 0.0
    %1821 = vmatpush1.msra.mxu0 0.0
    %1822 = vmatprep.subr.mxu0 0.0
    %1823 = vmatpush1.msra.mxu0 0.0
    %1824 = vmatprep.subr.mxu0 0.0
    %1825 = vmatpush1.msra.mxu0 0.0
    %1826 = vmatprep.subr.mxu0 0.0
    %1827 = vmatpush1.msra.mxu0 0.0
    %1828 = vmatprep.subr.mxu0 0.0
    %1829 = vmatpush1.msra.mxu0 0.0
    %1830 = vmatprep.subr.mxu0 0.0
    %1831 = vmatpush1.msra.mxu0 0.0
    %1832 = vmatprep.subr.mxu0 0.0
    %1833 = vmatpush1.msra.mxu0 0.0
    %1834 = vmatprep.subr.mxu0 0.0
    %1835 = vmatpush1.msra.mxu0 0.0
    %1836 = vmatprep.subr.mxu0 0.0
    %1837 = vmatpush1.msra.mxu0 0.0
    %1838 = vmatprep.subr.mxu0 0.0
    %1839 = vmatpush1.msra.mxu0 0.0
    %1840 = vmatprep.subr.mxu0 0.0
    %1841 = vmatpush1.msra.mxu0 0.0
    %1842 = vmatprep.subr.mxu0 0.0
    %1843 = vmatpush1.msra.mxu0 0.0
    %1844 = vmatprep.subr.mxu0 0.0
    %1845 = vmatpush1.msra.mxu0 0.0
    %1846 = vmatprep.subr.mxu0 0.0
    %1847 = vmatpush1.msra.mxu0 0.0
    %1848 = vmatprep.subr.mxu0 0.0
    %1849 = vmatpush1.msra.mxu0 0.0
    %1850 = vmatprep.subr.mxu0 0.0
    %1851 = vmatpush1.msra.mxu0 0.0
    %1852 = vmatprep.subr.mxu0 0.0
    %1853 = vmatpush1.msra.mxu0 0.0
    %1854 = vmatprep.subr.mxu0 0.0
    %1855 = vmatpush1.msra.mxu0 0.0
    %1856 = vmatprep.subr.mxu0 0.0
    %1857 = vmatpush1.msra.mxu0 0.0
    %1858 = vmatprep.subr.mxu0 0.0
    %1859 = vmatpush1.msra.mxu0 0.0
    %1860 = vmatprep.subr.mxu0 0.0
    %1861 = vmatpush1.msra.mxu0 0.0
    %1862 = vmatprep.subr.mxu0 0.0
    %1863 = vmatpush1.msra.mxu0 0.0
    %1864 = vmatprep.subr.mxu0 0.0
    %1865 = vmatpush1.msra.mxu0 0.0
    %1866 = vmatprep.subr.mxu0 0.0
    %1867 = vmatpush1.msra.mxu0 0.0
    %1868 = vmatprep.mubr.f32.mxu0 0.0
    %1869 = vmatmul.mubr.f32.gmra.mrb[0].mxu0 %v1802
    %v1870 = vpop.f32.mrb[0].mxu0
    %v1871 = vadd.f32 0.0, %v1870
    %v1872 = vpop.f32.mrb[0].mxu0
    %1873 = vdwg.mxu0
    %v1875 = vrot.slane %v1871, 2
    %v1876 = vrot.slane %v1871, 3
    %v1879 = vadd.f32 %v204, %v1875
    %v1880 = vadd.f32 %v209, %v1876
    %v1881 = vadd.f32 %v1879, %v408
    %v1882 = vadd.f32 %v1880, %v408
    %v1883 = vxor.u32 %v1881, 2147483648
    %v1884 = vxor.u32 %v1882, 2147483648
    %v1885 = vmul.f32 %v1883, 1.442695
    %v1886 = vpow.pop %v1885
    %v1887 = vmul.f32 %v1884, 1.442695
    %v1888 = vpow.pop %v1887
    %v1889 = vadd.f32 %v1886, 1.0
    %v1890 = vadd.f32 %v1888, 1.0
    %v1891 = vrcp.pop %v1889
    %v1892 = vmul.f32 1.0, %v1891
    %v1893 = vrcp.pop %v1890
    %v1894 = vmul.f32 1.0, %v1893
    %v1895 = vmul.f32 %v1791, %v1892
    %v1896 = vmul.f32 %v1798, %v1894
    %v1899 = vrot.slane %v1895, 6
    %v1900 = vrot.slane %v1896, 5
    %v1901 = vsel %vm101, %v1900, %v1899
    %v1902 = vsel %vm130, %v1901, 0
    %1904 = vmatprep.subr.mxu0 0.0
    %1905 = vmatpush1.msra.mxu0 %v69
    %1906 = vmatprep.subr.mxu0 0.0
    %1907 = vmatpush1.msra.mxu0 %v70
    %1908 = vmatprep.subr.mxu0 0.0
    %1909 = vmatpush1.msra.mxu0 %v71
    %1910 = vmatprep.subr.mxu0 0.0
    %1911 = vmatpush1.msra.mxu0 %v72
    %1912 = vmatprep.subr.mxu0 0.0
    %1913 = vmatpush1.msra.mxu0 0.0
    %1914 = vmatprep.subr.mxu0 0.0
    %1915 = vmatpush1.msra.mxu0 0.0
    %1916 = vmatprep.subr.mxu0 0.0
    %1917 = vmatpush1.msra.mxu0 0.0
    %1918 = vmatprep.subr.mxu0 0.0
    %1919 = vmatpush1.msra.mxu0 0.0
    %1920 = vmatprep.subr.mxu0 0.0
    %1921 = vmatpush1.msra.mxu0 0.0
    %1922 = vmatprep.subr.mxu0 0.0
    %1923 = vmatpush1.msra.mxu0 0.0
    %1924 = vmatprep.subr.mxu0 0.0
    %1925 = vmatpush1.msra.mxu0 0.0
    %1926 = vmatprep.subr.mxu0 0.0
    %1927 = vmatpush1.msra.mxu0 0.0
    %1928 = vmatprep.subr.mxu0 0.0
    %1929 = vmatpush1.msra.mxu0 0.0
    %1930 = vmatprep.subr.mxu0 0.0
    %1931 = vmatpush1.msra.mxu0 0.0
    %1932 = vmatprep.subr.mxu0 0.0
    %1933 = vmatpush1.msra.mxu0 0.0
    %1934 = vmatprep.subr.mxu0 0.0
    %1935 = vmatpush1.msra.mxu0 0.0
    %1936 = vmatprep.subr.mxu0 0.0
    %1937 = vmatpush1.msra.mxu0 0.0
    %1938 = vmatprep.subr.mxu0 0.0
    %1939 = vmatpush1.msra.mxu0 0.0
    %1940 = vmatprep.subr.mxu0 0.0
    %1941 = vmatpush1.msra.mxu0 0.0
    %1942 = vmatprep.subr.mxu0 0.0
    %1943 = vmatpush1.msra.mxu0 0.0
    %1944 = vmatprep.subr.mxu0 0.0
    %1945 = vmatpush1.msra.mxu0 0.0
    %1946 = vmatprep.subr.mxu0 0.0
    %1947 = vmatpush1.msra.mxu0 0.0
    %1948 = vmatprep.subr.mxu0 0.0
    %1949 = vmatpush1.msra.mxu0 0.0
    %1950 = vmatprep.subr.mxu0 0.0
    %1951 = vmatpush1.msra.mxu0 0.0
    %1952 = vmatprep.subr.mxu0 0.0
    %1953 = vmatpush1.msra.mxu0 0.0
    %1954 = vmatprep.subr.mxu0 0.0
    %1955 = vmatpush1.msra.mxu0 0.0
    %1956 = vmatprep.subr.mxu0 0.0
    %1957 = vmatpush1.msra.mxu0 0.0
    %1958 = vmatprep.subr.mxu0 0.0
    %1959 = vmatpush1.msra.mxu0 0.0
    %1960 = vmatprep.subr.mxu0 0.0
    %1961 = vmatpush1.msra.mxu0 0.0
    %1962 = vmatprep.subr.mxu0 0.0
    %1963 = vmatpush1.msra.mxu0 0.0
    %1964 = vmatprep.subr.mxu0 0.0
    %1965 = vmatpush1.msra.mxu0 0.0
    %1966 = vmatprep.subr.mxu0 0.0
    %1967 = vmatpush1.msra.mxu0 0.0
    %1968 = vmatprep.mubr.f32.mxu0 0.0
    %1969 = vmatmul.mubr.f32.gmra.mrb[0].mxu0 %v1902
    %v1970 = vpop.f32.mrb[0].mxu0
    %v1971 = vadd.f32 0.0, %v1970
    %v1972 = vpop.f32.mrb[0].mxu0
    %1973 = vdwg.mxu0
    %v1975 = vrot.slane %v1971, 2
    %v1976 = vrot.slane %v1971, 3
    %v1979 = vadd.f32 %v285, %v1975
    %v1980 = vadd.f32 %v290, %v1976
    %v1981 = vadd.f32 %v1979, %v512
    %v1982 = vadd.f32 %v1980, %v512
    %v1983 = vtanh.pop %v1981
    %v1984 = vtanh.pop %v1982
    %1985 = vrot.lane.b32.xlu0 %v1791, 32
    %v1986 = vpop.permute.xlu0 %1985
    %1987 = vrot.lane.b32.xlu0 %v1798, 32
    %v1988 = vpop.permute.xlu0 %1987
    %v1991 = vmul.f32 %v1892, %v1986
    %v1992 = vmul.f32 %v1894, %v1988
    %v1993 = vsub.f32 1.0, %v1892
    %v1994 = vsub.f32 1.0, %v1894
    %1997 = vrot.lane.b32.xlu0 %v1983, 32
    %v1998 = vpop.permute.xlu0 %1997
    %1999 = vrot.lane.b32.xlu0 %v1984, 32
    %v2000 = vpop.permute.xlu0 %1999
    %v2003 = vmul.f32 %v1993, %v1998
    %v2004 = vmul.f32 %v1994, %v2000
    %v2005 = vadd.f32 %v1991, %v2003
    %v2006 = vadd.f32 %v1992, %v2004
    %2009 = vrot.lane.b32.xlu0 %v2005, 96
    %v2010 = vpop.permute.xlu0 %2009
    %2011 = vrot.lane.b32.xlu0 %v2006, 96
    %v2012 = vpop.permute.xlu0 %2011
    %vm2015 = vcmask 260102
    %2016 = vst.msk [vmem:[#allocation2] sm:$0x40] %vm2015, %v2010
    %2017 = vst.msk [vmem:[#allocation2 + $0x8] sm:$0x40] %vm2015, %v2012
    %v2018 = vld [vmem:[#allocation2] sm:$0xff]
    %v2019 = vld [vmem:[#allocation2 + $0x8] sm:$0xff]
    %2020 = vset.pattern.permute.xlu0 7
    %2021 = vperm.xlu0 %2020, %v122
    %v2022 = vpop.permute.xlu0 %2021
    %2024 = vset.pattern.permute.xlu0 7
    %2025 = vperm.xlu0 %2024, %v123
    %v2026 = vpop.permute.xlu0 %2025
    %v2028 = vmul.f32 %v2022, %v2018
    %v2029 = vmul.f32 %v2026, %v2019
    %v2030 = vsel %vm130, %v2028, 0.0
    %v2031 = vrot.slane %v2030, 4
    %v2032 = vadd.f32 %v2030, %v2031
    %v2033 = vrot.slane %v2032, 2
    %v2034 = vadd.f32 %v2032, %v2033
    %v2035 = vrot.slane %v2034, 1
    %v2036 = vadd.f32 %v2034, %v2035
    %v2037 = vsel %vm130, %v2029, 0.0
    %v2038 = vrot.slane %v2037, 4
    %v2039 = vadd.f32 %v2037, %v2038
    %v2040 = vrot.slane %v2039, 2
    %v2041 = vadd.f32 %v2039, %v2040
    %v2042 = vrot.slane %v2041, 1
    %v2043 = vadd.f32 %v2041, %v2042
    %v2046 = vsel %vm101, %v2043, %v2036
    %v2047 = vsel %vm130, %v2046, 0
    %2049 = vmatprep.subr.mxu0 0.0
    %2050 = vmatpush1.msra.mxu0 %v59
    %2051 = vmatprep.subr.mxu0 0.0
    %2052 = vmatpush1.msra.mxu0 %v60
    %2053 = vmatprep.subr.mxu0 0.0
    %2054 = vmatpush1.msra.mxu0 %v61
    %2055 = vmatprep.subr.mxu0 0.0
    %2056 = vmatpush1.msra.mxu0 %v62
    %2057 = vmatprep.subr.mxu0 0.0
    %2058 = vmatpush1.msra.mxu0 0.0
    %2059 = vmatprep.subr.mxu0 0.0
    %2060 = vmatpush1.msra.mxu0 0.0
    %2061 = vmatprep.subr.mxu0 0.0
    %2062 = vmatpush1.msra.mxu0 0.0
    %2063 = vmatprep.subr.mxu0 0.0
    %2064 = vmatpush1.msra.mxu0 0.0
    %2065 = vmatprep.subr.mxu0 0.0
    %2066 = vmatpush1.msra.mxu0 0.0
    %2067 = vmatprep.subr.mxu0 0.0
    %2068 = vmatpush1.msra.mxu0 0.0
    %2069 = vmatprep.subr.mxu0 0.0
    %2070 = vmatpush1.msra.mxu0 0.0
    %2071 = vmatprep.subr.mxu0 0.0
    %2072 = vmatpush1.msra.mxu0 0.0
    %2073 = vmatprep.subr.mxu0 0.0
    %2074 = vmatpush1.msra.mxu0 0.0
    %2075 = vmatprep.subr.mxu0 0.0
    %2076 = vmatpush1.msra.mxu0 0.0
    %2077 = vmatprep.subr.mxu0 0.0
    %2078 = vmatpush1.msra.mxu0 0.0
    %2079 = vmatprep.subr.mxu0 0.0
    %2080 = vmatpush1.msra.mxu0 0.0
    %2081 = vmatprep.subr.mxu0 0.0
    %2082 = vmatpush1.msra.mxu0 0.0
    %2083 = vmatprep.subr.mxu0 0.0
    %2084 = vmatpush1.msra.mxu0 0.0
    %2085 = vmatprep.subr.mxu0 0.0
    %2086 = vmatpush1.msra.mxu0 0.0
    %2087 = vmatprep.subr.mxu0 0.0
    %2088 = vmatpush1.msra.mxu0 0.0
    %2089 = vmatprep.subr.mxu0 0.0
    %2090 = vmatpush1.msra.mxu0 0.0
    %2091 = vmatprep.subr.mxu0 0.0
    %2092 = vmatpush1.msra.mxu0 0.0
    %2093 = vmatprep.subr.mxu0 0.0
    %2094 = vmatpush1.msra.mxu0 0.0
    %2095 = vmatprep.subr.mxu0 0.0
    %2096 = vmatpush1.msra.mxu0 0.0
    %2097 = vmatprep.subr.mxu0 0.0
    %2098 = vmatpush1.msra.mxu0 0.0
    %2099 = vmatprep.subr.mxu0 0.0
    %2100 = vmatpush1.msra.mxu0 0.0
    %2101 = vmatprep.subr.mxu0 0.0
    %2102 = vmatpush1.msra.mxu0 0.0
    %2103 = vmatprep.subr.mxu0 0.0
    %2104 = vmatpush1.msra.mxu0 0.0
    %2105 = vmatprep.subr.mxu0 0.0
    %2106 = vmatpush1.msra.mxu0 0.0
    %2107 = vmatprep.subr.mxu0 0.0
    %2108 = vmatpush1.msra.mxu0 0.0
    %2109 = vmatprep.subr.mxu0 0.0
    %2110 = vmatpush1.msra.mxu0 0.0
    %2111 = vmatprep.subr.mxu0 0.0
    %2112 = vmatpush1.msra.mxu0 0.0
    %2113 = vmatprep.mubr.f32.mxu0 0.0
    %2114 = vmatmul.mubr.f32.gmra.mrb[0].mxu0 %v2047
    %v2115 = vpop.f32.mrb[0].mxu0
    %v2116 = vadd.f32 0.0, %v2115
    %v2117 = vpop.f32.mrb[0].mxu0
    %2118 = vdwg.mxu0
    %v2120 = vrot.slane %v2116, 1
    %v2121 = vrot.slane %v2116, 2
    %v2124 = vadd.f32 %v204, %v2120
    %v2125 = vadd.f32 %v209, %v2121
    %v2126 = vadd.f32 %v2124, %v408
    %v2127 = vadd.f32 %v2125, %v408
    %v2128 = vxor.u32 %v2126, 2147483648
    %v2129 = vxor.u32 %v2127, 2147483648
    %v2130 = vmul.f32 %v2128, 1.442695
    %v2131 = vpow.pop %v2130
    %v2132 = vmul.f32 %v2129, 1.442695
    %v2133 = vpow.pop %v2132
    %v2134 = vadd.f32 %v2131, 1.0
    %v2135 = vadd.f32 %v2133, 1.0
    %v2136 = vrcp.pop %v2134
    %v2137 = vmul.f32 1.0, %v2136
    %v2138 = vrcp.pop %v2135
    %v2139 = vmul.f32 1.0, %v2138
    %v2140 = vmul.f32 %v2036, %v2137
    %v2141 = vmul.f32 %v2043, %v2139
    %v2144 = vrot.slane %v2140, 7
    %v2145 = vrot.slane %v2141, 6
    %v2146 = vsel %vm101, %v2145, %v2144
    %v2147 = vsel %vm130, %v2146, 0
    %2149 = vmatprep.subr.mxu0 0.0
    %2150 = vmatpush1.msra.mxu0 %v69
    %2151 = vmatprep.subr.mxu0 0.0
    %2152 = vmatpush1.msra.mxu0 %v70
    %2153 = vmatprep.subr.mxu0 0.0
    %2154 = vmatpush1.msra.mxu0 %v71
    %2155 = vmatprep.subr.mxu0 0.0
    %2156 = vmatpush1.msra.mxu0 %v72
    %2157 = vmatprep.subr.mxu0 0.0
    %2158 = vmatpush1.msra.mxu0 0.0
    %2159 = vmatprep.subr.mxu0 0.0
    %2160 = vmatpush1.msra.mxu0 0.0
    %2161 = vmatprep.subr.mxu0 0.0
    %2162 = vmatpush1.msra.mxu0 0.0
    %2163 = vmatprep.subr.mxu0 0.0
    %2164 = vmatpush1.msra.mxu0 0.0
    %2165 = vmatprep.subr.mxu0 0.0
    %2166 = vmatpush1.msra.mxu0 0.0
    %2167 = vmatprep.subr.mxu0 0.0
    %2168 = vmatpush1.msra.mxu0 0.0
    %2169 = vmatprep.subr.mxu0 0.0
    %2170 = vmatpush1.msra.mxu0 0.0
    %2171 = vmatprep.subr.mxu0 0.0
    %2172 = vmatpush1.msra.mxu0 0.0
    %2173 = vmatprep.subr.mxu0 0.0
    %2174 = vmatpush1.msra.mxu0 0.0
    %2175 = vmatprep.subr.mxu0 0.0
    %2176 = vmatpush1.msra.mxu0 0.0
    %2177 = vmatprep.subr.mxu0 0.0
    %2178 = vmatpush1.msra.mxu0 0.0
    %2179 = vmatprep.subr.mxu0 0.0
    %2180 = vmatpush1.msra.mxu0 0.0
    %2181 = vmatprep.subr.mxu0 0.0
    %2182 = vmatpush1.msra.mxu0 0.0
    %2183 = vmatprep.subr.mxu0 0.0
    %2184 = vmatpush1.msra.mxu0 0.0
    %2185 = vmatprep.subr.mxu0 0.0
    %2186 = vmatpush1.msra.mxu0 0.0
    %2187 = vmatprep.subr.mxu0 0.0
    %2188 = vmatpush1.msra.mxu0 0.0
    %2189 = vmatprep.subr.mxu0 0.0
    %2190 = vmatpush1.msra.mxu0 0.0
    %2191 = vmatprep.subr.mxu0 0.0
    %2192 = vmatpush1.msra.mxu0 0.0
    %2193 = vmatprep.subr.mxu0 0.0
    %2194 = vmatpush1.msra.mxu0 0.0
    %2195 = vmatprep.subr.mxu0 0.0
    %2196 = vmatpush1.msra.mxu0 0.0
    %2197 = vmatprep.subr.mxu0 0.0
    %2198 = vmatpush1.msra.mxu0 0.0
    %2199 = vmatprep.subr.mxu0 0.0
    %2200 = vmatpush1.msra.mxu0 0.0
    %2201 = vmatprep.subr.mxu0 0.0
    %2202 = vmatpush1.msra.mxu0 0.0
    %2203 = vmatprep.subr.mxu0 0.0
    %2204 = vmatpush1.msra.mxu0 0.0
    %2205 = vmatprep.subr.mxu0 0.0
    %2206 = vmatpush1.msra.mxu0 0.0
    %2207 = vmatprep.subr.mxu0 0.0
    %2208 = vmatpush1.msra.mxu0 0.0
    %2209 = vmatprep.subr.mxu0 0.0
    %2210 = vmatpush1.msra.mxu0 0.0
    %2211 = vmatprep.subr.mxu0 0.0
    %2212 = vmatpush1.msra.mxu0 0.0
    %2213 = vmatprep.mubr.f32.mxu0 0.0
    %2214 = vmatmul.mubr.f32.gmra.mrb[0].mxu0 %v2147
    %v2215 = vpop.f32.mrb[0].mxu0
    %v2216 = vadd.f32 0.0, %v2215
    %v2217 = vpop.f32.mrb[0].mxu0
    %2218 = vdwg.mxu0
    %v2220 = vrot.slane %v2216, 1
    %v2221 = vrot.slane %v2216, 2
    %v2224 = vadd.f32 %v285, %v2220
    %v2225 = vadd.f32 %v290, %v2221
    %v2226 = vadd.f32 %v2224, %v512
    %v2227 = vadd.f32 %v2225, %v512
    %v2228 = vtanh.pop %v2226
    %v2229 = vtanh.pop %v2227
    %2230 = vrot.lane.b32.xlu0 %v2036, 32
    %v2231 = vpop.permute.xlu0 %2230
    %2232 = vrot.lane.b32.xlu0 %v2043, 32
    %v2233 = vpop.permute.xlu0 %2232
    %v2236 = vmul.f32 %v2137, %v2231
    %v2237 = vmul.f32 %v2139, %v2233
    %v2238 = vsub.f32 1.0, %v2137
    %v2239 = vsub.f32 1.0, %v2139
    %2242 = vrot.lane.b32.xlu0 %v2228, 32
    %v2243 = vpop.permute.xlu0 %2242
    %2244 = vrot.lane.b32.xlu0 %v2229, 32
    %v2245 = vpop.permute.xlu0 %2244
    %v2248 = vmul.f32 %v2238, %v2243
    %v2249 = vmul.f32 %v2239, %v2245
    %v2250 = vadd.f32 %v2236, %v2248
    %v2251 = vadd.f32 %v2237, %v2249
    %2254 = vrot.lane.b32.xlu0 %v2250, 96
    %v2255 = vpop.permute.xlu0 %2254
    %2256 = vrot.lane.b32.xlu0 %v2251, 96
    %v2257 = vpop.permute.xlu0 %2256
    %vm2260 = vcmask 261127
    %2261 = vst.msk [vmem:[#allocation2] sm:$0x80] %vm2260, %v2255
    %2262 = vst.msk [vmem:[#allocation2 + $0x8] sm:$0x80] %vm2260, %v2257
    %vm2263 = vcmp.eq.f32.partialorder %v77, 0.0
    %vm2264 = vcmp.eq.f32.partialorder %v80, 0.0
    %v2265 = vsel %vm2263, 1.0, 0.0
    %v2266 = vsel %vm2264, 1.0, 0.0
    %v2267 = vld [vmem:[%s2] sm:$0xff]
    %v2268 = vld [vmem:[%s2 + $0x8] sm:$0xff]
    %v2269 = vsub.f32 1.0, %v2267
    %v2270 = vsub.f32 1.0, %v2268
    %v2271 = vmul.f32 %v2265, %v2269
    %v2272 = vmul.f32 %v2266, %v2270
    %v2273 = vld [vmem:[#allocation2] sm:$0xff]
    %v2274 = vld [vmem:[#allocation2 + $0x8] sm:$0xff]
    %2276 = vset.pattern.permute.xlu0 0
    %2277 = vperm.xlu0 %2276, %v2271
    %v2278 = vpop.permute.xlu0 %2277
    %2281 = vset.pattern.permute.xlu0 0
    %2282 = vperm.xlu0 %2281, %v2272
    %v2283 = vpop.permute.xlu0 %2282
    %v2285 = vmul.f32 %v2273, %v2278
    %v2286 = vmul.f32 %v2274, %v2283
    %v2287 = vsel %vm130, %v2285, -inf
    %v2288 = vrot.slane %v2287, 4
    %v2289 = vmax.f32 %v2287, %v2288
    %v2290 = vrot.slane %v2289, 2
    %v2291 = vmax.f32 %v2289, %v2290
    %v2292 = vrot.slane %v2291, 1
    %v2293 = vmax.f32 %v2291, %v2292
    %v2294 = vsel %vm130, %v2286, -inf
    %v2295 = vrot.slane %v2294, 4
    %v2296 = vmax.f32 %v2294, %v2295
    %v2297 = vrot.slane %v2296, 2
    %v2298 = vmax.f32 %v2296, %v2297
    %v2299 = vrot.slane %v2298, 1
    %v2300 = vmax.f32 %v2298, %v2299
    %2301 = vst.msk [vmem:[%s11] sm:$0x1] %vm548, %v2293
    %2302 = vst.msk [vmem:[%s11 + $0x1] sm:$0x1] %vm548, %v2300
    // Predicated region
    $region50: #{_lambda_.4} parent=1 // pred_check
      _
    $region51: #{_lambda_.4} parent=1 // pred_check_branch
      %2304 = sbr.rel (0) target = $region53
    $region52: #{_lambda_.4} parent=1 // pred_region
      _
    $region53: #{_lambda_.4} parent=1 // pred_fallthru
      _
    // Predicated region
    $region54: #{_lambda_.4} parent=1 // pred_check
      _
    $region55: #{_lambda_.4} parent=1 // pred_check_branch
      %2306 = sbr.rel (0) target = $region57
    $region56: #{_lambda_.4} parent=1 // pred_region
      _
    $region57: #{_lambda_.4} parent=1 // pred_fallthru
      _
    %2307 = vsyncpa [#allocation4], 1

// kernel: _lambda_.5
$region0: #{_lambda_.5}
  #allocation0 [shape = 'u32[]', space=smem, size = 0x4, offset = 0x4, fixed_abs, tag = 'smem constant byte address 0x4 - core index']
  #allocation1 [shape = 'u32[144,128]{1,0:T(1,128)}', space=vmem, size = 0x12000, scoped, tag = 'internal scratch']
  #allocation2 [shape = 'f32[2,8,32]{2,1,0:T(8,128)}', space=vmem, size = 0x2000, scoped, tag = 'scratch operand']
  %s0 = inlined_call_operand.vmem [shape: f32[2,1,32], index: 0, kind: input, shape index: {}]
  %s1 = inlined_call_operand.vmem [shape: f32[2,8,1], index: 1, kind: input, shape index: {}]
  %s2 = inlined_call_operand.vmem [shape: f32[8,1], index: 2, kind: input, shape index: {}]
  %s3 = inlined_call_operand.vmem [shape: f32[2,8,8], index: 3, kind: input, shape index: {}]
  %s4 = inlined_call_operand.vmem [shape: f32[32,64], index: 4, kind: input, shape index: {}]
  %s5 = inlined_call_operand.vmem [shape: f32[1,64], index: 5, kind: input, shape index: {}]
  %s6 = inlined_call_operand.vmem [shape: f32[32,64], index: 6, kind: input, shape index: {}]
  %s7 = inlined_call_operand.vmem [shape: f32[1,64], index: 7, kind: input, shape index: {}]
  %s8 = inlined_call_operand.vmem [shape: f32[32,32], index: 8, kind: input, shape index: {}]
  %s9 = inlined_call_operand.vmem [shape: f32[1,32], index: 9, kind: input, shape index: {}]
  %s10 = inlined_call_operand.vmem [shape: f32[32,32], index: 10, kind: input, shape index: {}]
  %s11 = inlined_call_operand.vmem [shape: f32[1,32], index: 11, kind: input, shape index: {}]
  %s12 = inlined_call_operand.vmem [shape: f32[32,16], index: 12, kind: input, shape index: {}]
  %s13 = inlined_call_operand.hbm [shape: f32[2,8,16], index: 13, kind: output, shape index: {}]
  %s14 = sld [smem:[#allocation0]]
  $region62: #{_lambda_.5} parent=0
    _
  %s16 = ssub.s32 1, %s14
  %s17 = scalar_select 0, %s16, %s14
  $region1: #{_lambda_.5} parent=0
    #allocation3 [shape = 'u8[8192]{0}', space=vmem, size = 0x2000, scoped, tag = 'output window, operand 0, single buffered']
    #allocation4 [shape = 's32[1]{0}', space=sflag, size = 0x4, scoped, tag = 'scoped memory for _lambda_.5']
    %18 = vsyncpa [#allocation4], 0
    // Predicated region
    $region2: #{_lambda_.5} parent=1 // pred_check
      _
    $region3: #{_lambda_.5} parent=1 // pred_check_branch
      %20 = sbr.rel (0) target = $region5
    $region4: #{_lambda_.5} parent=1 // pred_region
      _
    $region5: #{_lambda_.5} parent=1 // pred_fallthru
      _
    // Predicated region
    $region6: #{_lambda_.5} parent=1 // pred_check
      _
    $region7: #{_lambda_.5} parent=1 // pred_check_branch
      %22 = sbr.rel (0) target = $region9
    $region8: #{_lambda_.5} parent=1 // pred_region
      _
    $region9: #{_lambda_.5} parent=1 // pred_fallthru
      _
    // Predicated region
    $region10: #{_lambda_.5} parent=1 // pred_check
      _
    $region11: #{_lambda_.5} parent=1 // pred_check_branch
      %24 = sbr.rel (0) target = $region13
    $region12: #{_lambda_.5} parent=1 // pred_region
      _
    $region13: #{_lambda_.5} parent=1 // pred_fallthru
      _
    // Predicated region
    $region14: #{_lambda_.5} parent=1 // pred_check
      _
    $region15: #{_lambda_.5} parent=1 // pred_check_branch
      %26 = sbr.rel (0) target = $region17
    $region16: #{_lambda_.5} parent=1 // pred_region
      _
    $region17: #{_lambda_.5} parent=1 // pred_fallthru
      _
    // Predicated region
    $region18: #{_lambda_.5} parent=1 // pred_check
      _
    $region19: #{_lambda_.5} parent=1 // pred_check_branch
      %28 = sbr.rel (0) target = $region21
    $region20: #{_lambda_.5} parent=1 // pred_region
      _
    $region21: #{_lambda_.5} parent=1 // pred_fallthru
      _
    // Predicated region
    $region22: #{_lambda_.5} parent=1 // pred_check
      _
    $region23: #{_lambda_.5} parent=1 // pred_check_branch
      %30 = sbr.rel (0) target = $region25
    $region24: #{_lambda_.5} parent=1 // pred_region
      _
    $region25: #{_lambda_.5} parent=1 // pred_fallthru
      _
    // Predicated region
    $region26: #{_lambda_.5} parent=1 // pred_check
      _
    $region27: #{_lambda_.5} parent=1 // pred_check_branch
      %32 = sbr.rel (0) target = $region29
    $region28: #{_lambda_.5} parent=1 // pred_region
      _
    $region29: #{_lambda_.5} parent=1 // pred_fallthru
      _
    // Predicated region
    $region30: #{_lambda_.5} parent=1 // pred_check
      _
    $region31: #{_lambda_.5} parent=1 // pred_check_branch
      %34 = sbr.rel (0) target = $region33
    $region32: #{_lambda_.5} parent=1 // pred_region
      _
    $region33: #{_lambda_.5} parent=1 // pred_fallthru
      _
    // Predicated region
    $region34: #{_lambda_.5} parent=1 // pred_check
      _
    $region35: #{_lambda_.5} parent=1 // pred_check_branch
      %36 = sbr.rel (0) target = $region37
    $region36: #{_lambda_.5} parent=1 // pred_region
      _
    $region37: #{_lambda_.5} parent=1 // pred_fallthru
      _
    // Predicated region
    $region38: #{_lambda_.5} parent=1 // pred_check
      _
    $region39: #{_lambda_.5} parent=1 // pred_check_branch
      %38 = sbr.rel (0) target = $region41
    $region40: #{_lambda_.5} parent=1 // pred_region
      _
    $region41: #{_lambda_.5} parent=1 // pred_fallthru
      _
    // Predicated region
    $region42: #{_lambda_.5} parent=1 // pred_check
      _
    $region43: #{_lambda_.5} parent=1 // pred_check_branch
      %40 = sbr.rel (0) target = $region45
    $region44: #{_lambda_.5} parent=1 // pred_region
      _
    $region45: #{_lambda_.5} parent=1 // pred_fallthru
      _
    // Predicated region
    $region46: #{_lambda_.5} parent=1 // pred_check
      _
    $region47: #{_lambda_.5} parent=1 // pred_check_branch
      %42 = sbr.rel (0) target = $region49
    $region48: #{_lambda_.5} parent=1 // pred_region
      _
    $region49: #{_lambda_.5} parent=1 // pred_fallthru
      _
    // Predicated region
    $region50: #{_lambda_.5} parent=1 // pred_check
      _
    $region51: #{_lambda_.5} parent=1 // pred_check_branch
      %44 = sbr.rel (0) target = $region53
    $region52: #{_lambda_.5} parent=1 // pred_region
      _
    $region53: #{_lambda_.5} parent=1 // pred_fallthru
      _
    %v45 = vld [vmem:[%s3] sm:$0xff]
    %v46 = vld [vmem:[%s3 + $0x8] sm:$0xff]
    %v47 = vld [vmem:[%s2] sm:$0xff]
    %v48 = vld [vmem:[%s1] sm:$0xff]
    %v49 = vld [vmem:[%s1 + $0x8] sm:$0xff]
    %v50 = vmul.f32 %v47, %v48
    %v51 = vmul.f32 %v47, %v49
    %v52 = vld [vmem:[%s0] sm:$0x1]
    %v53 = vld [vmem:[%s0 + $0x1] sm:$0x1]
    %v56 = vlaneseq
    %v57 = vshrl.u32 %v56, 7
    %v58 = vsub.s32 0, %v57
    %v59 = vrot.slane %v52, %v58
    %v60 = vlaneseq
    %v61 = vshrl.u32 %v60, 7
    %v62 = vsub.s32 0, %v61
    %v63 = vrot.slane %v53, %v62
    %67 = vset.pattern.permute.xlu0 0
    %68 = vperm.xlu0 %67, %v50
    %v69 = vpop.permute.xlu0 %68
    %72 = vset.pattern.permute.xlu0 0
    %73 = vperm.xlu0 %72, %v51
    %v74 = vpop.permute.xlu0 %73
    %v76 = vmul.f32 %v59, %v69
    %v77 = vmul.f32 %v63, %v74
    %v78 = vld [vmem:[%s4] sm:$0xff]
    %v79 = vld [vmem:[%s4 + $0x8] sm:$0xff]
    %v80 = vld [vmem:[%s4 + $0x10] sm:$0xff]
    %v81 = vld [vmem:[%s4 + $0x18] sm:$0xff]
    %v82 = vld [vmem:[%s5] sm:$0x1]
    %v83 = vld [vmem:[%s6] sm:$0xff]
    %v84 = vld [vmem:[%s6 + $0x8] sm:$0xff]
    %v85 = vld [vmem:[%s6 + $0x10] sm:$0xff]
    %v86 = vld [vmem:[%s6 + $0x18] sm:$0xff]
    %v87 = vld [vmem:[%s7] sm:$0x1]
    %v88 = vld [vmem:[%s8] sm:$0xff]
    %v89 = vld [vmem:[%s8 + $0x8] sm:$0xff]
    %v90 = vld [vmem:[%s8 + $0x10] sm:$0xff]
    %v91 = vld [vmem:[%s8 + $0x18] sm:$0xff]
    %v92 = vld [vmem:[%s9] sm:$0x1]
    %v93 = vld [vmem:[%s10] sm:$0xff]
    %v94 = vld [vmem:[%s10 + $0x8] sm:$0xff]
    %v95 = vld [vmem:[%s10 + $0x10] sm:$0xff]
    %v96 = vld [vmem:[%s10 + $0x18] sm:$0xff]
    %v97 = vld [vmem:[%s11] sm:$0x1]
    %vm98 = vcmask 64512
    %v99 = vsel %vm98, %v45, 0.0
    %100 = vadd.xlane.f32.xlu0 %v99
    %v101 = vpop.xlane.xlu0 %100
    %v102 = vsel %vm98, %v46, 0.0
    %103 = vadd.xlane.f32.xlu0 %v102
    %v104 = vpop.xlane.xlu0 %103
    %vm105 = vcmp.ne.f32.partialorder %v101, 0.0
    %vm106 = vcmp.ne.f32.partialorder %v104, 0.0
    %v107 = vrcp.pop %v101
    %v108 = vmul.f32 1.0, %v107
    %v109 = vrcp.pop %v104
    %v110 = vmul.f32 1.0, %v109
    %v111 = vsel %vm105, %v108, 0.0
    %v112 = vsel %vm106, %v110, 0.0
    %v115 = vlaneseq
    %v116 = vand.u32 %v115, 127
    %v117 = vlaneseq
    %v118 = vshrl.u32 %v117, 7
    %v119 = vsub.s32 %v116, %v118
    %v120 = vrot.slane %v111, %v119
    %v121 = vlaneseq
    %v122 = vshrl.u32 %v121, 7
    %v123 = vsub.s32 %v116, %v122
    %v124 = vrot.slane %v112, %v123
    %vm125 = vcmask 1041409
    %vm126 = vcmask 1042434
    %v127 = vsel %vm126, %v120, %v120
    %vm128 = vcmask 1043459
    %v129 = vsel %vm128, %v120, %v127
    %vm130 = vcmask 1044484
    %v131 = vsel %vm130, %v120, %v129
    %vm132 = vcmask 1045509
    %v133 = vsel %vm132, %v120, %v131
    %vm134 = vcmask 1046534
    %v135 = vsel %vm134, %v120, %v133
    %vm136 = vcmask 1047559
    %v137 = vsel %vm136, %v120, %v135
    %v138 = vsel %vm126, %v124, %v124
    %v139 = vsel %vm128, %v124, %v138
    %v140 = vsel %vm130, %v124, %v139
    %v141 = vsel %vm132, %v124, %v140
    %v142 = vsel %vm134, %v124, %v141
    %v143 = vsel %vm136, %v124, %v142
    %v146 = vmul.f32 %v45, %v137
    %v147 = vmul.f32 %v46, %v143
    %v149 = vlaneseq
    %v150 = vshrl.u32 %v149, 7
    %v151 = vsub.s32 0, %v150
    %v152 = vrot.slane %v82, %v151
    %vm154 = vcmask 261120
    %v156 = vsel %vm154, %v76, 0
    %v159 = vsel %vm154, %v77, 0
    %161 = vmatprep.subr.mxu0 0.0
    %162 = vmatpush1.msra.mxu0 %v78
    %163 = vmatprep.subr.mxu0 0.0
    %164 = vmatpush1.msra.mxu0 %v79
    %165 = vmatprep.subr.mxu0 0.0
    %166 = vmatpush1.msra.mxu0 %v80
    %167 = vmatprep.subr.mxu0 0.0
    %168 = vmatpush1.msra.mxu0 %v81
    %169 = vmatprep.subr.mxu0 0.0
    %170 = vmatpush1.msra.mxu0 0.0
    %171 = vmatprep.subr.mxu0 0.0
    %172 = vmatpush1.msra.mxu0 0.0
    %173 = vmatprep.subr.mxu0 0.0
    %174 = vmatpush1.msra.mxu0 0.0
    %175 = vmatprep.subr.mxu0 0.0
    %176 = vmatpush1.msra.mxu0 0.0
    %177 = vmatprep.subr.mxu0 0.0
    %178 = vmatpush1.msra.mxu0 0.0
    %179 = vmatprep.subr.mxu0 0.0
    %180 = vmatpush1.msra.mxu0 0.0
    %181 = vmatprep.subr.mxu0 0.0
    %182 = vmatpush1.msra.mxu0 0.0
    %183 = vmatprep.subr.mxu0 0.0
    %184 = vmatpush1.msra.mxu0 0.0
    %185 = vmatprep.subr.mxu0 0.0
    %186 = vmatpush1.msra.mxu0 0.0
    %187 = vmatprep.subr.mxu0 0.0
    %188 = vmatpush1.msra.mxu0 0.0
    %189 = vmatprep.subr.mxu0 0.0
    %190 = vmatpush1.msra.mxu0 0.0
    %191 = vmatprep.subr.mxu0 0.0
    %192 = vmatpush1.msra.mxu0 0.0
    %193 = vmatprep.subr.mxu0 0.0
    %194 = vmatpush1.msra.mxu0 0.0
    %195 = vmatprep.subr.mxu0 0.0
    %196 = vmatpush1.msra.mxu0 0.0
    %197 = vmatprep.subr.mxu0 0.0
    %198 = vmatpush1.msra.mxu0 0.0
    %199 = vmatprep.subr.mxu0 0.0
    %200 = vmatpush1.msra.mxu0 0.0
    %201 = vmatprep.subr.mxu0 0.0
    %202 = vmatpush1.msra.mxu0 0.0
    %203 = vmatprep.subr.mxu0 0.0
    %204 = vmatpush1.msra.mxu0 0.0
    %205 = vmatprep.subr.mxu0 0.0
    %206 = vmatpush1.msra.mxu0 0.0
    %207 = vmatprep.subr.mxu0 0.0
    %208 = vmatpush1.msra.mxu0 0.0
    %209 = vmatprep.subr.mxu0 0.0
    %210 = vmatpush1.msra.mxu0 0.0
    %211 = vmatprep.subr.mxu0 0.0
    %212 = vmatpush1.msra.mxu0 0.0
    %213 = vmatprep.subr.mxu0 0.0
    %214 = vmatpush1.msra.mxu0 0.0
    %215 = vmatprep.subr.mxu0 0.0
    %216 = vmatpush1.msra.mxu0 0.0
    %217 = vmatprep.subr.mxu0 0.0
    %218 = vmatpush1.msra.mxu0 0.0
    %219 = vmatprep.subr.mxu0 0.0
    %220 = vmatpush1.msra.mxu0 0.0
    %221 = vmatprep.subr.mxu0 0.0
    %222 = vmatpush1.msra.mxu0 0.0
    %223 = vmatprep.subr.mxu0 0.0
    %224 = vmatpush1.msra.mxu0 0.0
    %225 = vmatprep.mubr.f32.mxu0 0.0
    %226 = vmatmul.mubr.f32.gmra.mrb[0].mxu0 %v156
    %v227 = vpop.f32.mrb[0].mxu0
    %v228 = vadd.f32 %v152, %v227
    %v229 = vpop.f32.mrb[0].mxu0
    %230 = vmatprep.mubr.f32.mxu0 0.0
    %231 = vmatmul.mubr.f32.gmra.mrb[0].mxu0 %v159
    %v232 = vpop.f32.mrb[0].mxu0
    %v233 = vadd.f32 %v152, %v232
    %v234 = vpop.f32.mrb[0].mxu0
    %235 = vdwg.mxu0
    %v237 = vlaneseq
    %v238 = vshrl.u32 %v237, 7
    %v239 = vsub.s32 0, %v238
    %v240 = vrot.slane %v92, %v239
    %242 = vmatprep.subr.mxu0 0.0
    %243 = vmatpush1.msra.mxu0 %v88
    %244 = vmatprep.subr.mxu0 0.0
    %245 = vmatpush1.msra.mxu0 %v89
    %246 = vmatprep.subr.mxu0 0.0
    %247 = vmatpush1.msra.mxu0 %v90
    %248 = vmatprep.subr.mxu0 0.0
    %249 = vmatpush1.msra.mxu0 %v91
    %250 = vmatprep.subr.mxu0 0.0
    %251 = vmatpush1.msra.mxu0 0.0
    %252 = vmatprep.subr.mxu0 0.0
    %253 = vmatpush1.msra.mxu0 0.0
    %254 = vmatprep.subr.mxu0 0.0
    %255 = vmatpush1.msra.mxu0 0.0
    %256 = vmatprep.subr.mxu0 0.0
    %257 = vmatpush1.msra.mxu0 0.0
    %258 = vmatprep.subr.mxu0 0.0
    %259 = vmatpush1.msra.mxu0 0.0
    %260 = vmatprep.subr.mxu0 0.0
    %261 = vmatpush1.msra.mxu0 0.0
    %262 = vmatprep.subr.mxu0 0.0
    %263 = vmatpush1.msra.mxu0 0.0
    %264 = vmatprep.subr.mxu0 0.0
    %265 = vmatpush1.msra.mxu0 0.0
    %266 = vmatprep.subr.mxu0 0.0
    %267 = vmatpush1.msra.mxu0 0.0
    %268 = vmatprep.subr.mxu0 0.0
    %269 = vmatpush1.msra.mxu0 0.0
    %270 = vmatprep.subr.mxu0 0.0
    %271 = vmatpush1.msra.mxu0 0.0
    %272 = vmatprep.subr.mxu0 0.0
    %273 = vmatpush1.msra.mxu0 0.0
    %274 = vmatprep.subr.mxu0 0.0
    %275 = vmatpush1.msra.mxu0 0.0
    %276 = vmatprep.subr.mxu0 0.0
    %277 = vmatpush1.msra.mxu0 0.0
    %278 = vmatprep.subr.mxu0 0.0
    %279 = vmatpush1.msra.mxu0 0.0
    %280 = vmatprep.subr.mxu0 0.0
    %281 = vmatpush1.msra.mxu0 0.0
    %282 = vmatprep.subr.mxu0 0.0
    %283 = vmatpush1.msra.mxu0 0.0
    %284 = vmatprep.subr.mxu0 0.0
    %285 = vmatpush1.msra.mxu0 0.0
    %286 = vmatprep.subr.mxu0 0.0
    %287 = vmatpush1.msra.mxu0 0.0
    %288 = vmatprep.subr.mxu0 0.0
    %289 = vmatpush1.msra.mxu0 0.0
    %290 = vmatprep.subr.mxu0 0.0
    %291 = vmatpush1.msra.mxu0 0.0
    %292 = vmatprep.subr.mxu0 0.0
    %293 = vmatpush1.msra.mxu0 0.0
    %294 = vmatprep.subr.mxu0 0.0
    %295 = vmatpush1.msra.mxu0 0.0
    %296 = vmatprep.subr.mxu0 0.0
    %297 = vmatpush1.msra.mxu0 0.0
    %298 = vmatprep.subr.mxu0 0.0
    %299 = vmatpush1.msra.mxu0 0.0
    %300 = vmatprep.subr.mxu0 0.0
    %301 = vmatpush1.msra.mxu0 0.0
    %302 = vmatprep.subr.mxu0 0.0
    %303 = vmatpush1.msra.mxu0 0.0
    %304 = vmatprep.subr.mxu0 0.0
    %305 = vmatpush1.msra.mxu0 0.0
    %306 = vmatprep.mubr.f32.mxu0 0.0
    %307 = vmatmul.mubr.f32.gmra.mrb[0].mxu0 %v156
    %v308 = vpop.f32.mrb[0].mxu0
    %v309 = vadd.f32 %v240, %v308
    %v310 = vpop.f32.mrb[0].mxu0
    %311 = vmatprep.mubr.f32.mxu0 0.0
    %312 = vmatmul.mubr.f32.gmra.mrb[0].mxu0 %v159
    %v313 = vpop.f32.mrb[0].mxu0
    %v314 = vadd.f32 %v240, %v313
    %v315 = vpop.f32.mrb[0].mxu0
    %316 = vdwg.mxu0
    %317 = vst.msk [vmem:[#allocation2] sm:$0xff] %vm154, %v76
    %318 = vst.msk [vmem:[#allocation2 + $0x8] sm:$0xff] %vm154, %v77
    %v319 = vld [vmem:[#allocation2] sm:$0xff]
    %v320 = vld [vmem:[#allocation2 + $0x8] sm:$0xff]
    %322 = vset.pattern.permute.xlu0 0
    %323 = vperm.xlu0 %322, %v146
    %v324 = vpop.permute.xlu0 %323
    %327 = vset.pattern.permute.xlu0 0
    %328 = vperm.xlu0 %327, %v147
    %v329 = vpop.permute.xlu0 %328
    %v331 = vmul.f32 %v324, %v319
    %v332 = vmul.f32 %v329, %v320
    %v333 = vsel %vm154, %v331, 0.0
    %v334 = vrot.slane %v333, 4
    %v335 = vadd.f32 %v333, %v334
    %v336 = vrot.slane %v335, 2
    %v337 = vadd.f32 %v335, %v336
    %v338 = vrot.slane %v337, 1
    %v339 = vadd.f32 %v337, %v338
    %v340 = vsel %vm154, %v332, 0.0
    %v341 = vrot.slane %v340, 4
    %v342 = vadd.f32 %v340, %v341
    %v343 = vrot.slane %v342, 2
    %v344 = vadd.f32 %v342, %v343
    %v345 = vrot.slane %v344, 1
    %v346 = vadd.f32 %v344, %v345
    %v349 = vsel %vm125, %v346, %v339
    %v350 = vsel %vm154, %v349, 0
    %352 = vmatprep.subr.mxu0 0.0
    %353 = vmatpush1.msra.mxu0 %v83
    %354 = vmatprep.subr.mxu0 0.0
    %355 = vmatpush1.msra.mxu0 %v84
    %356 = vmatprep.subr.mxu0 0.0
    %357 = vmatpush1.msra.mxu0 %v85
    %358 = vmatprep.subr.mxu0 0.0
    %359 = vmatpush1.msra.mxu0 %v86
    %360 = vmatprep.subr.mxu0 0.0
    %361 = vmatpush1.msra.mxu0 0.0
    %362 = vmatprep.subr.mxu0 0.0
    %363 = vmatpush1.msra.mxu0 0.0
    %364 = vmatprep.subr.mxu0 0.0
    %365 = vmatpush1.msra.mxu0 0.0
    %366 = vmatprep.subr.mxu0 0.0
    %367 = vmatpush1.msra.mxu0 0.0
    %368 = vmatprep.subr.mxu0 0.0
    %369 = vmatpush1.msra.mxu0 0.0
    %370 = vmatprep.subr.mxu0 0.0
    %371 = vmatpush1.msra.mxu0 0.0
    %372 = vmatprep.subr.mxu0 0.0
    %373 = vmatpush1.msra.mxu0 0.0
    %374 = vmatprep.subr.mxu0 0.0
    %375 = vmatpush1.msra.mxu0 0.0
    %376 = vmatprep.subr.mxu0 0.0
    %377 = vmatpush1.msra.mxu0 0.0
    %378 = vmatprep.subr.mxu0 0.0
    %379 = vmatpush1.msra.mxu0 0.0
    %380 = vmatprep.subr.mxu0 0.0
    %381 = vmatpush1.msra.mxu0 0.0
    %382 = vmatprep.subr.mxu0 0.0
    %383 = vmatpush1.msra.mxu0 0.0
    %384 = vmatprep.subr.mxu0 0.0
    %385 = vmatpush1.msra.mxu0 0.0
    %386 = vmatprep.subr.mxu0 0.0
    %387 = vmatpush1.msra.mxu0 0.0
    %388 = vmatprep.subr.mxu0 0.0
    %389 = vmatpush1.msra.mxu0 0.0
    %390 = vmatprep.subr.mxu0 0.0
    %391 = vmatpush1.msra.mxu0 0.0
    %392 = vmatprep.subr.mxu0 0.0
    %393 = vmatpush1.msra.mxu0 0.0
    %394 = vmatprep.subr.mxu0 0.0
    %395 = vmatpush1.msra.mxu0 0.0
    %396 = vmatprep.subr.mxu0 0.0
    %397 = vmatpush1.msra.mxu0 0.0
    %398 = vmatprep.subr.mxu0 0.0
    %399 = vmatpush1.msra.mxu0 0.0
    %400 = vmatprep.subr.mxu0 0.0
    %401 = vmatpush1.msra.mxu0 0.0
    %402 = vmatprep.subr.mxu0 0.0
    %403 = vmatpush1.msra.mxu0 0.0
    %404 = vmatprep.subr.mxu0 0.0
    %405 = vmatpush1.msra.mxu0 0.0
    %406 = vmatprep.subr.mxu0 0.0
    %407 = vmatpush1.msra.mxu0 0.0
    %408 = vmatprep.subr.mxu0 0.0
    %409 = vmatpush1.msra.mxu0 0.0
    %410 = vmatprep.subr.mxu0 0.0
    %411 = vmatpush1.msra.mxu0 0.0
    %412 = vmatprep.subr.mxu0 0.0
    %413 = vmatpush1.msra.mxu0 0.0
    %414 = vmatprep.subr.mxu0 0.0
    %415 = vmatpush1.msra.mxu0 0.0
    %416 = vmatprep.mubr.f32.mxu0 0.0
    %417 = vmatmul.mubr.f32.gmra.mrb[0].mxu0 %v350
    %v418 = vpop.f32.mrb[0].mxu0
    %v419 = vadd.f32 0.0, %v418
    %v420 = vpop.f32.mrb[0].mxu0
    %421 = vdwg.mxu0
    %v423 = vrot.slane %v419, 1
    %v426 = vadd.f32 %v228, %v419
    %v427 = vadd.f32 %v233, %v423
    %v429 = vlaneseq
    %v430 = vshrl.u32 %v429, 7
    %v431 = vsub.s32 0, %v430
    %v432 = vrot.slane %v87, %v431
    %v434 = vadd.f32 %v426, %v432
    %v435 = vadd.f32 %v427, %v432
    %v436 = vxor.u32 %v434, 2147483648
    %v437 = vxor.u32 %v435, 2147483648
    %v438 = vmul.f32 %v436, 1.442695
    %v439 = vpow.pop %v438
    %v440 = vmul.f32 %v437, 1.442695
    %v441 = vpow.pop %v440
    %v442 = vadd.f32 %v439, 1.0
    %v443 = vadd.f32 %v441, 1.0
    %v444 = vrcp.pop %v442
    %v445 = vmul.f32 1.0, %v444
    %v446 = vrcp.pop %v443
    %v447 = vmul.f32 1.0, %v446
    %v448 = vmul.f32 %v339, %v445
    %v449 = vmul.f32 %v346, %v447
    %v452 = vrot.slane %v449, 7
    %v453 = vsel %vm125, %v452, %v448
    %v454 = vsel %vm154, %v453, 0
    %456 = vmatprep.subr.mxu0 0.0
    %457 = vmatpush1.msra.mxu0 %v93
    %458 = vmatprep.subr.mxu0 0.0
    %459 = vmatpush1.msra.mxu0 %v94
    %460 = vmatprep.subr.mxu0 0.0
    %461 = vmatpush1.msra.mxu0 %v95
    %462 = vmatprep.subr.mxu0 0.0
    %463 = vmatpush1.msra.mxu0 %v96
    %464 = vmatprep.subr.mxu0 0.0
    %465 = vmatpush1.msra.mxu0 0.0
    %466 = vmatprep.subr.mxu0 0.0
    %467 = vmatpush1.msra.mxu0 0.0
    %468 = vmatprep.subr.mxu0 0.0
    %469 = vmatpush1.msra.mxu0 0.0
    %470 = vmatprep.subr.mxu0 0.0
    %471 = vmatpush1.msra.mxu0 0.0
    %472 = vmatprep.subr.mxu0 0.0
    %473 = vmatpush1.msra.mxu0 0.0
    %474 = vmatprep.subr.mxu0 0.0
    %475 = vmatpush1.msra.mxu0 0.0
    %476 = vmatprep.subr.mxu0 0.0
    %477 = vmatpush1.msra.mxu0 0.0
    %478 = vmatprep.subr.mxu0 0.0
    %479 = vmatpush1.msra.mxu0 0.0
    %480 = vmatprep.subr.mxu0 0.0
    %481 = vmatpush1.msra.mxu0 0.0
    %482 = vmatprep.subr.mxu0 0.0
    %483 = vmatpush1.msra.mxu0 0.0
    %484 = vmatprep.subr.mxu0 0.0
    %485 = vmatpush1.msra.mxu0 0.0
    %486 = vmatprep.subr.mxu0 0.0
    %487 = vmatpush1.msra.mxu0 0.0
    %488 = vmatprep.subr.mxu0 0.0
    %489 = vmatpush1.msra.mxu0 0.0
    %490 = vmatprep.subr.mxu0 0.0
    %491 = vmatpush1.msra.mxu0 0.0
    %492 = vmatprep.subr.mxu0 0.0
    %493 = vmatpush1.msra.mxu0 0.0
    %494 = vmatprep.subr.mxu0 0.0
    %495 = vmatpush1.msra.mxu0 0.0
    %496 = vmatprep.subr.mxu0 0.0
    %497 = vmatpush1.msra.mxu0 0.0
    %498 = vmatprep.subr.mxu0 0.0
    %499 = vmatpush1.msra.mxu0 0.0
    %500 = vmatprep.subr.mxu0 0.0
    %501 = vmatpush1.msra.mxu0 0.0
    %502 = vmatprep.subr.mxu0 0.0
    %503 = vmatpush1.msra.mxu0 0.0
    %504 = vmatprep.subr.mxu0 0.0
    %505 = vmatpush1.msra.mxu0 0.0
    %506 = vmatprep.subr.mxu0 0.0
    %507 = vmatpush1.msra.mxu0 0.0
    %508 = vmatprep.subr.mxu0 0.0
    %509 = vmatpush1.msra.mxu0 0.0
    %510 = vmatprep.subr.mxu0 0.0
    %511 = vmatpush1.msra.mxu0 0.0
    %512 = vmatprep.subr.mxu0 0.0
    %513 = vmatpush1.msra.mxu0 0.0
    %514 = vmatprep.subr.mxu0 0.0
    %515 = vmatpush1.msra.mxu0 0.0
    %516 = vmatprep.subr.mxu0 0.0
    %517 = vmatpush1.msra.mxu0 0.0
    %518 = vmatprep.subr.mxu0 0.0
    %519 = vmatpush1.msra.mxu0 0.0
    %520 = vmatprep.mubr.f32.mxu0 0.0
    %521 = vmatmul.mubr.f32.gmra.mrb[0].mxu0 %v454
    %v522 = vpop.f32.mrb[0].mxu0
    %v523 = vadd.f32 0.0, %v522
    %v524 = vpop.f32.mrb[0].mxu0
    %525 = vdwg.mxu0
    %v527 = vrot.slane %v523, 1
    %v530 = vadd.f32 %v309, %v523
    %v531 = vadd.f32 %v314, %v527
    %v533 = vlaneseq
    %v534 = vshrl.u32 %v533, 7
    %v535 = vsub.s32 0, %v534
    %v536 = vrot.slane %v97, %v535
    %v538 = vadd.f32 %v530, %v536
    %v539 = vadd.f32 %v531, %v536
    %v540 = vtanh.pop %v538
    %v541 = vtanh.pop %v539
    %542 = vrot.lane.b32.xlu0 %v339, 32
    %v543 = vpop.permute.xlu0 %542
    %544 = vrot.lane.b32.xlu0 %v346, 32
    %v545 = vpop.permute.xlu0 %544
    %v548 = vmul.f32 %v445, %v543
    %v549 = vmul.f32 %v447, %v545
    %v550 = vsub.f32 1.0, %v445
    %v551 = vsub.f32 1.0, %v447
    %554 = vrot.lane.b32.xlu0 %v540, 32
    %v555 = vpop.permute.xlu0 %554
    %556 = vrot.lane.b32.xlu0 %v541, 32
    %v557 = vpop.permute.xlu0 %556
    %v560 = vmul.f32 %v550, %v555
    %v561 = vmul.f32 %v551, %v557
    %v562 = vadd.f32 %v548, %v560
    %v563 = vadd.f32 %v549, %v561
    %566 = vrot.lane.b32.xlu0 %v562, 96
    %v567 = vpop.permute.xlu0 %566
    %568 = vrot.lane.b32.xlu0 %v563, 96
    %v569 = vpop.permute.xlu0 %568
    %vm572 = vcmask 253952
    %573 = vst.msk [vmem:[#allocation2] sm:$0x1] %vm572, %v567
    %574 = vst.msk [vmem:[#allocation2 + $0x8] sm:$0x1] %vm572, %v569
    %v575 = vld [vmem:[#allocation2] sm:$0xff]
    %v576 = vld [vmem:[#allocation2 + $0x8] sm:$0xff]
    %577 = vset.pattern.permute.xlu0 1
    %578 = vperm.xlu0 %577, %v146
    %v579 = vpop.permute.xlu0 %578
    %581 = vset.pattern.permute.xlu0 1
    %582 = vperm.xlu0 %581, %v147
    %v583 = vpop.permute.xlu0 %582
    %v585 = vmul.f32 %v579, %v575
    %v586 = vmul.f32 %v583, %v576
    %v587 = vsel %vm154, %v585, 0.0
    %v588 = vrot.slane %v587, 4
    %v589 = vadd.f32 %v587, %v588
    %v590 = vrot.slane %v589, 2
    %v591 = vadd.f32 %v589, %v590
    %v592 = vrot.slane %v591, 1
    %v593 = vadd.f32 %v591, %v592
    %v594 = vsel %vm154, %v586, 0.0
    %v595 = vrot.slane %v594, 4
    %v596 = vadd.f32 %v594, %v595
    %v597 = vrot.slane %v596, 2
    %v598 = vadd.f32 %v596, %v597
    %v599 = vrot.slane %v598, 1
    %v600 = vadd.f32 %v598, %v599
    %v603 = vsel %vm125, %v600, %v593
    %v604 = vsel %vm154, %v603, 0
    %606 = vmatprep.subr.mxu0 0.0
    %607 = vmatpush1.msra.mxu0 %v83
    %608 = vmatprep.subr.mxu0 0.0
    %609 = vmatpush1.msra.mxu0 %v84
    %610 = vmatprep.subr.mxu0 0.0
    %611 = vmatpush1.msra.mxu0 %v85
    %612 = vmatprep.subr.mxu0 0.0
    %613 = vmatpush1.msra.mxu0 %v86
    %614 = vmatprep.subr.mxu0 0.0
    %615 = vmatpush1.msra.mxu0 0.0
    %616 = vmatprep.subr.mxu0 0.0
    %617 = vmatpush1.msra.mxu0 0.0
    %618 = vmatprep.subr.mxu0 0.0
    %619 = vmatpush1.msra.mxu0 0.0
    %620 = vmatprep.subr.mxu0 0.0
    %621 = vmatpush1.msra.mxu0 0.0
    %622 = vmatprep.subr.mxu0 0.0
    %623 = vmatpush1.msra.mxu0 0.0
    %624 = vmatprep.subr.mxu0 0.0
    %625 = vmatpush1.msra.mxu0 0.0
    %626 = vmatprep.subr.mxu0 0.0
    %627 = vmatpush1.msra.mxu0 0.0
    %628 = vmatprep.subr.mxu0 0.0
    %629 = vmatpush1.msra.mxu0 0.0
    %630 = vmatprep.subr.mxu0 0.0
    %631 = vmatpush1.msra.mxu0 0.0
    %632 = vmatprep.subr.mxu0 0.0
    %633 = vmatpush1.msra.mxu0 0.0
    %634 = vmatprep.subr.mxu0 0.0
    %635 = vmatpush1.msra.mxu0 0.0
    %636 = vmatprep.subr.mxu0 0.0
    %637 = vmatpush1.msra.mxu0 0.0
    %638 = vmatprep.subr.mxu0 0.0
    %639 = vmatpush1.msra.mxu0 0.0
    %640 = vmatprep.subr.mxu0 0.0
    %641 = vmatpush1.msra.mxu0 0.0
    %642 = vmatprep.subr.mxu0 0.0
    %643 = vmatpush1.msra.mxu0 0.0
    %644 = vmatprep.subr.mxu0 0.0
    %645 = vmatpush1.msra.mxu0 0.0
    %646 = vmatprep.subr.mxu0 0.0
    %647 = vmatpush1.msra.mxu0 0.0
    %648 = vmatprep.subr.mxu0 0.0
    %649 = vmatpush1.msra.mxu0 0.0
    %650 = vmatprep.subr.mxu0 0.0
    %651 = vmatpush1.msra.mxu0 0.0
    %652 = vmatprep.subr.mxu0 0.0
    %653 = vmatpush1.msra.mxu0 0.0
    %654 = vmatprep.subr.mxu0 0.0
    %655 = vmatpush1.msra.mxu0 0.0
    %656 = vmatprep.subr.mxu0 0.0
    %657 = vmatpush1.msra.mxu0 0.0
    %658 = vmatprep.subr.mxu0 0.0
    %659 = vmatpush1.msra.mxu0 0.0
    %660 = vmatprep.subr.mxu0 0.0
    %661 = vmatpush1.msra.mxu0 0.0
    %662 = vmatprep.subr.mxu0 0.0
    %663 = vmatpush1.msra.mxu0 0.0
    %664 = vmatprep.subr.mxu0 0.0
    %665 = vmatpush1.msra.mxu0 0.0
    %666 = vmatprep.subr.mxu0 0.0
    %667 = vmatpush1.msra.mxu0 0.0
    %668 = vmatprep.subr.mxu0 0.0
    %669 = vmatpush1.msra.mxu0 0.0
    %670 = vmatprep.mubr.f32.mxu0 0.0
    %671 = vmatmul.mubr.f32.gmra.mrb[0].mxu0 %v604
    %v672 = vpop.f32.mrb[0].mxu0
    %v673 = vadd.f32 0.0, %v672
    %v674 = vpop.f32.mrb[0].mxu0
    %675 = vdwg.mxu0
    %v677 = vrot.slane %v673, 7
    %v680 = vadd.f32 %v228, %v677
    %v681 = vadd.f32 %v233, %v673
    %v682 = vadd.f32 %v680, %v432
    %v683 = vadd.f32 %v681, %v432
    %v684 = vxor.u32 %v682, 2147483648
    %v685 = vxor.u32 %v683, 2147483648
    %v686 = vmul.f32 %v684, 1.442695
    %v687 = vpow.pop %v686
    %v688 = vmul.f32 %v685, 1.442695
    %v689 = vpow.pop %v688
    %v690 = vadd.f32 %v687, 1.0
    %v691 = vadd.f32 %v689, 1.0
    %v692 = vrcp.pop %v690
    %v693 = vmul.f32 1.0, %v692
    %v694 = vrcp.pop %v691
    %v695 = vmul.f32 1.0, %v694
    %v696 = vmul.f32 %v593, %v693
    %v697 = vmul.f32 %v600, %v695
    %v700 = vrot.slane %v696, 1
    %v701 = vsel %vm125, %v697, %v700
    %v702 = vsel %vm154, %v701, 0
    %704 = vmatprep.subr.mxu0 0.0
    %705 = vmatpush1.msra.mxu0 %v93
    %706 = vmatprep.subr.mxu0 0.0
    %707 = vmatpush1.msra.mxu0 %v94
    %708 = vmatprep.subr.mxu0 0.0
    %709 = vmatpush1.msra.mxu0 %v95
    %710 = vmatprep.subr.mxu0 0.0
    %711 = vmatpush1.msra.mxu0 %v96
    %712 = vmatprep.subr.mxu0 0.0
    %713 = vmatpush1.msra.mxu0 0.0
    %714 = vmatprep.subr.mxu0 0.0
    %715 = vmatpush1.msra.mxu0 0.0
    %716 = vmatprep.subr.mxu0 0.0
    %717 = vmatpush1.msra.mxu0 0.0
    %718 = vmatprep.subr.mxu0 0.0
    %719 = vmatpush1.msra.mxu0 0.0
    %720 = vmatprep.subr.mxu0 0.0
    %721 = vmatpush1.msra.mxu0 0.0
    %722 = vmatprep.subr.mxu0 0.0
    %723 = vmatpush1.msra.mxu0 0.0
    %724 = vmatprep.subr.mxu0 0.0
    %725 = vmatpush1.msra.mxu0 0.0
    %726 = vmatprep.subr.mxu0 0.0
    %727 = vmatpush1.msra.mxu0 0.0
    %728 = vmatprep.subr.mxu0 0.0
    %729 = vmatpush1.msra.mxu0 0.0
    %730 = vmatprep.subr.mxu0 0.0
    %731 = vmatpush1.msra.mxu0 0.0
    %732 = vmatprep.subr.mxu0 0.0
    %733 = vmatpush1.msra.mxu0 0.0
    %734 = vmatprep.subr.mxu0 0.0
    %735 = vmatpush1.msra.mxu0 0.0
    %736 = vmatprep.subr.mxu0 0.0
    %737 = vmatpush1.msra.mxu0 0.0
    %738 = vmatprep.subr.mxu0 0.0
    %739 = vmatpush1.msra.mxu0 0.0
    %740 = vmatprep.subr.mxu0 0.0
    %741 = vmatpush1.msra.mxu0 0.0
    %742 = vmatprep.subr.mxu0 0.0
    %743 = vmatpush1.msra.mxu0 0.0
    %744 = vmatprep.subr.mxu0 0.0
    %745 = vmatpush1.msra.mxu0 0.0
    %746 = vmatprep.subr.mxu0 0.0
    %747 = vmatpush1.msra.mxu0 0.0
    %748 = vmatprep.subr.mxu0 0.0
    %749 = vmatpush1.msra.mxu0 0.0
    %750 = vmatprep.subr.mxu0 0.0
    %751 = vmatpush1.msra.mxu0 0.0
    %752 = vmatprep.subr.mxu0 0.0
    %753 = vmatpush1.msra.mxu0 0.0
    %754 = vmatprep.subr.mxu0 0.0
    %755 = vmatpush1.msra.mxu0 0.0
    %756 = vmatprep.subr.mxu0 0.0
    %757 = vmatpush1.msra.mxu0 0.0
    %758 = vmatprep.subr.mxu0 0.0
    %759 = vmatpush1.msra.mxu0 0.0
    %760 = vmatprep.subr.mxu0 0.0
    %761 = vmatpush1.msra.mxu0 0.0
    %762 = vmatprep.subr.mxu0 0.0
    %763 = vmatpush1.msra.mxu0 0.0
    %764 = vmatprep.subr.mxu0 0.0
    %765 = vmatpush1.msra.mxu0 0.0
    %766 = vmatprep.subr.mxu0 0.0
    %767 = vmatpush1.msra.mxu0 0.0
    %768 = vmatprep.mubr.f32.mxu0 0.0
    %769 = vmatmul.mubr.f32.gmra.mrb[0].mxu0 %v702
    %v770 = vpop.f32.mrb[0].mxu0
    %v771 = vadd.f32 0.0, %v770
    %v772 = vpop.f32.mrb[0].mxu0
    %773 = vdwg.mxu0
    %v775 = vrot.slane %v771, 7
    %v778 = vadd.f32 %v309, %v775
    %v779 = vadd.f32 %v314, %v771
    %v780 = vadd.f32 %v778, %v536
    %v781 = vadd.f32 %v779, %v536
    %v782 = vtanh.pop %v780
    %v783 = vtanh.pop %v781
    %784 = vrot.lane.b32.xlu0 %v593, 32
    %v785 = vpop.permute.xlu0 %784
    %786 = vrot.lane.b32.xlu0 %v600, 32
    %v787 = vpop.permute.xlu0 %786
    %v790 = vmul.f32 %v693, %v785
    %v791 = vmul.f32 %v695, %v787
    %v792 = vsub.f32 1.0, %v693
    %v793 = vsub.f32 1.0, %v695
    %796 = vrot.lane.b32.xlu0 %v782, 32
    %v797 = vpop.permute.xlu0 %796
    %798 = vrot.lane.b32.xlu0 %v783, 32
    %v799 = vpop.permute.xlu0 %798
    %v802 = vmul.f32 %v792, %v797
    %v803 = vmul.f32 %v793, %v799
    %v804 = vadd.f32 %v790, %v802
    %v805 = vadd.f32 %v791, %v803
    %808 = vrot.lane.b32.xlu0 %v804, 96
    %v809 = vpop.permute.xlu0 %808
    %810 = vrot.lane.b32.xlu0 %v805, 96
    %v811 = vpop.permute.xlu0 %810
    %vm814 = vcmask 254977
    %815 = vst.msk [vmem:[#allocation2] sm:$0x2] %vm814, %v809
    %816 = vst.msk [vmem:[#allocation2 + $0x8] sm:$0x2] %vm814, %v811
    %v817 = vld [vmem:[#allocation2] sm:$0xff]
    %v818 = vld [vmem:[#allocation2 + $0x8] sm:$0xff]
    %819 = vset.pattern.permute.xlu0 2
    %820 = vperm.xlu0 %819, %v146
    %v821 = vpop.permute.xlu0 %820
    %823 = vset.pattern.permute.xlu0 2
    %824 = vperm.xlu0 %823, %v147
    %v825 = vpop.permute.xlu0 %824
    %v827 = vmul.f32 %v821, %v817
    %v828 = vmul.f32 %v825, %v818
    %v829 = vsel %vm154, %v827, 0.0
    %v830 = vrot.slane %v829, 4
    %v831 = vadd.f32 %v829, %v830
    %v832 = vrot.slane %v831, 2
    %v833 = vadd.f32 %v831, %v832
    %v834 = vrot.slane %v833, 1
    %v835 = vadd.f32 %v833, %v834
    %v836 = vsel %vm154, %v828, 0.0
    %v837 = vrot.slane %v836, 4
    %v838 = vadd.f32 %v836, %v837
    %v839 = vrot.slane %v838, 2
    %v840 = vadd.f32 %v838, %v839
    %v841 = vrot.slane %v840, 1
    %v842 = vadd.f32 %v840, %v841
    %v845 = vsel %vm125, %v842, %v835
    %v846 = vsel %vm154, %v845, 0
    %848 = vmatprep.subr.mxu0 0.0
    %849 = vmatpush1.msra.mxu0 %v83
    %850 = vmatprep.subr.mxu0 0.0
    %851 = vmatpush1.msra.mxu0 %v84
    %852 = vmatprep.subr.mxu0 0.0
    %853 = vmatpush1.msra.mxu0 %v85
    %854 = vmatprep.subr.mxu0 0.0
    %855 = vmatpush1.msra.mxu0 %v86
    %856 = vmatprep.subr.mxu0 0.0
    %857 = vmatpush1.msra.mxu0 0.0
    %858 = vmatprep.subr.mxu0 0.0
    %859 = vmatpush1.msra.mxu0 0.0
    %860 = vmatprep.subr.mxu0 0.0
    %861 = vmatpush1.msra.mxu0 0.0
    %862 = vmatprep.subr.mxu0 0.0
    %863 = vmatpush1.msra.mxu0 0.0
    %864 = vmatprep.subr.mxu0 0.0
    %865 = vmatpush1.msra.mxu0 0.0
    %866 = vmatprep.subr.mxu0 0.0
    %867 = vmatpush1.msra.mxu0 0.0
    %868 = vmatprep.subr.mxu0 0.0
    %869 = vmatpush1.msra.mxu0 0.0
    %870 = vmatprep.subr.mxu0 0.0
    %871 = vmatpush1.msra.mxu0 0.0
    %872 = vmatprep.subr.mxu0 0.0
    %873 = vmatpush1.msra.mxu0 0.0
    %874 = vmatprep.subr.mxu0 0.0
    %875 = vmatpush1.msra.mxu0 0.0
    %876 = vmatprep.subr.mxu0 0.0
    %877 = vmatpush1.msra.mxu0 0.0
    %878 = vmatprep.subr.mxu0 0.0
    %879 = vmatpush1.msra.mxu0 0.0
    %880 = vmatprep.subr.mxu0 0.0
    %881 = vmatpush1.msra.mxu0 0.0
    %882 = vmatprep.subr.mxu0 0.0
    %883 = vmatpush1.msra.mxu0 0.0
    %884 = vmatprep.subr.mxu0 0.0
    %885 = vmatpush1.msra.mxu0 0.0
    %886 = vmatprep.subr.mxu0 0.0
    %887 = vmatpush1.msra.mxu0 0.0
    %888 = vmatprep.subr.mxu0 0.0
    %889 = vmatpush1.msra.mxu0 0.0
    %890 = vmatprep.subr.mxu0 0.0
    %891 = vmatpush1.msra.mxu0 0.0
    %892 = vmatprep.subr.mxu0 0.0
    %893 = vmatpush1.msra.mxu0 0.0
    %894 = vmatprep.subr.mxu0 0.0
    %895 = vmatpush1.msra.mxu0 0.0
    %896 = vmatprep.subr.mxu0 0.0
    %897 = vmatpush1.msra.mxu0 0.0
    %898 = vmatprep.subr.mxu0 0.0
    %899 = vmatpush1.msra.mxu0 0.0
    %900 = vmatprep.subr.mxu0 0.0
    %901 = vmatpush1.msra.mxu0 0.0
    %902 = vmatprep.subr.mxu0 0.0
    %903 = vmatpush1.msra.mxu0 0.0
    %904 = vmatprep.subr.mxu0 0.0
    %905 = vmatpush1.msra.mxu0 0.0
    %906 = vmatprep.subr.mxu0 0.0
    %907 = vmatpush1.msra.mxu0 0.0
    %908 = vmatprep.subr.mxu0 0.0
    %909 = vmatpush1.msra.mxu0 0.0
    %910 = vmatprep.subr.mxu0 0.0
    %911 = vmatpush1.msra.mxu0 0.0
    %912 = vmatprep.mubr.f32.mxu0 0.0
    %913 = vmatmul.mubr.f32.gmra.mrb[0].mxu0 %v846
    %v914 = vpop.f32.mrb[0].mxu0
    %v915 = vadd.f32 0.0, %v914
    %v916 = vpop.f32.mrb[0].mxu0
    %917 = vdwg.mxu0
    %v919 = vrot.slane %v915, 6
    %v920 = vrot.slane %v915, 7
    %v923 = vadd.f32 %v228, %v919
    %v924 = vadd.f32 %v233, %v920
    %v925 = vadd.f32 %v923, %v432
    %v926 = vadd.f32 %v924, %v432
    %v927 = vxor.u32 %v925, 2147483648
    %v928 = vxor.u32 %v926, 2147483648
    %v929 = vmul.f32 %v927, 1.442695
    %v930 = vpow.pop %v929
    %v931 = vmul.f32 %v928, 1.442695
    %v932 = vpow.pop %v931
    %v933 = vadd.f32 %v930, 1.0
    %v934 = vadd.f32 %v932, 1.0
    %v935 = vrcp.pop %v933
    %v936 = vmul.f32 1.0, %v935
    %v937 = vrcp.pop %v934
    %v938 = vmul.f32 1.0, %v937
    %v939 = vmul.f32 %v835, %v936
    %v940 = vmul.f32 %v842, %v938
    %v943 = vrot.slane %v939, 2
    %v944 = vrot.slane %v940, 1
    %v945 = vsel %vm125, %v944, %v943
    %v946 = vsel %vm154, %v945, 0
    %948 = vmatprep.subr.mxu0 0.0
    %949 = vmatpush1.msra.mxu0 %v93
    %950 = vmatprep.subr.mxu0 0.0
    %951 = vmatpush1.msra.mxu0 %v94
    %952 = vmatprep.subr.mxu0 0.0
    %953 = vmatpush1.msra.mxu0 %v95
    %954 = vmatprep.subr.mxu0 0.0
    %955 = vmatpush1.msra.mxu0 %v96
    %956 = vmatprep.subr.mxu0 0.0
    %957 = vmatpush1.msra.mxu0 0.0
    %958 = vmatprep.subr.mxu0 0.0
    %959 = vmatpush1.msra.mxu0 0.0
    %960 = vmatprep.subr.mxu0 0.0
    %961 = vmatpush1.msra.mxu0 0.0
    %962 = vmatprep.subr.mxu0 0.0
    %963 = vmatpush1.msra.mxu0 0.0
    %964 = vmatprep.subr.mxu0 0.0
    %965 = vmatpush1.msra.mxu0 0.0
    %966 = vmatprep.subr.mxu0 0.0
    %967 = vmatpush1.msra.mxu0 0.0
    %968 = vmatprep.subr.mxu0 0.0
    %969 = vmatpush1.msra.mxu0 0.0
    %970 = vmatprep.subr.mxu0 0.0
    %971 = vmatpush1.msra.mxu0 0.0
    %972 = vmatprep.subr.mxu0 0.0
    %973 = vmatpush1.msra.mxu0 0.0
    %974 = vmatprep.subr.mxu0 0.0
    %975 = vmatpush1.msra.mxu0 0.0
    %976 = vmatprep.subr.mxu0 0.0
    %977 = vmatpush1.msra.mxu0 0.0
    %978 = vmatprep.subr.mxu0 0.0
    %979 = vmatpush1.msra.mxu0 0.0
    %980 = vmatprep.subr.mxu0 0.0
    %981 = vmatpush1.msra.mxu0 0.0
    %982 = vmatprep.subr.mxu0 0.0
    %983 = vmatpush1.msra.mxu0 0.0
    %984 = vmatprep.subr.mxu0 0.0
    %985 = vmatpush1.msra.mxu0 0.0
    %986 = vmatprep.subr.mxu0 0.0
    %987 = vmatpush1.msra.mxu0 0.0
    %988 = vmatprep.subr.mxu0 0.0
    %989 = vmatpush1.msra.mxu0 0.0
    %990 = vmatprep.subr.mxu0 0.0
    %991 = vmatpush1.msra.mxu0 0.0
    %992 = vmatprep.subr.mxu0 0.0
    %993 = vmatpush1.msra.mxu0 0.0
    %994 = vmatprep.subr.mxu0 0.0
    %995 = vmatpush1.msra.mxu0 0.0
    %996 = vmatprep.subr.mxu0 0.0
    %997 = vmatpush1.msra.mxu0 0.0
    %998 = vmatprep.subr.mxu0 0.0
    %999 = vmatpush1.msra.mxu0 0.0
    %1000 = vmatprep.subr.mxu0 0.0
    %1001 = vmatpush1.msra.mxu0 0.0
    %1002 = vmatprep.subr.mxu0 0.0
    %1003 = vmatpush1.msra.mxu0 0.0
    %1004 = vmatprep.subr.mxu0 0.0
    %1005 = vmatpush1.msra.mxu0 0.0
    %1006 = vmatprep.subr.mxu0 0.0
    %1007 = vmatpush1.msra.mxu0 0.0
    %1008 = vmatprep.subr.mxu0 0.0
    %1009 = vmatpush1.msra.mxu0 0.0
    %1010 = vmatprep.subr.mxu0 0.0
    %1011 = vmatpush1.msra.mxu0 0.0
    %1012 = vmatprep.mubr.f32.mxu0 0.0
    %1013 = vmatmul.mubr.f32.gmra.mrb[0].mxu0 %v946
    %v1014 = vpop.f32.mrb[0].mxu0
    %v1015 = vadd.f32 0.0, %v1014
    %v1016 = vpop.f32.mrb[0].mxu0
    %1017 = vdwg.mxu0
    %v1019 = vrot.slane %v1015, 6
    %v1020 = vrot.slane %v1015, 7
    %v1023 = vadd.f32 %v309, %v1019
    %v1024 = vadd.f32 %v314, %v1020
    %v1025 = vadd.f32 %v1023, %v536
    %v1026 = vadd.f32 %v1024, %v536
    %v1027 = vtanh.pop %v1025
    %v1028 = vtanh.pop %v1026
    %1029 = vrot.lane.b32.xlu0 %v835, 32
    %v1030 = vpop.permute.xlu0 %1029
    %1031 = vrot.lane.b32.xlu0 %v842, 32
    %v1032 = vpop.permute.xlu0 %1031
    %v1035 = vmul.f32 %v936, %v1030
    %v1036 = vmul.f32 %v938, %v1032
    %v1037 = vsub.f32 1.0, %v936
    %v1038 = vsub.f32 1.0, %v938
    %1041 = vrot.lane.b32.xlu0 %v1027, 32
    %v1042 = vpop.permute.xlu0 %1041
    %1043 = vrot.lane.b32.xlu0 %v1028, 32
    %v1044 = vpop.permute.xlu0 %1043
    %v1047 = vmul.f32 %v1037, %v1042
    %v1048 = vmul.f32 %v1038, %v1044
    %v1049 = vadd.f32 %v1035, %v1047
    %v1050 = vadd.f32 %v1036, %v1048
    %1053 = vrot.lane.b32.xlu0 %v1049, 96
    %v1054 = vpop.permute.xlu0 %1053
    %1055 = vrot.lane.b32.xlu0 %v1050, 96
    %v1056 = vpop.permute.xlu0 %1055
    %vm1059 = vcmask 256002
    %1060 = vst.msk [vmem:[#allocation2] sm:$0x4] %vm1059, %v1054
    %1061 = vst.msk [vmem:[#allocation2 + $0x8] sm:$0x4] %vm1059, %v1056
    %v1062 = vld [vmem:[#allocation2] sm:$0xff]
    %v1063 = vld [vmem:[#allocation2 + $0x8] sm:$0xff]
    %1064 = vset.pattern.permute.xlu0 3
    %1065 = vperm.xlu0 %1064, %v146
    %v1066 = vpop.permute.xlu0 %1065
    %1068 = vset.pattern.permute.xlu0 3
    %1069 = vperm.xlu0 %1068, %v147
    %v1070 = vpop.permute.xlu0 %1069
    %v1072 = vmul.f32 %v1066, %v1062
    %v1073 = vmul.f32 %v1070, %v1063
    %v1074 = vsel %vm154, %v1072, 0.0
    %v1075 = vrot.slane %v1074, 4
    %v1076 = vadd.f32 %v1074, %v1075
    %v1077 = vrot.slane %v1076, 2
    %v1078 = vadd.f32 %v1076, %v1077
    %v1079 = vrot.slane %v1078, 1
    %v1080 = vadd.f32 %v1078, %v1079
    %v1081 = vsel %vm154, %v1073, 0.0
    %v1082 = vrot.slane %v1081, 4
    %v1083 = vadd.f32 %v1081, %v1082
    %v1084 = vrot.slane %v1083, 2
    %v1085 = vadd.f32 %v1083, %v1084
    %v1086 = vrot.slane %v1085, 1
    %v1087 = vadd.f32 %v1085, %v1086
    %v1090 = vsel %vm125, %v1087, %v1080
    %v1091 = vsel %vm154, %v1090, 0
    %1093 = vmatprep.subr.mxu0 0.0
    %1094 = vmatpush1.msra.mxu0 %v83
    %1095 = vmatprep.subr.mxu0 0.0
    %1096 = vmatpush1.msra.mxu0 %v84
    %1097 = vmatprep.subr.mxu0 0.0
    %1098 = vmatpush1.msra.mxu0 %v85
    %1099 = vmatprep.subr.mxu0 0.0
    %1100 = vmatpush1.msra.mxu0 %v86
    %1101 = vmatprep.subr.mxu0 0.0
    %1102 = vmatpush1.msra.mxu0 0.0
    %1103 = vmatprep.subr.mxu0 0.0
    %1104 = vmatpush1.msra.mxu0 0.0
    %1105 = vmatprep.subr.mxu0 0.0
    %1106 = vmatpush1.msra.mxu0 0.0
    %1107 = vmatprep.subr.mxu0 0.0
    %1108 = vmatpush1.msra.mxu0 0.0
    %1109 = vmatprep.subr.mxu0 0.0
    %1110 = vmatpush1.msra.mxu0 0.0
    %1111 = vmatprep.subr.mxu0 0.0
    %1112 = vmatpush1.msra.mxu0 0.0
    %1113 = vmatprep.subr.mxu0 0.0
    %1114 = vmatpush1.msra.mxu0 0.0
    %1115 = vmatprep.subr.mxu0 0.0
    %1116 = vmatpush1.msra.mxu0 0.0
    %1117 = vmatprep.subr.mxu0 0.0
    %1118 = vmatpush1.msra.mxu0 0.0
    %1119 = vmatprep.subr.mxu0 0.0
    %1120 = vmatpush1.msra.mxu0 0.0
    %1121 = vmatprep.subr.mxu0 0.0
    %1122 = vmatpush1.msra.mxu0 0.0
    %1123 = vmatprep.subr.mxu0 0.0
    %1124 = vmatpush1.msra.mxu0 0.0
    %1125 = vmatprep.subr.mxu0 0.0
    %1126 = vmatpush1.msra.mxu0 0.0
    %1127 = vmatprep.subr.mxu0 0.0
    %1128 = vmatpush1.msra.mxu0 0.0
    %1129 = vmatprep.subr.mxu0 0.0
    %1130 = vmatpush1.msra.mxu0 0.0
    %1131 = vmatprep.subr.mxu0 0.0
    %1132 = vmatpush1.msra.mxu0 0.0
    %1133 = vmatprep.subr.mxu0 0.0
    %1134 = vmatpush1.msra.mxu0 0.0
    %1135 = vmatprep.subr.mxu0 0.0
    %1136 = vmatpush1.msra.mxu0 0.0
    %1137 = vmatprep.subr.mxu0 0.0
    %1138 = vmatpush1.msra.mxu0 0.0
    %1139 = vmatprep.subr.mxu0 0.0
    %1140 = vmatpush1.msra.mxu0 0.0
    %1141 = vmatprep.subr.mxu0 0.0
    %1142 = vmatpush1.msra.mxu0 0.0
    %1143 = vmatprep.subr.mxu0 0.0
    %1144 = vmatpush1.msra.mxu0 0.0
    %1145 = vmatprep.subr.mxu0 0.0
    %1146 = vmatpush1.msra.mxu0 0.0
    %1147 = vmatprep.subr.mxu0 0.0
    %1148 = vmatpush1.msra.mxu0 0.0
    %1149 = vmatprep.subr.mxu0 0.0
    %1150 = vmatpush1.msra.mxu0 0.0
    %1151 = vmatprep.subr.mxu0 0.0
    %1152 = vmatpush1.msra.mxu0 0.0
    %1153 = vmatprep.subr.mxu0 0.0
    %1154 = vmatpush1.msra.mxu0 0.0
    %1155 = vmatprep.subr.mxu0 0.0
    %1156 = vmatpush1.msra.mxu0 0.0
    %1157 = vmatprep.mubr.f32.mxu0 0.0
    %1158 = vmatmul.mubr.f32.gmra.mrb[0].mxu0 %v1091
    %v1159 = vpop.f32.mrb[0].mxu0
    %v1160 = vadd.f32 0.0, %v1159
    %v1161 = vpop.f32.mrb[0].mxu0
    %1162 = vdwg.mxu0
    %v1164 = vrot.slane %v1160, 5
    %v1165 = vrot.slane %v1160, 6
    %v1168 = vadd.f32 %v228, %v1164
    %v1169 = vadd.f32 %v233, %v1165
    %v1170 = vadd.f32 %v1168, %v432
    %v1171 = vadd.f32 %v1169, %v432
    %v1172 = vxor.u32 %v1170, 2147483648
    %v1173 = vxor.u32 %v1171, 2147483648
    %v1174 = vmul.f32 %v1172, 1.442695
    %v1175 = vpow.pop %v1174
    %v1176 = vmul.f32 %v1173, 1.442695
    %v1177 = vpow.pop %v1176
    %v1178 = vadd.f32 %v1175, 1.0
    %v1179 = vadd.f32 %v1177, 1.0
    %v1180 = vrcp.pop %v1178
    %v1181 = vmul.f32 1.0, %v1180
    %v1182 = vrcp.pop %v1179
    %v1183 = vmul.f32 1.0, %v1182
    %v1184 = vmul.f32 %v1080, %v1181
    %v1185 = vmul.f32 %v1087, %v1183
    %v1188 = vrot.slane %v1184, 3
    %v1189 = vrot.slane %v1185, 2
    %v1190 = vsel %vm125, %v1189, %v1188
    %v1191 = vsel %vm154, %v1190, 0
    %1193 = vmatprep.subr.mxu0 0.0
    %1194 = vmatpush1.msra.mxu0 %v93
    %1195 = vmatprep.subr.mxu0 0.0
    %1196 = vmatpush1.msra.mxu0 %v94
    %1197 = vmatprep.subr.mxu0 0.0
    %1198 = vmatpush1.msra.mxu0 %v95
    %1199 = vmatprep.subr.mxu0 0.0
    %1200 = vmatpush1.msra.mxu0 %v96
    %1201 = vmatprep.subr.mxu0 0.0
    %1202 = vmatpush1.msra.mxu0 0.0
    %1203 = vmatprep.subr.mxu0 0.0
    %1204 = vmatpush1.msra.mxu0 0.0
    %1205 = vmatprep.subr.mxu0 0.0
    %1206 = vmatpush1.msra.mxu0 0.0
    %1207 = vmatprep.subr.mxu0 0.0
    %1208 = vmatpush1.msra.mxu0 0.0
    %1209 = vmatprep.subr.mxu0 0.0
    %1210 = vmatpush1.msra.mxu0 0.0
    %1211 = vmatprep.subr.mxu0 0.0
    %1212 = vmatpush1.msra.mxu0 0.0
    %1213 = vmatprep.subr.mxu0 0.0
    %1214 = vmatpush1.msra.mxu0 0.0
    %1215 = vmatprep.subr.mxu0 0.0
    %1216 = vmatpush1.msra.mxu0 0.0
    %1217 = vmatprep.subr.mxu0 0.0
    %1218 = vmatpush1.msra.mxu0 0.0
    %1219 = vmatprep.subr.mxu0 0.0
    %1220 = vmatpush1.msra.mxu0 0.0
    %1221 = vmatprep.subr.mxu0 0.0
    %1222 = vmatpush1.msra.mxu0 0.0
    %1223 = vmatprep.subr.mxu0 0.0
    %1224 = vmatpush1.msra.mxu0 0.0
    %1225 = vmatprep.subr.mxu0 0.0
    %1226 = vmatpush1.msra.mxu0 0.0
    %1227 = vmatprep.subr.mxu0 0.0
    %1228 = vmatpush1.msra.mxu0 0.0
    %1229 = vmatprep.subr.mxu0 0.0
    %1230 = vmatpush1.msra.mxu0 0.0
    %1231 = vmatprep.subr.mxu0 0.0
    %1232 = vmatpush1.msra.mxu0 0.0
    %1233 = vmatprep.subr.mxu0 0.0
    %1234 = vmatpush1.msra.mxu0 0.0
    %1235 = vmatprep.subr.mxu0 0.0
    %1236 = vmatpush1.msra.mxu0 0.0
    %1237 = vmatprep.subr.mxu0 0.0
    %1238 = vmatpush1.msra.mxu0 0.0
    %1239 = vmatprep.subr.mxu0 0.0
    %1240 = vmatpush1.msra.mxu0 0.0
    %1241 = vmatprep.subr.mxu0 0.0
    %1242 = vmatpush1.msra.mxu0 0.0
    %1243 = vmatprep.subr.mxu0 0.0
    %1244 = vmatpush1.msra.mxu0 0.0
    %1245 = vmatprep.subr.mxu0 0.0
    %1246 = vmatpush1.msra.mxu0 0.0
    %1247 = vmatprep.subr.mxu0 0.0
    %1248 = vmatpush1.msra.mxu0 0.0
    %1249 = vmatprep.subr.mxu0 0.0
    %1250 = vmatpush1.msra.mxu0 0.0
    %1251 = vmatprep.subr.mxu0 0.0
    %1252 = vmatpush1.msra.mxu0 0.0
    %1253 = vmatprep.subr.mxu0 0.0
    %1254 = vmatpush1.msra.mxu0 0.0
    %1255 = vmatprep.subr.mxu0 0.0
    %1256 = vmatpush1.msra.mxu0 0.0
    %1257 = vmatprep.mubr.f32.mxu0 0.0
    %1258 = vmatmul.mubr.f32.gmra.mrb[0].mxu0 %v1191
    %v1259 = vpop.f32.mrb[0].mxu0
    %v1260 = vadd.f32 0.0, %v1259
    %v1261 = vpop.f32.mrb[0].mxu0
    %1262 = vdwg.mxu0
    %v1264 = vrot.slane %v1260, 5
    %v1265 = vrot.slane %v1260, 6
    %v1268 = vadd.f32 %v309, %v1264
    %v1269 = vadd.f32 %v314, %v1265
    %v1270 = vadd.f32 %v1268, %v536
    %v1271 = vadd.f32 %v1269, %v536
    %v1272 = vtanh.pop %v1270
    %v1273 = vtanh.pop %v1271
    %1274 = vrot.lane.b32.xlu0 %v1080, 32
    %v1275 = vpop.permute.xlu0 %1274
    %1276 = vrot.lane.b32.xlu0 %v1087, 32
    %v1277 = vpop.permute.xlu0 %1276
    %v1280 = vmul.f32 %v1181, %v1275
    %v1281 = vmul.f32 %v1183, %v1277
    %v1282 = vsub.f32 1.0, %v1181
    %v1283 = vsub.f32 1.0, %v1183
    %1286 = vrot.lane.b32.xlu0 %v1272, 32
    %v1287 = vpop.permute.xlu0 %1286
    %1288 = vrot.lane.b32.xlu0 %v1273, 32
    %v1289 = vpop.permute.xlu0 %1288
    %v1292 = vmul.f32 %v1282, %v1287
    %v1293 = vmul.f32 %v1283, %v1289
    %v1294 = vadd.f32 %v1280, %v1292
    %v1295 = vadd.f32 %v1281, %v1293
    %1298 = vrot.lane.b32.xlu0 %v1294, 96
    %v1299 = vpop.permute.xlu0 %1298
    %1300 = vrot.lane.b32.xlu0 %v1295, 96
    %v1301 = vpop.permute.xlu0 %1300
    %vm1304 = vcmask 257027
    %1305 = vst.msk [vmem:[#allocation2] sm:$0x8] %vm1304, %v1299
    %1306 = vst.msk [vmem:[#allocation2 + $0x8] sm:$0x8] %vm1304, %v1301
    %v1307 = vld [vmem:[#allocation2] sm:$0xff]
    %v1308 = vld [vmem:[#allocation2 + $0x8] sm:$0xff]
    %1309 = vset.pattern.permute.xlu0 4
    %1310 = vperm.xlu0 %1309, %v146
    %v1311 = vpop.permute.xlu0 %1310
    %1313 = vset.pattern.permute.xlu0 4
    %1314 = vperm.xlu0 %1313, %v147
    %v1315 = vpop.permute.xlu0 %1314
    %v1317 = vmul.f32 %v1311, %v1307
    %v1318 = vmul.f32 %v1315, %v1308
    %v1319 = vsel %vm154, %v1317, 0.0
    %v1320 = vrot.slane %v1319, 4
    %v1321 = vadd.f32 %v1319, %v1320
    %v1322 = vrot.slane %v1321, 2
    %v1323 = vadd.f32 %v1321, %v1322
    %v1324 = vrot.slane %v1323, 1
    %v1325 = vadd.f32 %v1323, %v1324
    %v1326 = vsel %vm154, %v1318, 0.0
    %v1327 = vrot.slane %v1326, 4
    %v1328 = vadd.f32 %v1326, %v1327
    %v1329 = vrot.slane %v1328, 2
    %v1330 = vadd.f32 %v1328, %v1329
    %v1331 = vrot.slane %v1330, 1
    %v1332 = vadd.f32 %v1330, %v1331
    %v1335 = vsel %vm125, %v1332, %v1325
    %v1336 = vsel %vm154, %v1335, 0
    %1338 = vmatprep.subr.mxu0 0.0
    %1339 = vmatpush1.msra.mxu0 %v83
    %1340 = vmatprep.subr.mxu0 0.0
    %1341 = vmatpush1.msra.mxu0 %v84
    %1342 = vmatprep.subr.mxu0 0.0
    %1343 = vmatpush1.msra.mxu0 %v85
    %1344 = vmatprep.subr.mxu0 0.0
    %1345 = vmatpush1.msra.mxu0 %v86
    %1346 = vmatprep.subr.mxu0 0.0
    %1347 = vmatpush1.msra.mxu0 0.0
    %1348 = vmatprep.subr.mxu0 0.0
    %1349 = vmatpush1.msra.mxu0 0.0
    %1350 = vmatprep.subr.mxu0 0.0
    %1351 = vmatpush1.msra.mxu0 0.0
    %1352 = vmatprep.subr.mxu0 0.0
    %1353 = vmatpush1.msra.mxu0 0.0
    %1354 = vmatprep.subr.mxu0 0.0
    %1355 = vmatpush1.msra.mxu0 0.0
    %1356 = vmatprep.subr.mxu0 0.0
    %1357 = vmatpush1.msra.mxu0 0.0
    %1358 = vmatprep.subr.mxu0 0.0
    %1359 = vmatpush1.msra.mxu0 0.0
    %1360 = vmatprep.subr.mxu0 0.0
    %1361 = vmatpush1.msra.mxu0 0.0
    %1362 = vmatprep.subr.mxu0 0.0
    %1363 = vmatpush1.msra.mxu0 0.0
    %1364 = vmatprep.subr.mxu0 0.0
    %1365 = vmatpush1.msra.mxu0 0.0
    %1366 = vmatprep.subr.mxu0 0.0
    %1367 = vmatpush1.msra.mxu0 0.0
    %1368 = vmatprep.subr.mxu0 0.0
    %1369 = vmatpush1.msra.mxu0 0.0
    %1370 = vmatprep.subr.mxu0 0.0
    %1371 = vmatpush1.msra.mxu0 0.0
    %1372 = vmatprep.subr.mxu0 0.0
    %1373 = vmatpush1.msra.mxu0 0.0
    %1374 = vmatprep.subr.mxu0 0.0
    %1375 = vmatpush1.msra.mxu0 0.0
    %1376 = vmatprep.subr.mxu0 0.0
    %1377 = vmatpush1.msra.mxu0 0.0
    %1378 = vmatprep.subr.mxu0 0.0
    %1379 = vmatpush1.msra.mxu0 0.0
    %1380 = vmatprep.subr.mxu0 0.0
    %1381 = vmatpush1.msra.mxu0 0.0
    %1382 = vmatprep.subr.mxu0 0.0
    %1383 = vmatpush1.msra.mxu0 0.0
    %1384 = vmatprep.subr.mxu0 0.0
    %1385 = vmatpush1.msra.mxu0 0.0
    %1386 = vmatprep.subr.mxu0 0.0
    %1387 = vmatpush1.msra.mxu0 0.0
    %1388 = vmatprep.subr.mxu0 0.0
    %1389 = vmatpush1.msra.mxu0 0.0
    %1390 = vmatprep.subr.mxu0 0.0
    %1391 = vmatpush1.msra.mxu0 0.0
    %1392 = vmatprep.subr.mxu0 0.0
    %1393 = vmatpush1.msra.mxu0 0.0
    %1394 = vmatprep.subr.mxu0 0.0
    %1395 = vmatpush1.msra.mxu0 0.0
    %1396 = vmatprep.subr.mxu0 0.0
    %1397 = vmatpush1.msra.mxu0 0.0
    %1398 = vmatprep.subr.mxu0 0.0
    %1399 = vmatpush1.msra.mxu0 0.0
    %1400 = vmatprep.subr.mxu0 0.0
    %1401 = vmatpush1.msra.mxu0 0.0
    %1402 = vmatprep.mubr.f32.mxu0 0.0
    %1403 = vmatmul.mubr.f32.gmra.mrb[0].mxu0 %v1336
    %v1404 = vpop.f32.mrb[0].mxu0
    %v1405 = vadd.f32 0.0, %v1404
    %v1406 = vpop.f32.mrb[0].mxu0
    %1407 = vdwg.mxu0
    %v1409 = vrot.slane %v1405, 4
    %v1410 = vrot.slane %v1405, 5
    %v1413 = vadd.f32 %v228, %v1409
    %v1414 = vadd.f32 %v233, %v1410
    %v1415 = vadd.f32 %v1413, %v432
    %v1416 = vadd.f32 %v1414, %v432
    %v1417 = vxor.u32 %v1415, 2147483648
    %v1418 = vxor.u32 %v1416, 2147483648
    %v1419 = vmul.f32 %v1417, 1.442695
    %v1420 = vpow.pop %v1419
    %v1421 = vmul.f32 %v1418, 1.442695
    %v1422 = vpow.pop %v1421
    %v1423 = vadd.f32 %v1420, 1.0
    %v1424 = vadd.f32 %v1422, 1.0
    %v1425 = vrcp.pop %v1423
    %v1426 = vmul.f32 1.0, %v1425
    %v1427 = vrcp.pop %v1424
    %v1428 = vmul.f32 1.0, %v1427
    %v1429 = vmul.f32 %v1325, %v1426
    %v1430 = vmul.f32 %v1332, %v1428
    %v1433 = vrot.slane %v1429, 4
    %v1434 = vrot.slane %v1430, 3
    %v1435 = vsel %vm125, %v1434, %v1433
    %v1436 = vsel %vm154, %v1435, 0
    %1438 = vmatprep.subr.mxu0 0.0
    %1439 = vmatpush1.msra.mxu0 %v93
    %1440 = vmatprep.subr.mxu0 0.0
    %1441 = vmatpush1.msra.mxu0 %v94
    %1442 = vmatprep.subr.mxu0 0.0
    %1443 = vmatpush1.msra.mxu0 %v95
    %1444 = vmatprep.subr.mxu0 0.0
    %1445 = vmatpush1.msra.mxu0 %v96
    %1446 = vmatprep.subr.mxu0 0.0
    %1447 = vmatpush1.msra.mxu0 0.0
    %1448 = vmatprep.subr.mxu0 0.0
    %1449 = vmatpush1.msra.mxu0 0.0
    %1450 = vmatprep.subr.mxu0 0.0
    %1451 = vmatpush1.msra.mxu0 0.0
    %1452 = vmatprep.subr.mxu0 0.0
    %1453 = vmatpush1.msra.mxu0 0.0
    %1454 = vmatprep.subr.mxu0 0.0
    %1455 = vmatpush1.msra.mxu0 0.0
    %1456 = vmatprep.subr.mxu0 0.0
    %1457 = vmatpush1.msra.mxu0 0.0
    %1458 = vmatprep.subr.mxu0 0.0
    %1459 = vmatpush1.msra.mxu0 0.0
    %1460 = vmatprep.subr.mxu0 0.0
    %1461 = vmatpush1.msra.mxu0 0.0
    %1462 = vmatprep.subr.mxu0 0.0
    %1463 = vmatpush1.msra.mxu0 0.0
    %1464 = vmatprep.subr.mxu0 0.0
    %1465 = vmatpush1.msra.mxu0 0.0
    %1466 = vmatprep.subr.mxu0 0.0
    %1467 = vmatpush1.msra.mxu0 0.0
    %1468 = vmatprep.subr.mxu0 0.0
    %1469 = vmatpush1.msra.mxu0 0.0
    %1470 = vmatprep.subr.mxu0 0.0
    %1471 = vmatpush1.msra.mxu0 0.0
    %1472 = vmatprep.subr.mxu0 0.0
    %1473 = vmatpush1.msra.mxu0 0.0
    %1474 = vmatprep.subr.mxu0 0.0
    %1475 = vmatpush1.msra.mxu0 0.0
    %1476 = vmatprep.subr.mxu0 0.0
    %1477 = vmatpush1.msra.mxu0 0.0
    %1478 = vmatprep.subr.mxu0 0.0
    %1479 = vmatpush1.msra.mxu0 0.0
    %1480 = vmatprep.subr.mxu0 0.0
    %1481 = vmatpush1.msra.mxu0 0.0
    %1482 = vmatprep.subr.mxu0 0.0
    %1483 = vmatpush1.msra.mxu0 0.0
    %1484 = vmatprep.subr.mxu0 0.0
    %1485 = vmatpush1.msra.mxu0 0.0
    %1486 = vmatprep.subr.mxu0 0.0
    %1487 = vmatpush1.msra.mxu0 0.0
    %1488 = vmatprep.subr.mxu0 0.0
    %1489 = vmatpush1.msra.mxu0 0.0
    %1490 = vmatprep.subr.mxu0 0.0
    %1491 = vmatpush1.msra.mxu0 0.0
    %1492 = vmatprep.subr.mxu0 0.0
    %1493 = vmatpush1.msra.mxu0 0.0
    %1494 = vmatprep.subr.mxu0 0.0
    %1495 = vmatpush1.msra.mxu0 0.0
    %1496 = vmatprep.subr.mxu0 0.0
    %1497 = vmatpush1.msra.mxu0 0.0
    %1498 = vmatprep.subr.mxu0 0.0
    %1499 = vmatpush1.msra.mxu0 0.0
    %1500 = vmatprep.subr.mxu0 0.0
    %1501 = vmatpush1.msra.mxu0 0.0
    %1502 = vmatprep.mubr.f32.mxu0 0.0
    %1503 = vmatmul.mubr.f32.gmra.mrb[0].mxu0 %v1436
    %v1504 = vpop.f32.mrb[0].mxu0
    %v1505 = vadd.f32 0.0, %v1504
    %v1506 = vpop.f32.mrb[0].mxu0
    %1507 = vdwg.mxu0
    %v1509 = vrot.slane %v1505, 4
    %v1510 = vrot.slane %v1505, 5
    %v1513 = vadd.f32 %v309, %v1509
    %v1514 = vadd.f32 %v314, %v1510
    %v1515 = vadd.f32 %v1513, %v536
    %v1516 = vadd.f32 %v1514, %v536
    %v1517 = vtanh.pop %v1515
    %v1518 = vtanh.pop %v1516
    %1519 = vrot.lane.b32.xlu0 %v1325, 32
    %v1520 = vpop.permute.xlu0 %1519
    %1521 = vrot.lane.b32.xlu0 %v1332, 32
    %v1522 = vpop.permute.xlu0 %1521
    %v1525 = vmul.f32 %v1426, %v1520
    %v1526 = vmul.f32 %v1428, %v1522
    %v1527 = vsub.f32 1.0, %v1426
    %v1528 = vsub.f32 1.0, %v1428
    %1531 = vrot.lane.b32.xlu0 %v1517, 32
    %v1532 = vpop.permute.xlu0 %1531
    %1533 = vrot.lane.b32.xlu0 %v1518, 32
    %v1534 = vpop.permute.xlu0 %1533
    %v1537 = vmul.f32 %v1527, %v1532
    %v1538 = vmul.f32 %v1528, %v1534
    %v1539 = vadd.f32 %v1525, %v1537
    %v1540 = vadd.f32 %v1526, %v1538
    %1543 = vrot.lane.b32.xlu0 %v1539, 96
    %v1544 = vpop.permute.xlu0 %1543
    %1545 = vrot.lane.b32.xlu0 %v1540, 96
    %v1546 = vpop.permute.xlu0 %1545
    %vm1549 = vcmask 258052
    %1550 = vst.msk [vmem:[#allocation2] sm:$0x10] %vm1549, %v1544
    %1551 = vst.msk [vmem:[#allocation2 + $0x8] sm:$0x10] %vm1549, %v1546
    %v1552 = vld [vmem:[#allocation2] sm:$0xff]
    %v1553 = vld [vmem:[#allocation2 + $0x8] sm:$0xff]
    %1554 = vset.pattern.permute.xlu0 5
    %1555 = vperm.xlu0 %1554, %v146
    %v1556 = vpop.permute.xlu0 %1555
    %1558 = vset.pattern.permute.xlu0 5
    %1559 = vperm.xlu0 %1558, %v147
    %v1560 = vpop.permute.xlu0 %1559
    %v1562 = vmul.f32 %v1556, %v1552
    %v1563 = vmul.f32 %v1560, %v1553
    %v1564 = vsel %vm154, %v1562, 0.0
    %v1565 = vrot.slane %v1564, 4
    %v1566 = vadd.f32 %v1564, %v1565
    %v1567 = vrot.slane %v1566, 2
    %v1568 = vadd.f32 %v1566, %v1567
    %v1569 = vrot.slane %v1568, 1
    %v1570 = vadd.f32 %v1568, %v1569
    %v1571 = vsel %vm154, %v1563, 0.0
    %v1572 = vrot.slane %v1571, 4
    %v1573 = vadd.f32 %v1571, %v1572
    %v1574 = vrot.slane %v1573, 2
    %v1575 = vadd.f32 %v1573, %v1574
    %v1576 = vrot.slane %v1575, 1
    %v1577 = vadd.f32 %v1575, %v1576
    %v1580 = vsel %vm125, %v1577, %v1570
    %v1581 = vsel %vm154, %v1580, 0
    %1583 = vmatprep.subr.mxu0 0.0
    %1584 = vmatpush1.msra.mxu0 %v83
    %1585 = vmatprep.subr.mxu0 0.0
    %1586 = vmatpush1.msra.mxu0 %v84
    %1587 = vmatprep.subr.mxu0 0.0
    %1588 = vmatpush1.msra.mxu0 %v85
    %1589 = vmatprep.subr.mxu0 0.0
    %1590 = vmatpush1.msra.mxu0 %v86
    %1591 = vmatprep.subr.mxu0 0.0
    %1592 = vmatpush1.msra.mxu0 0.0
    %1593 = vmatprep.subr.mxu0 0.0
    %1594 = vmatpush1.msra.mxu0 0.0
    %1595 = vmatprep.subr.mxu0 0.0
    %1596 = vmatpush1.msra.mxu0 0.0
    %1597 = vmatprep.subr.mxu0 0.0
    %1598 = vmatpush1.msra.mxu0 0.0
    %1599 = vmatprep.subr.mxu0 0.0
    %1600 = vmatpush1.msra.mxu0 0.0
    %1601 = vmatprep.subr.mxu0 0.0
    %1602 = vmatpush1.msra.mxu0 0.0
    %1603 = vmatprep.subr.mxu0 0.0
    %1604 = vmatpush1.msra.mxu0 0.0
    %1605 = vmatprep.subr.mxu0 0.0
    %1606 = vmatpush1.msra.mxu0 0.0
    %1607 = vmatprep.subr.mxu0 0.0
    %1608 = vmatpush1.msra.mxu0 0.0
    %1609 = vmatprep.subr.mxu0 0.0
    %1610 = vmatpush1.msra.mxu0 0.0
    %1611 = vmatprep.subr.mxu0 0.0
    %1612 = vmatpush1.msra.mxu0 0.0
    %1613 = vmatprep.subr.mxu0 0.0
    %1614 = vmatpush1.msra.mxu0 0.0
    %1615 = vmatprep.subr.mxu0 0.0
    %1616 = vmatpush1.msra.mxu0 0.0
    %1617 = vmatprep.subr.mxu0 0.0
    %1618 = vmatpush1.msra.mxu0 0.0
    %1619 = vmatprep.subr.mxu0 0.0
    %1620 = vmatpush1.msra.mxu0 0.0
    %1621 = vmatprep.subr.mxu0 0.0
    %1622 = vmatpush1.msra.mxu0 0.0
    %1623 = vmatprep.subr.mxu0 0.0
    %1624 = vmatpush1.msra.mxu0 0.0
    %1625 = vmatprep.subr.mxu0 0.0
    %1626 = vmatpush1.msra.mxu0 0.0
    %1627 = vmatprep.subr.mxu0 0.0
    %1628 = vmatpush1.msra.mxu0 0.0
    %1629 = vmatprep.subr.mxu0 0.0
    %1630 = vmatpush1.msra.mxu0 0.0
    %1631 = vmatprep.subr.mxu0 0.0
    %1632 = vmatpush1.msra.mxu0 0.0
    %1633 = vmatprep.subr.mxu0 0.0
    %1634 = vmatpush1.msra.mxu0 0.0
    %1635 = vmatprep.subr.mxu0 0.0
    %1636 = vmatpush1.msra.mxu0 0.0
    %1637 = vmatprep.subr.mxu0 0.0
    %1638 = vmatpush1.msra.mxu0 0.0
    %1639 = vmatprep.subr.mxu0 0.0
    %1640 = vmatpush1.msra.mxu0 0.0
    %1641 = vmatprep.subr.mxu0 0.0
    %1642 = vmatpush1.msra.mxu0 0.0
    %1643 = vmatprep.subr.mxu0 0.0
    %1644 = vmatpush1.msra.mxu0 0.0
    %1645 = vmatprep.subr.mxu0 0.0
    %1646 = vmatpush1.msra.mxu0 0.0
    %1647 = vmatprep.mubr.f32.mxu0 0.0
    %1648 = vmatmul.mubr.f32.gmra.mrb[0].mxu0 %v1581
    %v1649 = vpop.f32.mrb[0].mxu0
    %v1650 = vadd.f32 0.0, %v1649
    %v1651 = vpop.f32.mrb[0].mxu0
    %1652 = vdwg.mxu0
    %v1654 = vrot.slane %v1650, 3
    %v1655 = vrot.slane %v1650, 4
    %v1658 = vadd.f32 %v228, %v1654
    %v1659 = vadd.f32 %v233, %v1655
    %v1660 = vadd.f32 %v1658, %v432
    %v1661 = vadd.f32 %v1659, %v432
    %v1662 = vxor.u32 %v1660, 2147483648
    %v1663 = vxor.u32 %v1661, 2147483648
    %v1664 = vmul.f32 %v1662, 1.442695
    %v1665 = vpow.pop %v1664
    %v1666 = vmul.f32 %v1663, 1.442695
    %v1667 = vpow.pop %v1666
    %v1668 = vadd.f32 %v1665, 1.0
    %v1669 = vadd.f32 %v1667, 1.0
    %v1670 = vrcp.pop %v1668
    %v1671 = vmul.f32 1.0, %v1670
    %v1672 = vrcp.pop %v1669
    %v1673 = vmul.f32 1.0, %v1672
    %v1674 = vmul.f32 %v1570, %v1671
    %v1675 = vmul.f32 %v1577, %v1673
    %v1678 = vrot.slane %v1674, 5
    %v1679 = vrot.slane %v1675, 4
    %v1680 = vsel %vm125, %v1679, %v1678
    %v1681 = vsel %vm154, %v1680, 0
    %1683 = vmatprep.subr.mxu0 0.0
    %1684 = vmatpush1.msra.mxu0 %v93
    %1685 = vmatprep.subr.mxu0 0.0
    %1686 = vmatpush1.msra.mxu0 %v94
    %1687 = vmatprep.subr.mxu0 0.0
    %1688 = vmatpush1.msra.mxu0 %v95
    %1689 = vmatprep.subr.mxu0 0.0
    %1690 = vmatpush1.msra.mxu0 %v96
    %1691 = vmatprep.subr.mxu0 0.0
    %1692 = vmatpush1.msra.mxu0 0.0
    %1693 = vmatprep.subr.mxu0 0.0
    %1694 = vmatpush1.msra.mxu0 0.0
    %1695 = vmatprep.subr.mxu0 0.0
    %1696 = vmatpush1.msra.mxu0 0.0
    %1697 = vmatprep.subr.mxu0 0.0
    %1698 = vmatpush1.msra.mxu0 0.0
    %1699 = vmatprep.subr.mxu0 0.0
    %1700 = vmatpush1.msra.mxu0 0.0
    %1701 = vmatprep.subr.mxu0 0.0
    %1702 = vmatpush1.msra.mxu0 0.0
    %1703 = vmatprep.subr.mxu0 0.0
    %1704 = vmatpush1.msra.mxu0 0.0
    %1705 = vmatprep.subr.mxu0 0.0
    %1706 = vmatpush1.msra.mxu0 0.0
    %1707 = vmatprep.subr.mxu0 0.0
    %1708 = vmatpush1.msra.mxu0 0.0
    %1709 = vmatprep.subr.mxu0 0.0
    %1710 = vmatpush1.msra.mxu0 0.0
    %1711 = vmatprep.subr.mxu0 0.0
    %1712 = vmatpush1.msra.mxu0 0.0
    %1713 = vmatprep.subr.mxu0 0.0
    %1714 = vmatpush1.msra.mxu0 0.0
    %1715 = vmatprep.subr.mxu0 0.0
    %1716 = vmatpush1.msra.mxu0 0.0
    %1717 = vmatprep.subr.mxu0 0.0
    %1718 = vmatpush1.msra.mxu0 0.0
    %1719 = vmatprep.subr.mxu0 0.0
    %1720 = vmatpush1.msra.mxu0 0.0
    %1721 = vmatprep.subr.mxu0 0.0
    %1722 = vmatpush1.msra.mxu0 0.0
    %1723 = vmatprep.subr.mxu0 0.0
    %1724 = vmatpush1.msra.mxu0 0.0
    %1725 = vmatprep.subr.mxu0 0.0
    %1726 = vmatpush1.msra.mxu0 0.0
    %1727 = vmatprep.subr.mxu0 0.0
    %1728 = vmatpush1.msra.mxu0 0.0
    %1729 = vmatprep.subr.mxu0 0.0
    %1730 = vmatpush1.msra.mxu0 0.0
    %1731 = vmatprep.subr.mxu0 0.0
    %1732 = vmatpush1.msra.mxu0 0.0
    %1733 = vmatprep.subr.mxu0 0.0
    %1734 = vmatpush1.msra.mxu0 0.0
    %1735 = vmatprep.subr.mxu0 0.0
    %1736 = vmatpush1.msra.mxu0 0.0
    %1737 = vmatprep.subr.mxu0 0.0
    %1738 = vmatpush1.msra.mxu0 0.0
    %1739 = vmatprep.subr.mxu0 0.0
    %1740 = vmatpush1.msra.mxu0 0.0
    %1741 = vmatprep.subr.mxu0 0.0
    %1742 = vmatpush1.msra.mxu0 0.0
    %1743 = vmatprep.subr.mxu0 0.0
    %1744 = vmatpush1.msra.mxu0 0.0
    %1745 = vmatprep.subr.mxu0 0.0
    %1746 = vmatpush1.msra.mxu0 0.0
    %1747 = vmatprep.mubr.f32.mxu0 0.0
    %1748 = vmatmul.mubr.f32.gmra.mrb[0].mxu0 %v1681
    %v1749 = vpop.f32.mrb[0].mxu0
    %v1750 = vadd.f32 0.0, %v1749
    %v1751 = vpop.f32.mrb[0].mxu0
    %1752 = vdwg.mxu0
    %v1754 = vrot.slane %v1750, 3
    %v1755 = vrot.slane %v1750, 4
    %v1758 = vadd.f32 %v309, %v1754
    %v1759 = vadd.f32 %v314, %v1755
    %v1760 = vadd.f32 %v1758, %v536
    %v1761 = vadd.f32 %v1759, %v536
    %v1762 = vtanh.pop %v1760
    %v1763 = vtanh.pop %v1761
    %1764 = vrot.lane.b32.xlu0 %v1570, 32
    %v1765 = vpop.permute.xlu0 %1764
    %1766 = vrot.lane.b32.xlu0 %v1577, 32
    %v1767 = vpop.permute.xlu0 %1766
    %v1770 = vmul.f32 %v1671, %v1765
    %v1771 = vmul.f32 %v1673, %v1767
    %v1772 = vsub.f32 1.0, %v1671
    %v1773 = vsub.f32 1.0, %v1673
    %1776 = vrot.lane.b32.xlu0 %v1762, 32
    %v1777 = vpop.permute.xlu0 %1776
    %1778 = vrot.lane.b32.xlu0 %v1763, 32
    %v1779 = vpop.permute.xlu0 %1778
    %v1782 = vmul.f32 %v1772, %v1777
    %v1783 = vmul.f32 %v1773, %v1779
    %v1784 = vadd.f32 %v1770, %v1782
    %v1785 = vadd.f32 %v1771, %v1783
    %1788 = vrot.lane.b32.xlu0 %v1784, 96
    %v1789 = vpop.permute.xlu0 %1788
    %1790 = vrot.lane.b32.xlu0 %v1785, 96
    %v1791 = vpop.permute.xlu0 %1790
    %vm1794 = vcmask 259077
    %1795 = vst.msk [vmem:[#allocation2] sm:$0x20] %vm1794, %v1789
    %1796 = vst.msk [vmem:[#allocation2 + $0x8] sm:$0x20] %vm1794, %v1791
    %v1797 = vld [vmem:[#allocation2] sm:$0xff]
    %v1798 = vld [vmem:[#allocation2 + $0x8] sm:$0xff]
    %1799 = vset.pattern.permute.xlu0 6
    %1800 = vperm.xlu0 %1799, %v146
    %v1801 = vpop.permute.xlu0 %1800
    %1803 = vset.pattern.permute.xlu0 6
    %1804 = vperm.xlu0 %1803, %v147
    %v1805 = vpop.permute.xlu0 %1804
    %v1807 = vmul.f32 %v1801, %v1797
    %v1808 = vmul.f32 %v1805, %v1798
    %v1809 = vsel %vm154, %v1807, 0.0
    %v1810 = vrot.slane %v1809, 4
    %v1811 = vadd.f32 %v1809, %v1810
    %v1812 = vrot.slane %v1811, 2
    %v1813 = vadd.f32 %v1811, %v1812
    %v1814 = vrot.slane %v1813, 1
    %v1815 = vadd.f32 %v1813, %v1814
    %v1816 = vsel %vm154, %v1808, 0.0
    %v1817 = vrot.slane %v1816, 4
    %v1818 = vadd.f32 %v1816, %v1817
    %v1819 = vrot.slane %v1818, 2
    %v1820 = vadd.f32 %v1818, %v1819
    %v1821 = vrot.slane %v1820, 1
    %v1822 = vadd.f32 %v1820, %v1821
    %v1825 = vsel %vm125, %v1822, %v1815
    %v1826 = vsel %vm154, %v1825, 0
    %1828 = vmatprep.subr.mxu0 0.0
    %1829 = vmatpush1.msra.mxu0 %v83
    %1830 = vmatprep.subr.mxu0 0.0
    %1831 = vmatpush1.msra.mxu0 %v84
    %1832 = vmatprep.subr.mxu0 0.0
    %1833 = vmatpush1.msra.mxu0 %v85
    %1834 = vmatprep.subr.mxu0 0.0
    %1835 = vmatpush1.msra.mxu0 %v86
    %1836 = vmatprep.subr.mxu0 0.0
    %1837 = vmatpush1.msra.mxu0 0.0
    %1838 = vmatprep.subr.mxu0 0.0
    %1839 = vmatpush1.msra.mxu0 0.0
    %1840 = vmatprep.subr.mxu0 0.0
    %1841 = vmatpush1.msra.mxu0 0.0
    %1842 = vmatprep.subr.mxu0 0.0
    %1843 = vmatpush1.msra.mxu0 0.0
    %1844 = vmatprep.subr.mxu0 0.0
    %1845 = vmatpush1.msra.mxu0 0.0
    %1846 = vmatprep.subr.mxu0 0.0
    %1847 = vmatpush1.msra.mxu0 0.0
    %1848 = vmatprep.subr.mxu0 0.0
    %1849 = vmatpush1.msra.mxu0 0.0
    %1850 = vmatprep.subr.mxu0 0.0
    %1851 = vmatpush1.msra.mxu0 0.0
    %1852 = vmatprep.subr.mxu0 0.0
    %1853 = vmatpush1.msra.mxu0 0.0
    %1854 = vmatprep.subr.mxu0 0.0
    %1855 = vmatpush1.msra.mxu0 0.0
    %1856 = vmatprep.subr.mxu0 0.0
    %1857 = vmatpush1.msra.mxu0 0.0
    %1858 = vmatprep.subr.mxu0 0.0
    %1859 = vmatpush1.msra.mxu0 0.0
    %1860 = vmatprep.subr.mxu0 0.0
    %1861 = vmatpush1.msra.mxu0 0.0
    %1862 = vmatprep.subr.mxu0 0.0
    %1863 = vmatpush1.msra.mxu0 0.0
    %1864 = vmatprep.subr.mxu0 0.0
    %1865 = vmatpush1.msra.mxu0 0.0
    %1866 = vmatprep.subr.mxu0 0.0
    %1867 = vmatpush1.msra.mxu0 0.0
    %1868 = vmatprep.subr.mxu0 0.0
    %1869 = vmatpush1.msra.mxu0 0.0
    %1870 = vmatprep.subr.mxu0 0.0
    %1871 = vmatpush1.msra.mxu0 0.0
    %1872 = vmatprep.subr.mxu0 0.0
    %1873 = vmatpush1.msra.mxu0 0.0
    %1874 = vmatprep.subr.mxu0 0.0
    %1875 = vmatpush1.msra.mxu0 0.0
    %1876 = vmatprep.subr.mxu0 0.0
    %1877 = vmatpush1.msra.mxu0 0.0
    %1878 = vmatprep.subr.mxu0 0.0
    %1879 = vmatpush1.msra.mxu0 0.0
    %1880 = vmatprep.subr.mxu0 0.0
    %1881 = vmatpush1.msra.mxu0 0.0
    %1882 = vmatprep.subr.mxu0 0.0
    %1883 = vmatpush1.msra.mxu0 0.0
    %1884 = vmatprep.subr.mxu0 0.0
    %1885 = vmatpush1.msra.mxu0 0.0
    %1886 = vmatprep.subr.mxu0 0.0
    %1887 = vmatpush1.msra.mxu0 0.0
    %1888 = vmatprep.subr.mxu0 0.0
    %1889 = vmatpush1.msra.mxu0 0.0
    %1890 = vmatprep.subr.mxu0 0.0
    %1891 = vmatpush1.msra.mxu0 0.0
    %1892 = vmatprep.mubr.f32.mxu0 0.0
    %1893 = vmatmul.mubr.f32.gmra.mrb[0].mxu0 %v1826
    %v1894 = vpop.f32.mrb[0].mxu0
    %v1895 = vadd.f32 0.0, %v1894
    %v1896 = vpop.f32.mrb[0].mxu0
    %1897 = vdwg.mxu0
    %v1899 = vrot.slane %v1895, 2
    %v1900 = vrot.slane %v1895, 3
    %v1903 = vadd.f32 %v228, %v1899
    %v1904 = vadd.f32 %v233, %v1900
    %v1905 = vadd.f32 %v1903, %v432
    %v1906 = vadd.f32 %v1904, %v432
    %v1907 = vxor.u32 %v1905, 2147483648
    %v1908 = vxor.u32 %v1906, 2147483648
    %v1909 = vmul.f32 %v1907, 1.442695
    %v1910 = vpow.pop %v1909
    %v1911 = vmul.f32 %v1908, 1.442695
    %v1912 = vpow.pop %v1911
    %v1913 = vadd.f32 %v1910, 1.0
    %v1914 = vadd.f32 %v1912, 1.0
    %v1915 = vrcp.pop %v1913
    %v1916 = vmul.f32 1.0, %v1915
    %v1917 = vrcp.pop %v1914
    %v1918 = vmul.f32 1.0, %v1917
    %v1919 = vmul.f32 %v1815, %v1916
    %v1920 = vmul.f32 %v1822, %v1918
    %v1923 = vrot.slane %v1919, 6
    %v1924 = vrot.slane %v1920, 5
    %v1925 = vsel %vm125, %v1924, %v1923
    %v1926 = vsel %vm154, %v1925, 0
    %1928 = vmatprep.subr.mxu0 0.0
    %1929 = vmatpush1.msra.mxu0 %v93
    %1930 = vmatprep.subr.mxu0 0.0
    %1931 = vmatpush1.msra.mxu0 %v94
    %1932 = vmatprep.subr.mxu0 0.0
    %1933 = vmatpush1.msra.mxu0 %v95
    %1934 = vmatprep.subr.mxu0 0.0
    %1935 = vmatpush1.msra.mxu0 %v96
    %1936 = vmatprep.subr.mxu0 0.0
    %1937 = vmatpush1.msra.mxu0 0.0
    %1938 = vmatprep.subr.mxu0 0.0
    %1939 = vmatpush1.msra.mxu0 0.0
    %1940 = vmatprep.subr.mxu0 0.0
    %1941 = vmatpush1.msra.mxu0 0.0
    %1942 = vmatprep.subr.mxu0 0.0
    %1943 = vmatpush1.msra.mxu0 0.0
    %1944 = vmatprep.subr.mxu0 0.0
    %1945 = vmatpush1.msra.mxu0 0.0
    %1946 = vmatprep.subr.mxu0 0.0
    %1947 = vmatpush1.msra.mxu0 0.0
    %1948 = vmatprep.subr.mxu0 0.0
    %1949 = vmatpush1.msra.mxu0 0.0
    %1950 = vmatprep.subr.mxu0 0.0
    %1951 = vmatpush1.msra.mxu0 0.0
    %1952 = vmatprep.subr.mxu0 0.0
    %1953 = vmatpush1.msra.mxu0 0.0
    %1954 = vmatprep.subr.mxu0 0.0
    %1955 = vmatpush1.msra.mxu0 0.0
    %1956 = vmatprep.subr.mxu0 0.0
    %1957 = vmatpush1.msra.mxu0 0.0
    %1958 = vmatprep.subr.mxu0 0.0
    %1959 = vmatpush1.msra.mxu0 0.0
    %1960 = vmatprep.subr.mxu0 0.0
    %1961 = vmatpush1.msra.mxu0 0.0
    %1962 = vmatprep.subr.mxu0 0.0
    %1963 = vmatpush1.msra.mxu0 0.0
    %1964 = vmatprep.subr.mxu0 0.0
    %1965 = vmatpush1.msra.mxu0 0.0
    %1966 = vmatprep.subr.mxu0 0.0
    %1967 = vmatpush1.msra.mxu0 0.0
    %1968 = vmatprep.subr.mxu0 0.0
    %1969 = vmatpush1.msra.mxu0 0.0
    %1970 = vmatprep.subr.mxu0 0.0
    %1971 = vmatpush1.msra.mxu0 0.0
    %1972 = vmatprep.subr.mxu0 0.0
    %1973 = vmatpush1.msra.mxu0 0.0
    %1974 = vmatprep.subr.mxu0 0.0
    %1975 = vmatpush1.msra.mxu0 0.0
    %1976 = vmatprep.subr.mxu0 0.0
    %1977 = vmatpush1.msra.mxu0 0.0
    %1978 = vmatprep.subr.mxu0 0.0
    %1979 = vmatpush1.msra.mxu0 0.0
    %1980 = vmatprep.subr.mxu0 0.0
    %1981 = vmatpush1.msra.mxu0 0.0
    %1982 = vmatprep.subr.mxu0 0.0
    %1983 = vmatpush1.msra.mxu0 0.0
    %1984 = vmatprep.subr.mxu0 0.0
    %1985 = vmatpush1.msra.mxu0 0.0
    %1986 = vmatprep.subr.mxu0 0.0
    %1987 = vmatpush1.msra.mxu0 0.0
    %1988 = vmatprep.subr.mxu0 0.0
    %1989 = vmatpush1.msra.mxu0 0.0
    %1990 = vmatprep.subr.mxu0 0.0
    %1991 = vmatpush1.msra.mxu0 0.0
    %1992 = vmatprep.mubr.f32.mxu0 0.0
    %1993 = vmatmul.mubr.f32.gmra.mrb[0].mxu0 %v1926
    %v1994 = vpop.f32.mrb[0].mxu0
    %v1995 = vadd.f32 0.0, %v1994
    %v1996 = vpop.f32.mrb[0].mxu0
    %1997 = vdwg.mxu0
    %v1999 = vrot.slane %v1995, 2
    %v2000 = vrot.slane %v1995, 3
    %v2003 = vadd.f32 %v309, %v1999
    %v2004 = vadd.f32 %v314, %v2000
    %v2005 = vadd.f32 %v2003, %v536
    %v2006 = vadd.f32 %v2004, %v536
    %v2007 = vtanh.pop %v2005
    %v2008 = vtanh.pop %v2006
    %2009 = vrot.lane.b32.xlu0 %v1815, 32
    %v2010 = vpop.permute.xlu0 %2009
    %2011 = vrot.lane.b32.xlu0 %v1822, 32
    %v2012 = vpop.permute.xlu0 %2011
    %v2015 = vmul.f32 %v1916, %v2010
    %v2016 = vmul.f32 %v1918, %v2012
    %v2017 = vsub.f32 1.0, %v1916
    %v2018 = vsub.f32 1.0, %v1918
    %2021 = vrot.lane.b32.xlu0 %v2007, 32
    %v2022 = vpop.permute.xlu0 %2021
    %2023 = vrot.lane.b32.xlu0 %v2008, 32
    %v2024 = vpop.permute.xlu0 %2023
    %v2027 = vmul.f32 %v2017, %v2022
    %v2028 = vmul.f32 %v2018, %v2024
    %v2029 = vadd.f32 %v2015, %v2027
    %v2030 = vadd.f32 %v2016, %v2028
    %2033 = vrot.lane.b32.xlu0 %v2029, 96
    %v2034 = vpop.permute.xlu0 %2033
    %2035 = vrot.lane.b32.xlu0 %v2030, 96
    %v2036 = vpop.permute.xlu0 %2035
    %vm2039 = vcmask 260102
    %2040 = vst.msk [vmem:[#allocation2] sm:$0x40] %vm2039, %v2034
    %2041 = vst.msk [vmem:[#allocation2 + $0x8] sm:$0x40] %vm2039, %v2036
    %v2042 = vld [vmem:[#allocation2] sm:$0xff]
    %v2043 = vld [vmem:[#allocation2 + $0x8] sm:$0xff]
    %2044 = vset.pattern.permute.xlu0 7
    %2045 = vperm.xlu0 %2044, %v146
    %v2046 = vpop.permute.xlu0 %2045
    %2048 = vset.pattern.permute.xlu0 7
    %2049 = vperm.xlu0 %2048, %v147
    %v2050 = vpop.permute.xlu0 %2049
    %v2052 = vmul.f32 %v2046, %v2042
    %v2053 = vmul.f32 %v2050, %v2043
    %v2054 = vsel %vm154, %v2052, 0.0
    %v2055 = vrot.slane %v2054, 4
    %v2056 = vadd.f32 %v2054, %v2055
    %v2057 = vrot.slane %v2056, 2
    %v2058 = vadd.f32 %v2056, %v2057
    %v2059 = vrot.slane %v2058, 1
    %v2060 = vadd.f32 %v2058, %v2059
    %v2061 = vsel %vm154, %v2053, 0.0
    %v2062 = vrot.slane %v2061, 4
    %v2063 = vadd.f32 %v2061, %v2062
    %v2064 = vrot.slane %v2063, 2
    %v2065 = vadd.f32 %v2063, %v2064
    %v2066 = vrot.slane %v2065, 1
    %v2067 = vadd.f32 %v2065, %v2066
    %v2070 = vsel %vm125, %v2067, %v2060
    %v2071 = vsel %vm154, %v2070, 0
    %2073 = vmatprep.subr.mxu0 0.0
    %2074 = vmatpush1.msra.mxu0 %v83
    %2075 = vmatprep.subr.mxu0 0.0
    %2076 = vmatpush1.msra.mxu0 %v84
    %2077 = vmatprep.subr.mxu0 0.0
    %2078 = vmatpush1.msra.mxu0 %v85
    %2079 = vmatprep.subr.mxu0 0.0
    %2080 = vmatpush1.msra.mxu0 %v86
    %2081 = vmatprep.subr.mxu0 0.0
    %2082 = vmatpush1.msra.mxu0 0.0
    %2083 = vmatprep.subr.mxu0 0.0
    %2084 = vmatpush1.msra.mxu0 0.0
    %2085 = vmatprep.subr.mxu0 0.0
    %2086 = vmatpush1.msra.mxu0 0.0
    %2087 = vmatprep.subr.mxu0 0.0
    %2088 = vmatpush1.msra.mxu0 0.0
    %2089 = vmatprep.subr.mxu0 0.0
    %2090 = vmatpush1.msra.mxu0 0.0
    %2091 = vmatprep.subr.mxu0 0.0
    %2092 = vmatpush1.msra.mxu0 0.0
    %2093 = vmatprep.subr.mxu0 0.0
    %2094 = vmatpush1.msra.mxu0 0.0
    %2095 = vmatprep.subr.mxu0 0.0
    %2096 = vmatpush1.msra.mxu0 0.0
    %2097 = vmatprep.subr.mxu0 0.0
    %2098 = vmatpush1.msra.mxu0 0.0
    %2099 = vmatprep.subr.mxu0 0.0
    %2100 = vmatpush1.msra.mxu0 0.0
    %2101 = vmatprep.subr.mxu0 0.0
    %2102 = vmatpush1.msra.mxu0 0.0
    %2103 = vmatprep.subr.mxu0 0.0
    %2104 = vmatpush1.msra.mxu0 0.0
    %2105 = vmatprep.subr.mxu0 0.0
    %2106 = vmatpush1.msra.mxu0 0.0
    %2107 = vmatprep.subr.mxu0 0.0
    %2108 = vmatpush1.msra.mxu0 0.0
    %2109 = vmatprep.subr.mxu0 0.0
    %2110 = vmatpush1.msra.mxu0 0.0
    %2111 = vmatprep.subr.mxu0 0.0
    %2112 = vmatpush1.msra.mxu0 0.0
    %2113 = vmatprep.subr.mxu0 0.0
    %2114 = vmatpush1.msra.mxu0 0.0
    %2115 = vmatprep.subr.mxu0 0.0
    %2116 = vmatpush1.msra.mxu0 0.0
    %2117 = vmatprep.subr.mxu0 0.0
    %2118 = vmatpush1.msra.mxu0 0.0
    %2119 = vmatprep.subr.mxu0 0.0
    %2120 = vmatpush1.msra.mxu0 0.0
    %2121 = vmatprep.subr.mxu0 0.0
    %2122 = vmatpush1.msra.mxu0 0.0
    %2123 = vmatprep.subr.mxu0 0.0
    %2124 = vmatpush1.msra.mxu0 0.0
    %2125 = vmatprep.subr.mxu0 0.0
    %2126 = vmatpush1.msra.mxu0 0.0
    %2127 = vmatprep.subr.mxu0 0.0
    %2128 = vmatpush1.msra.mxu0 0.0
    %2129 = vmatprep.subr.mxu0 0.0
    %2130 = vmatpush1.msra.mxu0 0.0
    %2131 = vmatprep.subr.mxu0 0.0
    %2132 = vmatpush1.msra.mxu0 0.0
    %2133 = vmatprep.subr.mxu0 0.0
    %2134 = vmatpush1.msra.mxu0 0.0
    %2135 = vmatprep.subr.mxu0 0.0
    %2136 = vmatpush1.msra.mxu0 0.0
    %2137 = vmatprep.mubr.f32.mxu0 0.0
    %2138 = vmatmul.mubr.f32.gmra.mrb[0].mxu0 %v2071
    %v2139 = vpop.f32.mrb[0].mxu0
    %v2140 = vadd.f32 0.0, %v2139
    %v2141 = vpop.f32.mrb[0].mxu0
    %2142 = vdwg.mxu0
    %v2144 = vrot.slane %v2140, 1
    %v2145 = vrot.slane %v2140, 2
    %v2148 = vadd.f32 %v228, %v2144
    %v2149 = vadd.f32 %v233, %v2145
    %v2150 = vadd.f32 %v2148, %v432
    %v2151 = vadd.f32 %v2149, %v432
    %v2152 = vxor.u32 %v2150, 2147483648
    %v2153 = vxor.u32 %v2151, 2147483648
    %v2154 = vmul.f32 %v2152, 1.442695
    %v2155 = vpow.pop %v2154
    %v2156 = vmul.f32 %v2153, 1.442695
    %v2157 = vpow.pop %v2156
    %v2158 = vadd.f32 %v2155, 1.0
    %v2159 = vadd.f32 %v2157, 1.0
    %v2160 = vrcp.pop %v2158
    %v2161 = vmul.f32 1.0, %v2160
    %v2162 = vrcp.pop %v2159
    %v2163 = vmul.f32 1.0, %v2162
    %v2164 = vmul.f32 %v2060, %v2161
    %v2165 = vmul.f32 %v2067, %v2163
    %v2168 = vrot.slane %v2164, 7
    %v2169 = vrot.slane %v2165, 6
    %v2170 = vsel %vm125, %v2169, %v2168
    %v2171 = vsel %vm154, %v2170, 0
    %2173 = vmatprep.subr.mxu0 0.0
    %2174 = vmatpush1.msra.mxu0 %v93
    %2175 = vmatprep.subr.mxu0 0.0
    %2176 = vmatpush1.msra.mxu0 %v94
    %2177 = vmatprep.subr.mxu0 0.0
    %2178 = vmatpush1.msra.mxu0 %v95
    %2179 = vmatprep.subr.mxu0 0.0
    %2180 = vmatpush1.msra.mxu0 %v96
    %2181 = vmatprep.subr.mxu0 0.0
    %2182 = vmatpush1.msra.mxu0 0.0
    %2183 = vmatprep.subr.mxu0 0.0
    %2184 = vmatpush1.msra.mxu0 0.0
    %2185 = vmatprep.subr.mxu0 0.0
    %2186 = vmatpush1.msra.mxu0 0.0
    %2187 = vmatprep.subr.mxu0 0.0
    %2188 = vmatpush1.msra.mxu0 0.0
    %2189 = vmatprep.subr.mxu0 0.0
    %2190 = vmatpush1.msra.mxu0 0.0
    %2191 = vmatprep.subr.mxu0 0.0
    %2192 = vmatpush1.msra.mxu0 0.0
    %2193 = vmatprep.subr.mxu0 0.0
    %2194 = vmatpush1.msra.mxu0 0.0
    %2195 = vmatprep.subr.mxu0 0.0
    %2196 = vmatpush1.msra.mxu0 0.0
    %2197 = vmatprep.subr.mxu0 0.0
    %2198 = vmatpush1.msra.mxu0 0.0
    %2199 = vmatprep.subr.mxu0 0.0
    %2200 = vmatpush1.msra.mxu0 0.0
    %2201 = vmatprep.subr.mxu0 0.0
    %2202 = vmatpush1.msra.mxu0 0.0
    %2203 = vmatprep.subr.mxu0 0.0
    %2204 = vmatpush1.msra.mxu0 0.0
    %2205 = vmatprep.subr.mxu0 0.0
    %2206 = vmatpush1.msra.mxu0 0.0
    %2207 = vmatprep.subr.mxu0 0.0
    %2208 = vmatpush1.msra.mxu0 0.0
    %2209 = vmatprep.subr.mxu0 0.0
    %2210 = vmatpush1.msra.mxu0 0.0
    %2211 = vmatprep.subr.mxu0 0.0
    %2212 = vmatpush1.msra.mxu0 0.0
    %2213 = vmatprep.subr.mxu0 0.0
    %2214 = vmatpush1.msra.mxu0 0.0
    %2215 = vmatprep.subr.mxu0 0.0
    %2216 = vmatpush1.msra.mxu0 0.0
    %2217 = vmatprep.subr.mxu0 0.0
    %2218 = vmatpush1.msra.mxu0 0.0
    %2219 = vmatprep.subr.mxu0 0.0
    %2220 = vmatpush1.msra.mxu0 0.0
    %2221 = vmatprep.subr.mxu0 0.0
    %2222 = vmatpush1.msra.mxu0 0.0
    %2223 = vmatprep.subr.mxu0 0.0
    %2224 = vmatpush1.msra.mxu0 0.0
    %2225 = vmatprep.subr.mxu0 0.0
    %2226 = vmatpush1.msra.mxu0 0.0
    %2227 = vmatprep.subr.mxu0 0.0
    %2228 = vmatpush1.msra.mxu0 0.0
    %2229 = vmatprep.subr.mxu0 0.0
    %2230 = vmatpush1.msra.mxu0 0.0
    %2231 = vmatprep.subr.mxu0 0.0
    %2232 = vmatpush1.msra.mxu0 0.0
    %2233 = vmatprep.subr.mxu0 0.0
    %2234 = vmatpush1.msra.mxu0 0.0
    %2235 = vmatprep.subr.mxu0 0.0
    %2236 = vmatpush1.msra.mxu0 0.0
    %2237 = vmatprep.mubr.f32.mxu0 0.0
    %2238 = vmatmul.mubr.f32.gmra.mrb[0].mxu0 %v2171
    %v2239 = vpop.f32.mrb[0].mxu0
    %v2240 = vadd.f32 0.0, %v2239
    %v2241 = vpop.f32.mrb[0].mxu0
    %2242 = vdwg.mxu0
    %v2244 = vrot.slane %v2240, 1
    %v2245 = vrot.slane %v2240, 2
    %v2248 = vadd.f32 %v309, %v2244
    %v2249 = vadd.f32 %v314, %v2245
    %v2250 = vadd.f32 %v2248, %v536
    %v2251 = vadd.f32 %v2249, %v536
    %v2252 = vtanh.pop %v2250
    %v2253 = vtanh.pop %v2251
    %2254 = vrot.lane.b32.xlu0 %v2060, 32
    %v2255 = vpop.permute.xlu0 %2254
    %2256 = vrot.lane.b32.xlu0 %v2067, 32
    %v2257 = vpop.permute.xlu0 %2256
    %v2260 = vmul.f32 %v2161, %v2255
    %v2261 = vmul.f32 %v2163, %v2257
    %v2262 = vsub.f32 1.0, %v2161
    %v2263 = vsub.f32 1.0, %v2163
    %2266 = vrot.lane.b32.xlu0 %v2252, 32
    %v2267 = vpop.permute.xlu0 %2266
    %2268 = vrot.lane.b32.xlu0 %v2253, 32
    %v2269 = vpop.permute.xlu0 %2268
    %v2272 = vmul.f32 %v2262, %v2267
    %v2273 = vmul.f32 %v2263, %v2269
    %v2274 = vadd.f32 %v2260, %v2272
    %v2275 = vadd.f32 %v2261, %v2273
    %2278 = vrot.lane.b32.xlu0 %v2274, 96
    %v2279 = vpop.permute.xlu0 %2278
    %2280 = vrot.lane.b32.xlu0 %v2275, 96
    %v2281 = vpop.permute.xlu0 %2280
    %vm2284 = vcmask 261127
    %2285 = vst.msk [vmem:[#allocation2] sm:$0x80] %vm2284, %v2279
    %2286 = vst.msk [vmem:[#allocation2 + $0x8] sm:$0x80] %vm2284, %v2281
    %v2287 = vld [vmem:[#allocation2] sm:$0xff]
    %v2288 = vld [vmem:[#allocation2 + $0x8] sm:$0xff]
    %v2289 = vld [vmem:[%s12] sm:$0xff]
    %v2290 = vld [vmem:[%s12 + $0x8] sm:$0xff]
    %v2291 = vld [vmem:[%s12 + $0x10] sm:$0xff]
    %v2292 = vld [vmem:[%s12 + $0x18] sm:$0xff]
    %v2294 = vsel %vm154, %v2287, 0
    %v2297 = vsel %vm154, %v2288, 0
    %2299 = vmatprep.subr.mxu0 0.0
    %2300 = vmatpush1.msra.mxu0 %v2289
    %2301 = vmatprep.subr.mxu0 0.0
    %2302 = vmatpush1.msra.mxu0 %v2290
    %2303 = vmatprep.subr.mxu0 0.0
    %2304 = vmatpush1.msra.mxu0 %v2291
    %2305 = vmatprep.subr.mxu0 0.0
    %2306 = vmatpush1.msra.mxu0 %v2292
    %2307 = vmatprep.subr.mxu0 0.0
    %2308 = vmatpush1.msra.mxu0 0.0
    %2309 = vmatprep.subr.mxu0 0.0
    %2310 = vmatpush1.msra.mxu0 0.0
    %2311 = vmatprep.subr.mxu0 0.0
    %2312 = vmatpush1.msra.mxu0 0.0
    %2313 = vmatprep.subr.mxu0 0.0
    %2314 = vmatpush1.msra.mxu0 0.0
    %2315 = vmatprep.subr.mxu0 0.0
    %2316 = vmatpush1.msra.mxu0 0.0
    %2317 = vmatprep.subr.mxu0 0.0
    %2318 = vmatpush1.msra.mxu0 0.0
    %2319 = vmatprep.subr.mxu0 0.0
    %2320 = vmatpush1.msra.mxu0 0.0
    %2321 = vmatprep.subr.mxu0 0.0
    %2322 = vmatpush1.msra.mxu0 0.0
    %2323 = vmatprep.subr.mxu0 0.0
    %2324 = vmatpush1.msra.mxu0 0.0
    %2325 = vmatprep.subr.mxu0 0.0
    %2326 = vmatpush1.msra.mxu0 0.0
    %2327 = vmatprep.subr.mxu0 0.0
    %2328 = vmatpush1.msra.mxu0 0.0
    %2329 = vmatprep.subr.mxu0 0.0
    %2330 = vmatpush1.msra.mxu0 0.0
    %2331 = vmatprep.subr.mxu0 0.0
    %2332 = vmatpush1.msra.mxu0 0.0
    %2333 = vmatprep.subr.mxu0 0.0
    %2334 = vmatpush1.msra.mxu0 0.0
    %2335 = vmatprep.subr.mxu0 0.0
    %2336 = vmatpush1.msra.mxu0 0.0
    %2337 = vmatprep.subr.mxu0 0.0
    %2338 = vmatpush1.msra.mxu0 0.0
    %2339 = vmatprep.subr.mxu0 0.0
    %2340 = vmatpush1.msra.mxu0 0.0
    %2341 = vmatprep.subr.mxu0 0.0
    %2342 = vmatpush1.msra.mxu0 0.0
    %2343 = vmatprep.subr.mxu0 0.0
    %2344 = vmatpush1.msra.mxu0 0.0
    %2345 = vmatprep.subr.mxu0 0.0
    %2346 = vmatpush1.msra.mxu0 0.0
    %2347 = vmatprep.subr.mxu0 0.0
    %2348 = vmatpush1.msra.mxu0 0.0
    %2349 = vmatprep.subr.mxu0 0.0
    %2350 = vmatpush1.msra.mxu0 0.0
    %2351 = vmatprep.subr.mxu0 0.0
    %2352 = vmatpush1.msra.mxu0 0.0
    %2353 = vmatprep.subr.mxu0 0.0
    %2354 = vmatpush1.msra.mxu0 0.0
    %2355 = vmatprep.subr.mxu0 0.0
    %2356 = vmatpush1.msra.mxu0 0.0
    %2357 = vmatprep.subr.mxu0 0.0
    %2358 = vmatpush1.msra.mxu0 0.0
    %2359 = vmatprep.subr.mxu0 0.0
    %2360 = vmatpush1.msra.mxu0 0.0
    %2361 = vmatprep.subr.mxu0 0.0
    %2362 = vmatpush1.msra.mxu0 0.0
    %2363 = vmatprep.mubr.f32.mxu0 0.0
    %2364 = vmatmul.mubr.f32.gmra.mrb[0].mxu0 %v2294
    %v2365 = vpop.f32.mrb[0].mxu0
    %v2366 = vadd.f32 0.0, %v2365
    %v2367 = vpop.f32.mrb[0].mxu0
    %2368 = vmatprep.mubr.f32.mxu0 0.0
    %2369 = vmatmul.mubr.f32.gmra.mrb[0].mxu0 %v2297
    %v2370 = vpop.f32.mrb[0].mxu0
    %v2371 = vadd.f32 0.0, %v2370
    %v2372 = vpop.f32.mrb[0].mxu0
    %2373 = vdwg.mxu0
    %vm2374 = vcmask 130048
    %2375 = vst.msk [vmem:[#allocation3] sm:$0xff] %vm2374, %v2366
    %2376 = vst.msk [vmem:[#allocation3 + $0x8] sm:$0xff] %vm2374, %v2371
    // Predicated region
    $region54: #{_lambda_.5} parent=1 // pred_check
      _
    $region55: #{_lambda_.5} parent=1 // pred_check_branch
      %2378 = sbr.rel (0) target = $region57
    $region56: #{_lambda_.5} parent=1 // pred_region
      %s2380 = ssub.s32 256, 256
      %2381 = vsyncadd [#allocation4], %s2380
      %s2382 = sshll.u32 [#allocation3], 4
      %s2383 = int_to_ptr.vmem [resolvable:$true] %s2382
      %2388 = dma.vmem_to_hbm [thread:$0]  %s2383, 256, %s13, [#allocation4], 128, 128, 8
    $region57: #{_lambda_.5} parent=1 // pred_fallthru
      _
    // Predicated region
    $region58: #{_lambda_.5} parent=1 // pred_check
      _
    $region59: #{_lambda_.5} parent=1 // pred_check_branch
      %2390 = sbr.rel (0) target = $region61
    $region60: #{_lambda_.5} parent=1 // pred_region
      %2391 = dma.done [#allocation4], 256
    $region61: #{_lambda_.5} parent=1 // pred_fallthru
      _
    %2392 = vsyncpa [#allocation4], 1

</llo_original>
